<compile_context>
chip_gen: v7x
topology: tpu7x:2x2x1
jax: 0.10.0
libtpu: 0.0.40
codegen_flags: <defaults>
</compile_context>

<pallas_src>
import functools
import numpy as np
import jax
import jax.numpy as jnp
from jax import lax
from jax.experimental import pallas as pl
from jax.experimental.pallas import tpu as pltpu

BN_EPS = 1e-5


# ------------------------------ kernel ------------------------------------- #

def _bottleneck_kernel(xc_ref, xt_ref, xb_ref,
                       w1_ref, b1_ref, w2_ref, b2_ref, w3_ref, b3_ref,
                       o_ref, *, TH, W, cdt):
    i = pl.program_id(1)
    nt = pl.num_programs(1)

    Cin = xc_ref.shape[-1]
    Pp = w1_ref.shape[-1]          # lane-padded 'planes'
    M = TH * W                     # output rows in this tile (flattened y,x)
    Mh = (TH + 2) * W              # rows including the 1-row halo above/below

    # Flatten to (rows, channels).  xc is also the residual.
    xc = xc_ref[...].reshape(M, Cin)
    xt = xt_ref[...].reshape(W, Cin)      # top halo row (clamped load)
    xb = xb_ref[...].reshape(W, Cin)      # bottom halo row (clamped load)

    # ---- stage 1: 1x1 conv (bn1 folded) + bias + relu, piecewise so the halo
    #      is never assembled at Cin (= 4*planes) width — only at Pp. ----
    w1 = w1_ref[...]
    b1 = b1_ref[...]

    def conv1(piece):
        z = jnp.dot(piece.astype(cdt), w1, preferred_element_type=jnp.float32)
        return jnp.maximum(z + b1, 0.0)

    t1 = jnp.concatenate([conv1(xt), conv1(xc), conv1(xb)], axis=0)  # (Mh, Pp) f32

    # conv2 zero-pads its INPUT (= conv1 output) at image borders: zero the
    # halo rows that fall outside the image.
    rid = lax.broadcasted_iota(jnp.int32, (Mh, 1), 0)
    valid = ((i > 0) | (rid >= W)) & ((i < nt - 1) | (rid < Mh - W))
    t1 = jnp.where(valid, t1, 0.0)

    # Width-shifted copies for the kx = -1 / +1 taps: one XLU sublane roll
    # each + a column mask (wrap-around rows land exactly on masked columns).
    col = rid % W
    t1_l = jnp.where(col == 0, 0.0, pltpu.roll(t1, shift=1, axis=0))        # x-1
    t1_r = jnp.where(col == W - 1, 0.0, pltpu.roll(t1, shift=Mh - 1, axis=0))  # x+1

    # Stack the kx taps along channels -> one (Mh, 3*Pp) operand; the 3x3 conv
    # becomes 3 matmuls with K = 3*Pp (instead of 9 with K = Pp).
    tap3 = jnp.concatenate(
        [t1_l.astype(cdt), t1.astype(cdt), t1_r.astype(cdt)], axis=-1)

    # ---- stage 2: 3x3 conv (bn2 folded) + bias + relu ----
    # ky*W prefix slices are sublane-group aligned for W % 16 == 0 (bf16).
    acc = jnp.dot(tap3[0:M], w2_ref[0], preferred_element_type=jnp.float32)
    acc = acc + jnp.dot(tap3[W:W + M], w2_ref[1],
                        preferred_element_type=jnp.float32)
    acc = acc + jnp.dot(tap3[2 * W:2 * W + M], w2_ref[2],
                        preferred_element_type=jnp.float32)
    t2 = jnp.maximum(acc + b2_ref[...], 0.0)

    # ---- stage 3: 1x1 conv (bn3 folded) + bias + residual + relu ----
    y = jnp.dot(t2.astype(cdt), w3_ref[...], preferred_element_type=jnp.float32)
    y = y + b3_ref[...] + xc.astype(jnp.float32)
    o_ref[...] = jnp.maximum(y, 0.0).reshape(o_ref.shape).astype(o_ref.dtype)


# ------------------------------ wrapper ------------------------------------ #

def _round_up(n, m):
    return -(-n // m) * m


def _bn_fold(gamma, beta, mean, var, eps=BN_EPS):
    scale = gamma / jnp.sqrt(var + eps)
    bias = beta - mean * scale
    return scale, bias


def _vmem_limits():
    """Generation-aware scoped-VMEM limit and per-step working-set budget."""
    cap = 64 << 20                       # conservative default = v7x per-TC VMEM
    try:
        cap = int(pltpu.get_tpu_info().vmem_capacity_bytes)
    except Exception:
        pass
    limit = min(cap * 3 // 4, 96 << 20)  # leave headroom for compiler scratch
    budget = limit * 4 // 5
    return int(limit), int(budget)


def _pick_row_tile(H, W, Cin, Pp, Cout, in_bytes, cdt_bytes, budget):
    """Largest divisor of H whose fused working set fits the VMEM budget.

    Only the pipelined input/output blocks (and the small weight blocks) are
    double-buffered; in-kernel temporaries are counted once.
    """
    f32 = 4
    best = 1
    for th in range(1, H + 1):
        if H % th:
            continue
        m, mh = th * W, (th + 2) * W
        io = 2 * ((m + 2 * W) * Cin * in_bytes   # x center + 2 halo rows
                  + m * Cout * in_bytes)          # output tile
        wts = 2 * ((Cin * Pp + 3 * 3 * Pp * Pp + Pp * Cout) * cdt_bytes
                   + (2 * Pp + Cout) * f32)
        tmp = ((m + 2 * W) * Cin * cdt_bytes      # stage-1 operand casts
               + 3 * mh * Pp * f32                # t1 and its two shifted taps
               + mh * 3 * Pp * cdt_bytes          # stacked tap operand
               + m * Pp * (f32 + cdt_bytes)       # conv2 accumulator + cast
               + m * Cout * f32)                  # stage-3 accumulator
        if io + wts + tmp <= budget:
            best = th
    return best


def bottleneck_forward_nhwc(x, params, *, stride=1, row_tile=None,
                            compute_dtype=jnp.bfloat16, pad_planes_to=128):
    """Fused Bottleneck forward, NHWC in / NHWC out (hot path, no transposes)."""
    if stride != 1:
        raise NotImplementedError(
            "stride > 1 requires the downsample branch (not implemented)")
    N, H, W, Cin = x.shape
    P = params['w1'].shape[1]
    Cout = params['w3'].shape[1]
    assert Cout == Cin, "residual add requires inplanes == planes * expansion"
    cdt = jnp.dtype(compute_dtype)

    # Fold BN (inference) into per-channel scale -> folded into conv weights.
    s1, b1 = _bn_fold(*params['bn1'])
    s2, b2 = _bn_fold(*params['bn2'])
    s3, b3 = _bn_fold(*params['bn3'])
    w1f = params['w1'] * s1[None, :]
    w2f = params['w2'] * s2[None, None, None, :]
    w3f = params['w3'] * s3[None, :]

    # Lane-pad 'planes' so intermediates are lane dense and the stacked-tap
    # operand / conv2 weights are 128-lane aligned.  Zero padding is exact.
    Pp = P if pad_planes_to is None else _round_up(P, pad_planes_to)
    if Pp != P:
        pad = Pp - P
        w1f = jnp.pad(w1f, ((0, 0), (0, pad)))
        b1 = jnp.pad(b1, (0, pad))
        w2f = jnp.pad(w2f, ((0, 0), (0, 0), (0, pad), (0, pad)))
        b2 = jnp.pad(b2, (0, pad))
        w3f = jnp.pad(w3f, ((0, pad), (0, 0)))
    # TODO(synk): Cout (= inplanes) is assumed lane-friendly (multiple of 128
    #             in real ResNet); not padded here to avoid an HBM slice copy.

    # Restack 3x3 weights so stage 2 runs as 3 matmuls with K = 3*Pp.
    w2r = w2f.reshape(3, 3 * Pp, Pp)

    # One-time cast of weights to the MXU operand dtype; biases stay f32.
    w1c = w1f.astype(cdt)
    w2c = w2r.astype(cdt)
    w3c = w3f.astype(cdt)
    b1 = b1.reshape(1, Pp).astype(jnp.float32)
    b2 = b2.reshape(1, Pp).astype(jnp.float32)
    b3 = b3.reshape(1, Cout).astype(jnp.float32)

    vmem_limit, vmem_budget = _vmem_limits()
    TH = (row_tile if row_tile is not None else
          _pick_row_tile(H, W, Cin, Pp, Cout, x.dtype.itemsize,
                         cdt.itemsize, vmem_budget))
    assert H % TH == 0, "row tile must divide H"
    grid = (N, H // TH)   # both "parallel": feeds both TensorCores on v7x

    kernel = functools.partial(_bottleneck_kernel, TH=TH, W=W, cdt=cdt)
    return pl.pallas_call(
        kernel,
        out_shape=jax.ShapeDtypeStruct((N, H, W, Cout), x.dtype),
        grid=grid,
        in_specs=[
            # center rows of x (stage-1 input AND residual)
            pl.BlockSpec((1, TH, W, Cin), lambda n, i: (n, i, 0, 0)),
            # 1-row halos above/below the tile (clamped; masked in-kernel)
            pl.BlockSpec((1, 1, W, Cin),
                         lambda n, i: (n, jnp.maximum(i * TH - 1, 0), 0, 0)),
            pl.BlockSpec((1, 1, W, Cin),
                         lambda n, i: (n, jnp.minimum(i * TH + TH, H - 1), 0, 0)),
            # weights / biases (BN scale folded, planes lane-padded)
            pl.BlockSpec((Cin, Pp), lambda n, i: (0, 0)),
            pl.BlockSpec((1, Pp), lambda n, i: (0, 0)),
            pl.BlockSpec((3, 3 * Pp, Pp), lambda n, i: (0, 0, 0)),
            pl.BlockSpec((1, Pp), lambda n, i: (0, 0)),
            pl.BlockSpec((Pp, Cout), lambda n, i: (0, 0)),
            pl.BlockSpec((1, Cout), lambda n, i: (0, 0)),
        ],
        out_specs=pl.BlockSpec((1, TH, W, Cout), lambda n, i: (n, i, 0, 0)),
        compiler_params=pltpu.CompilerParams(
            dimension_semantics=("parallel", "parallel"),
            vmem_limit_bytes=vmem_limit),
    )(x, x, x, w1c, b1, w2c, b2, w3c, b3)


def bottleneck_forward(x_nchw, params, stride=1, row_tile=None,
                       compute_dtype=jnp.bfloat16, pad_planes_to=128):
    """NCHW compatibility wrapper matching the PyTorch module's interface.

    Production code should call bottleneck_forward_nhwc directly (or fuse the
    layout change into adjacent layers) — each transpose here is a full HBM
    read+write of the activation tensor.
    """
    x = jnp.transpose(x_nchw, (0, 2, 3, 1))            # NCHW -> NHWC
    out = bottleneck_forward_nhwc(x, params, stride=stride, row_tile=row_tile,
                                  compute_dtype=compute_dtype,
                                  pad_planes_to=pad_planes_to)
    return jnp.transpose(out, (0, 3, 1, 2))            # NHWC -> NCHW


# ----------------------------- reference ------------------------------------ #

def reference_forward(x_nchw, params, stride=1):
    x = jnp.transpose(x_nchw, (0, 2, 3, 1))

    def conv(inp, w, strides, padding):
        return jax.lax.conv_general_dilated(
            inp, w, strides, padding,
            dimension_numbers=('NHWC', 'HWIO', 'NHWC'))

    def bn(y, p):
        g, b, m, v = p
        return (y - m) / jnp.sqrt(v + BN_EPS) * g + b

    w1 = params['w1'].reshape(1, 1, *params['w1'].shape)
    w3 = params['w3'].reshape(1, 1, *params['w3'].shape)
    out = jax.nn.relu(bn(conv(x, w1, (1, 1), 'VALID'), params['bn1']))
    out = jax.nn.relu(bn(conv(out, params['w2'], (stride, stride),
                              ((1, 1), (1, 1))), params['bn2']))
    out = bn(conv(out, w3, (1, 1), 'VALID'), params['bn3'])
    out = jax.nn.relu(out + x)
    return jnp.transpose(out, (0, 3, 1, 2))


# ------------------------------- main --------------------------------------- #

if __name__ == "__main__":
    key = jax.random.PRNGKey(0)
    keys = jax.random.split(key, 8)

    # planes*expansion == inplanes so downsample=None is valid (stride=1)
    inplanes, planes = 16, 4
    N, H, W = 2, 16, 16

    x = jax.random.normal(keys[0], (N, inplanes, H, W), jnp.float32)

    def bn_params(k, c):
        k1, k2, k3, k4 = jax.random.split(k, 4)
        gamma = 1.0 + 0.1 * jax.random.normal(k1, (c,), jnp.float32)
        beta = 0.1 * jax.random.normal(k2, (c,), jnp.float32)
        mean = 0.1 * jax.random.normal(k3, (c,), jnp.float32)
        var = jnp.abs(jax.random.normal(k4, (c,), jnp.float32)) + 0.5
        return (gamma, beta, mean, var)

    params = {
        # weights stored as (Cin, Cout) / HWIO (transpose of PyTorch OIHW)
        'w1': 0.1 * jax.random.normal(keys[1], (inplanes, planes), jnp.float32),
        'w2': 0.1 * jax.random.normal(keys[2], (3, 3, planes, planes), jnp.float32),
        'w3': 0.1 * jax.random.normal(keys[3], (planes, planes * 4), jnp.float32),
        'bn1': bn_params(keys[4], planes),
        'bn2': bn_params(keys[5], planes),
        'bn3': bn_params(keys[6], planes * 4),
    }

    fwd = jax.jit(bottleneck_forward,
                  static_argnames=("stride", "row_tile", "compute_dtype",
                                   "pad_planes_to"))
    ref = reference_forward(x, params)

    # f32 MXU operands: bit-accurate check of the fused kernel's structure.
    out_f32 = jax.block_until_ready(fwd(x, params, compute_dtype=jnp.float32))
    np.testing.assert_allclose(np.asarray(out_f32), np.asarray(ref),
                               rtol=1e-4, atol=1e-4)

    # default path: bf16 MXU operands + f32 accumulation, auto row tile.
    out_bf16 = jax.block_until_ready(fwd(x, params))
    np.testing.assert_allclose(np.asarray(out_bf16), np.asarray(ref),
                               rtol=2e-2, atol=2e-2)

    # forced multi-tile path (exercises cross-tile halo fetching/masking).
    out_tiled = jax.block_until_ready(fwd(x, params, row_tile=4))
    np.testing.assert_allclose(np.asarray(out_tiled), np.asarray(ref),
                               rtol=2e-2, atol=2e-2)

    print("KERNEL_OK")
</pallas_src>

<mosaic_0001>
module attributes {stable_mosaic.version = 11 : i64} {
  func.func @_bottleneck_kernel(%arg0: i32, %arg1: i32, %arg2: memref<1x16x16x16xf32, #tpu.memory_space<vmem>>, %arg3: memref<1x1x16x16xf32, #tpu.memory_space<vmem>>, %arg4: memref<1x1x16x16xf32, #tpu.memory_space<vmem>>, %arg5: memref<16x128xf32, #tpu.memory_space<vmem>>, %arg6: memref<1x128xf32, #tpu.memory_space<vmem>>, %arg7: memref<3x384x128xf32, #tpu.memory_space<vmem>>, %arg8: memref<1x128xf32, #tpu.memory_space<vmem>>, %arg9: memref<128x16xf32, #tpu.memory_space<vmem>>, %arg10: memref<1x16xf32, #tpu.memory_space<vmem>>, %arg11: memref<1x16x16x16xf32, #tpu.memory_space<vmem>>) attributes {dimension_semantics = [#tpu.dimension_semantics<parallel>, #tpu.dimension_semantics<parallel>], iteration_bounds = array<i64: 2, 1>, scalar_prefetch = 0 : i64, scratch_operands = 0 : i64, tpu.core_type = #tpu.core_type<tc>, window_params = [{transform_indices = @transform_0, window_bounds = array<i64: 1, 16, 16, 16>}, {transform_indices = @transform_1, window_bounds = array<i64: 1, 1, 16, 16>}, {transform_indices = @transform_2, window_bounds = array<i64: 1, 1, 16, 16>}, {pipeline_mode = #tpu.pipeline_mode<synchronous>, transform_indices = @transform_3, window_bounds = array<i64: 16, 128>}, {pipeline_mode = #tpu.pipeline_mode<synchronous>, transform_indices = @transform_4, window_bounds = array<i64: 1, 128>}, {pipeline_mode = #tpu.pipeline_mode<synchronous>, transform_indices = @transform_5, window_bounds = array<i64: 3, 384, 128>}, {pipeline_mode = #tpu.pipeline_mode<synchronous>, transform_indices = @transform_6, window_bounds = array<i64: 1, 128>}, {pipeline_mode = #tpu.pipeline_mode<synchronous>, transform_indices = @transform_7, window_bounds = array<i64: 128, 16>}, {pipeline_mode = #tpu.pipeline_mode<synchronous>, transform_indices = @transform_8, window_bounds = array<i64: 1, 16>}, {transform_indices = @transform_9, window_bounds = array<i64: 1, 16, 16, 16>}]} {
    %c0 = arith.constant 0 : index
    %c0_0 = arith.constant 0 : index
    %c0_1 = arith.constant 0 : index
    %c0_2 = arith.constant 0 : index
    %0 = vector.load %arg2[%c0, %c0_0, %c0_1, %c0_2] : memref<1x16x16x16xf32, #tpu.memory_space<vmem>>, vector<1x16x16x16xf32>
    %1 = vector.shape_cast %0 : vector<1x16x16x16xf32> to vector<256x16xf32>
    %c0_3 = arith.constant 0 : index
    %c0_4 = arith.constant 0 : index
    %c0_5 = arith.constant 0 : index
    %c0_6 = arith.constant 0 : index
    %2 = vector.load %arg3[%c0_3, %c0_4, %c0_5, %c0_6] : memref<1x1x16x16xf32, #tpu.memory_space<vmem>>, vector<1x1x16x16xf32>
    %3 = vector.shape_cast %2 : vector<1x1x16x16xf32> to vector<16x16xf32>
    %c0_7 = arith.constant 0 : index
    %c0_8 = arith.constant 0 : index
    %c0_9 = arith.constant 0 : index
    %c0_10 = arith.constant 0 : index
    %4 = vector.load %arg4[%c0_7, %c0_8, %c0_9, %c0_10] : memref<1x1x16x16xf32, #tpu.memory_space<vmem>>, vector<1x1x16x16xf32>
    %5 = vector.shape_cast %4 : vector<1x1x16x16xf32> to vector<16x16xf32>
    %c0_11 = arith.constant 0 : index
    %c0_12 = arith.constant 0 : index
    %6 = vector.load %arg5[%c0_11, %c0_12] : memref<16x128xf32, #tpu.memory_space<vmem>>, vector<16x128xf32>
    %c0_13 = arith.constant 0 : index
    %c0_14 = arith.constant 0 : index
    %7 = vector.load %arg6[%c0_13, %c0_14] : memref<1x128xf32, #tpu.memory_space<vmem>>, vector<1x128xf32>
    %cst = arith.constant dense<0.000000e+00> : vector<16x128xf32>
    %8 = tpu.matmul %3, %6, %cst {dimension_numbers = #tpu.dot_dimension_numbers<[1], [0], [0], [1], [0, 0, 1, 1], [], []>} : vector<16x16xf32>, vector<16x128xf32>, vector<16x128xf32> -> vector<16x128xf32>
    %9 = vector.broadcast %7 : vector<1x128xf32> to vector<16x128xf32>
    %10 = arith.addf %8, %9 : vector<16x128xf32>
    %cst_15 = arith.constant 0.000000e+00 : f32
    %11 = vector.broadcast %cst_15 : f32 to vector<16x128xf32>
    %12 = arith.maximumf %10, %11 : vector<16x128xf32>
    %cst_16 = arith.constant dense<0.000000e+00> : vector<256x128xf32>
    %13 = tpu.matmul %1, %6, %cst_16 {dimension_numbers = #tpu.dot_dimension_numbers<[1], [0], [0], [1], [0, 0, 1, 1], [], []>} : vector<256x16xf32>, vector<16x128xf32>, vector<256x128xf32> -> vector<256x128xf32>
    %14 = vector.broadcast %7 : vector<1x128xf32> to vector<256x128xf32>
    %15 = arith.addf %13, %14 : vector<256x128xf32>
    %cst_17 = arith.constant 0.000000e+00 : f32
    %16 = vector.broadcast %cst_17 : f32 to vector<256x128xf32>
    %17 = arith.maximumf %15, %16 : vector<256x128xf32>
    %cst_18 = arith.constant dense<0.000000e+00> : vector<16x128xf32>
    %18 = tpu.matmul %5, %6, %cst_18 {dimension_numbers = #tpu.dot_dimension_numbers<[1], [0], [0], [1], [0, 0, 1, 1], [], []>} : vector<16x16xf32>, vector<16x128xf32>, vector<16x128xf32> -> vector<16x128xf32>
    %19 = vector.broadcast %7 : vector<1x128xf32> to vector<16x128xf32>
    %20 = arith.addf %18, %19 : vector<16x128xf32>
    %cst_19 = arith.constant 0.000000e+00 : f32
    %21 = vector.broadcast %cst_19 : f32 to vector<16x128xf32>
    %22 = arith.maximumf %20, %21 : vector<16x128xf32>
    %23 = tpu.concatenate %12, %17, %22 in 0 : vector<16x128xf32>, vector<256x128xf32>, vector<16x128xf32> -> vector<288x128xf32>
    %24 = tpu.iota {dimensions = array<i32: 0>} : vector<288x1xi32>
    %c0_i32 = arith.constant 0 : i32
    %25 = arith.cmpi sgt, %arg1, %c0_i32 : i32
    %c16_i32 = arith.constant 16 : i32
    %26 = vector.broadcast %c16_i32 : i32 to vector<288x1xi32>
    %27 = arith.cmpi sge, %24, %26 : vector<288x1xi32>
    %28 = vector.broadcast %25 : i1 to vector<288x1xi1>
    %29 = arith.ori %28, %27 : vector<288x1xi1>
    %c0_i32_20 = arith.constant 0 : i32
    %30 = arith.cmpi slt, %arg1, %c0_i32_20 : i32
    %c272_i32 = arith.constant 272 : i32
    %31 = vector.broadcast %c272_i32 : i32 to vector<288x1xi32>
    %32 = arith.cmpi slt, %24, %31 : vector<288x1xi32>
    %33 = vector.broadcast %30 : i1 to vector<288x1xi1>
    %34 = arith.ori %33, %32 : vector<288x1xi1>
    %35 = arith.andi %29, %34 : vector<288x1xi1>
    %cst_21 = arith.constant 0.000000e+00 : f32
    %36 = vector.shape_cast %35 : vector<288x1xi1> to vector<288x1xi1>
    %37 = vector.broadcast %36 : vector<288x1xi1> to vector<288x128xi1>
    %38 = vector.broadcast %cst_21 : f32 to vector<288x128xf32>
    %39 = arith.select %37, %23, %38 : vector<288x128xi1>, vector<288x128xf32>
    %c16_i32_22 = arith.constant 16 : i32
    %c0_i32_23 = arith.constant 0 : i32
    %40 = arith.cmpi eq, %c16_i32_22, %c0_i32_23 : i32
    %c1_i32 = arith.constant 1 : i32
    %41 = arith.select %40, %c1_i32, %c16_i32_22 : i32
    %42 = vector.broadcast %41 : i32 to vector<288x1xi32>
    %43 = arith.remsi %24, %42 : vector<288x1xi32>
    %c0_i32_24 = arith.constant 0 : i32
    %44 = vector.broadcast %c0_i32_24 : i32 to vector<288x1xi32>
    %45 = arith.cmpi ne, %43, %44 : vector<288x1xi32>
    %c0_i32_25 = arith.constant 0 : i32
    %46 = vector.broadcast %c0_i32_25 : i32 to vector<288x1xi32>
    %47 = arith.cmpi slt, %43, %46 : vector<288x1xi32>
    %c0_i32_26 = arith.constant 0 : i32
    %48 = arith.cmpi slt, %41, %c0_i32_26 : i32
    %49 = vector.broadcast %48 : i1 to vector<288x1xi1>
    %50 = vector.broadcast %49 : vector<288x1xi1> to vector<288x1xi1>
    %51 = arith.xori %47, %50 : vector<288x1xi1>
    %52 = arith.andi %51, %45 : vector<288x1xi1>
    %53 = vector.broadcast %41 : i32 to vector<288x1xi32>
    %54 = arith.addi %43, %53 : vector<288x1xi32>
    %55 = arith.select %52, %54, %43 : vector<288x1xi1>, vector<288x1xi32>
    %c0_i32_27 = arith.constant 0 : i32
    %56 = vector.broadcast %c0_i32_27 : i32 to vector<288x1xi32>
    %57 = arith.cmpi eq, %55, %56 : vector<288x1xi32>
    %c1_i32_28 = arith.constant 1 : i32
    %58 = tpu.dynamic_rotate %39 by %c1_i32_28 dim 0 : vector<288x128xf32>, i32 -> vector<288x128xf32>
    %cst_29 = arith.constant 0.000000e+00 : f32
    %59 = vector.shape_cast %57 : vector<288x1xi1> to vector<288x1xi1>
    %60 = vector.broadcast %59 : vector<288x1xi1> to vector<288x128xi1>
    %61 = vector.broadcast %cst_29 : f32 to vector<288x128xf32>
    %62 = arith.select %60, %61, %58 : vector<288x128xi1>, vector<288x128xf32>
    %c15_i32 = arith.constant 15 : i32
    %63 = vector.broadcast %c15_i32 : i32 to vector<288x1xi32>
    %64 = arith.cmpi eq, %55, %63 : vector<288x1xi32>
    %c287_i32 = arith.constant 287 : i32
    %65 = tpu.dynamic_rotate %39 by %c287_i32 dim 0 : vector<288x128xf32>, i32 -> vector<288x128xf32>
    %cst_30 = arith.constant 0.000000e+00 : f32
    %66 = vector.shape_cast %64 : vector<288x1xi1> to vector<288x1xi1>
    %67 = vector.broadcast %66 : vector<288x1xi1> to vector<288x128xi1>
    %68 = vector.broadcast %cst_30 : f32 to vector<288x128xf32>
    %69 = arith.select %67, %68, %65 : vector<288x128xi1>, vector<288x128xf32>
    %70 = tpu.concatenate %62, %39, %69 in 1 : vector<288x128xf32>, vector<288x128xf32>, vector<288x128xf32> -> vector<288x384xf32>
    %71 = vector.extract_strided_slice %70 {offsets = [0, 0], sizes = [256, 384], strides = [1, 1]} : vector<288x384xf32> to vector<256x384xf32>
    %c0_31 = arith.constant 0 : index
    %c0_32 = arith.constant 0 : index
    %c0_33 = arith.constant 0 : index
    %72 = vector.load %arg7[%c0_31, %c0_32, %c0_33] : memref<3x384x128xf32, #tpu.memory_space<vmem>>, vector<1x384x128xf32>
    %73 = vector.shape_cast %72 : vector<1x384x128xf32> to vector<384x128xf32>
    %cst_34 = arith.constant dense<0.000000e+00> : vector<256x128xf32>
    %74 = tpu.matmul %71, %73, %cst_34 {dimension_numbers = #tpu.dot_dimension_numbers<[1], [0], [0], [1], [0, 0, 1, 1], [], []>} : vector<256x384xf32>, vector<384x128xf32>, vector<256x128xf32> -> vector<256x128xf32>
    %75 = vector.extract_strided_slice %70 {offsets = [16, 0], sizes = [256, 384], strides = [1, 1]} : vector<288x384xf32> to vector<256x384xf32>
    %c1 = arith.constant 1 : index
    %c0_35 = arith.constant 0 : index
    %c0_36 = arith.constant 0 : index
    %76 = vector.load %arg7[%c1, %c0_35, %c0_36] : memref<3x384x128xf32, #tpu.memory_space<vmem>>, vector<1x384x128xf32>
    %77 = vector.shape_cast %76 : vector<1x384x128xf32> to vector<384x128xf32>
    %cst_37 = arith.constant dense<0.000000e+00> : vector<256x128xf32>
    %78 = tpu.matmul %75, %77, %cst_37 {dimension_numbers = #tpu.dot_dimension_numbers<[1], [0], [0], [1], [0, 0, 1, 1], [], []>} : vector<256x384xf32>, vector<384x128xf32>, vector<256x128xf32> -> vector<256x128xf32>
    %79 = arith.addf %74, %78 : vector<256x128xf32>
    %80 = vector.extract_strided_slice %70 {offsets = [32, 0], sizes = [256, 384], strides = [1, 1]} : vector<288x384xf32> to vector<256x384xf32>
    %c2 = arith.constant 2 : index
    %c0_38 = arith.constant 0 : index
    %c0_39 = arith.constant 0 : index
    %81 = vector.load %arg7[%c2, %c0_38, %c0_39] : memref<3x384x128xf32, #tpu.memory_space<vmem>>, vector<1x384x128xf32>
    %82 = vector.shape_cast %81 : vector<1x384x128xf32> to vector<384x128xf32>
    %cst_40 = arith.constant dense<0.000000e+00> : vector<256x128xf32>
    %83 = tpu.matmul %80, %82, %cst_40 {dimension_numbers = #tpu.dot_dimension_numbers<[1], [0], [0], [1], [0, 0, 1, 1], [], []>} : vector<256x384xf32>, vector<384x128xf32>, vector<256x128xf32> -> vector<256x128xf32>
    %84 = arith.addf %79, %83 : vector<256x128xf32>
    %c0_41 = arith.constant 0 : index
    %c0_42 = arith.constant 0 : index
    %85 = vector.load %arg8[%c0_41, %c0_42] : memref<1x128xf32, #tpu.memory_space<vmem>>, vector<1x128xf32>
    %86 = vector.broadcast %85 : vector<1x128xf32> to vector<256x128xf32>
    %87 = arith.addf %84, %86 : vector<256x128xf32>
    %cst_43 = arith.constant 0.000000e+00 : f32
    %88 = vector.broadcast %cst_43 : f32 to vector<256x128xf32>
    %89 = arith.maximumf %87, %88 : vector<256x128xf32>
    %c0_44 = arith.constant 0 : index
    %c0_45 = arith.constant 0 : index
    %90 = vector.load %arg9[%c0_44, %c0_45] : memref<128x16xf32, #tpu.memory_space<vmem>>, vector<128x16xf32>
    %cst_46 = arith.constant dense<0.000000e+00> : vector<256x16xf32>
    %91 = tpu.matmul %89, %90, %cst_46 {dimension_numbers = #tpu.dot_dimension_numbers<[1], [0], [0], [1], [0, 0, 1, 1], [], []>} : vector<256x128xf32>, vector<128x16xf32>, vector<256x16xf32> -> vector<256x16xf32>
    %c0_47 = arith.constant 0 : index
    %c0_48 = arith.constant 0 : index
    %92 = vector.load %arg10[%c0_47, %c0_48] : memref<1x16xf32, #tpu.memory_space<vmem>>, vector<1x16xf32>
    %93 = vector.broadcast %92 : vector<1x16xf32> to vector<256x16xf32>
    %94 = arith.addf %91, %93 : vector<256x16xf32>
    %95 = arith.addf %94, %1 : vector<256x16xf32>
    %cst_49 = arith.constant 0.000000e+00 : f32
    %96 = vector.broadcast %cst_49 : f32 to vector<256x16xf32>
    %97 = arith.maximumf %95, %96 : vector<256x16xf32>
    %98 = vector.shape_cast %97 : vector<256x16xf32> to vector<1x16x16x16xf32>
    %c0_50 = arith.constant 0 : index
    %c0_51 = arith.constant 0 : index
    %c0_52 = arith.constant 0 : index
    %c0_53 = arith.constant 0 : index
    %99 = vector.load %arg11[%c0_50, %c0_51, %c0_52, %c0_53] : memref<1x16x16x16xf32, #tpu.memory_space<vmem>>, vector<1x16x16x16xf32>
    tpu.vector_store %arg11[%c0_50, %c0_51, %c0_52, %c0_53], %98 {strides = array<i32>} : memref<1x16x16x16xf32, #tpu.memory_space<vmem>>, vector<1x16x16x16xf32>,
    return
  }
  func.func @transform_0(%arg0: i32, %arg1: i32) -> (i32, i32, i32, i32) {
    %c0_i32 = arith.constant 0 : i32
    %c0_i32_0 = arith.constant 0 : i32
    %c0_i32_1 = arith.constant 0 : i32
    return %arg0, %arg1, %c0_i32, %c0_i32_0 : i32, i32, i32, i32
  }
  func.func @transform_1(%arg0: i32, %arg1: i32) -> (i32, i32, i32, i32) {
    %c16_i32 = arith.constant 16 : i32
    %0 = arith.muli %arg1, %c16_i32 : i32
    %c1_i32 = arith.constant 1 : i32
    %1 = arith.subi %0, %c1_i32 : i32
    %c0_i32 = arith.constant 0 : i32
    %2 = arith.maxsi %1, %c0_i32 : i32
    %c0_i32_0 = arith.constant 0 : i32
    %c0_i32_1 = arith.constant 0 : i32
    %c0_i32_2 = arith.constant 0 : i32
    return %arg0, %2, %c0_i32_0, %c0_i32_1 : i32, i32, i32, i32
  }
  func.func @transform_2(%arg0: i32, %arg1: i32) -> (i32, i32, i32, i32) {
    %c16_i32 = arith.constant 16 : i32
    %0 = arith.muli %arg1, %c16_i32 : i32
    %c16_i32_0 = arith.constant 16 : i32
    %1 = arith.addi %0, %c16_i32_0 : i32
    %c15_i32 = arith.constant 15 : i32
    %2 = arith.minsi %1, %c15_i32 : i32
    %c0_i32 = arith.constant 0 : i32
    %c0_i32_1 = arith.constant 0 : i32
    %c0_i32_2 = arith.constant 0 : i32
    return %arg0, %2, %c0_i32, %c0_i32_1 : i32, i32, i32, i32
  }
  func.func @transform_3(%arg0: i32, %arg1: i32) -> (i32, i32) {
    %c0_i32 = arith.constant 0 : i32
    %c0_i32_0 = arith.constant 0 : i32
    %c0_i32_1 = arith.constant 0 : i32
    return %c0_i32, %c0_i32_0 : i32, i32
  }
  func.func @transform_4(%arg0: i32, %arg1: i32) -> (i32, i32) {
    %c0_i32 = arith.constant 0 : i32
    %c0_i32_0 = arith.constant 0 : i32
    %c0_i32_1 = arith.constant 0 : i32
    return %c0_i32, %c0_i32_0 : i32, i32
  }
  func.func @transform_5(%arg0: i32, %arg1: i32) -> (i32, i32, i32) {
    %c0_i32 = arith.constant 0 : i32
    %c0_i32_0 = arith.constant 0 : i32
    %c0_i32_1 = arith.constant 0 : i32
    %c0_i32_2 = arith.constant 0 : i32
    return %c0_i32, %c0_i32_0, %c0_i32_1 : i32, i32, i32
  }
  func.func @transform_6(%arg0: i32, %arg1: i32) -> (i32, i32) {
    %c0_i32 = arith.constant 0 : i32
    %c0_i32_0 = arith.constant 0 : i32
    %c0_i32_1 = arith.constant 0 : i32
    return %c0_i32, %c0_i32_0 : i32, i32
  }
  func.func @transform_7(%arg0: i32, %arg1: i32) -> (i32, i32) {
    %c0_i32 = arith.constant 0 : i32
    %c0_i32_0 = arith.constant 0 : i32
    %c0_i32_1 = arith.constant 0 : i32
    return %c0_i32, %c0_i32_0 : i32, i32
  }
  func.func @transform_8(%arg0: i32, %arg1: i32) -> (i32, i32) {
    %c0_i32 = arith.constant 0 : i32
    %c0_i32_0 = arith.constant 0 : i32
    %c0_i32_1 = arith.constant 0 : i32
    return %c0_i32, %c0_i32_0 : i32, i32
  }
  func.func @transform_9(%arg0: i32, %arg1: i32) -> (i32, i32, i32, i32) {
    %c0_i32 = arith.constant 0 : i32
    %c0_i32_0 = arith.constant 0 : i32
    %c0_i32_1 = arith.constant 0 : i32
    return %arg0, %arg1, %c0_i32, %c0_i32_0 : i32, i32, i32, i32
  }
}

</mosaic_0001>

<llo_original>
// kernel: bottleneck_forward.1
$region0: #{bottleneck_forward.1}
  #allocation0 [shape = 'u32[]', space=smem, size = 0x4, offset = 0x4, fixed_abs, tag = 'smem constant byte address 0x4 - core index']
  #allocation1 [shape = 'u32[144,128]{1,0:T(1,128)}', space=vmem, size = 0x12000, scoped, tag = 'internal scratch']
  %s0 = inlined_call_operand.vmem [shape: f32[2,16,16,16], index: 0, kind: input, shape index: {}, may-alias: {0,1,2}]
  %s1 = inlined_call_operand.vmem [shape: f32[2,16,16,16], index: 1, kind: input, shape index: {}, may-alias: {0,1,2}]
  %s2 = inlined_call_operand.vmem [shape: f32[2,16,16,16], index: 2, kind: input, shape index: {}, may-alias: {0,1,2}]
  %s3 = inlined_call_operand.vmem [shape: f32[16,128], index: 3, kind: input, shape index: {}]
  %s4 = inlined_call_operand.vmem [shape: f32[1,128], index: 4, kind: input, shape index: {}]
  %s5 = inlined_call_operand.vmem [shape: f32[3,384,128], index: 5, kind: input, shape index: {}]
  %s6 = inlined_call_operand.vmem [shape: f32[1,128], index: 6, kind: input, shape index: {}]
  %s7 = inlined_call_operand.vmem [shape: f32[128,16], index: 7, kind: input, shape index: {}]
  %s8 = inlined_call_operand.vmem [shape: f32[1,16], index: 8, kind: input, shape index: {}]
  %s9 = inlined_call_operand.vmem [shape: f32[2,16,16,16], index: 9, kind: output, shape index: {}]
  %s10 = sld [smem:[#allocation0]]
  $region69: #{bottleneck_forward.1} parent=0
    _
  %s12 = ssub.s32 1, %s10
  %s13 = scalar_select 0, %s12, %s10
  loop: start=0, step=1, limit=4
  $region2: #{bottleneck_forward.1} parent=0 // loop_pre_header
    _
  $region3: #{bottleneck_forward.1} parent=0 // loop_header
    %s15 = sphi 0, %s19
    %p16 = scmp.ge.s32.totalorder %s15, 4
    %s22 = sphi 0, %s34
    %s23 = sphi 0, %s30
    %s24 = sphi 0, %s22
    %s25 = sphi 0, %s23
    %s26 = sphi 0, %s24
    %s27 = sphi 0, %s25
    %s39 = sphi 0, %s41
    %s42 = sphi 0, %s39
    %s43 = sphi 0, %s42
    %s59 = sphi 0, %s43
    %s75 = sphi 0, %s77
    %s78 = sphi 0, %s75
    %s79 = sphi 0, %s78
    %s95 = sphi 0, %s79
    %s111 = sphi 0, %s113
    %s114 = sphi 0, %s111
    %s115 = sphi 0, %s114
    %s131 = sphi 0, %s115
    %s135 = sphi 0, %s135
    %s137 = sphi 0, %s135
    %s138 = sphi 0, %s137
    %s152 = sphi 0, %s138
    %s156 = sphi 0, %s156
    %s158 = sphi 0, %s156
    %s159 = sphi 0, %s158
    %s173 = sphi 0, %s159
    %s177 = sphi 0, %s177
    %s179 = sphi 0, %s177
    %s180 = sphi 0, %s179
    %s194 = sphi 0, %s180
    %s198 = sphi 0, %s198
    %s200 = sphi 0, %s198
    %s201 = sphi 0, %s200
    %s215 = sphi 0, %s201
    %s219 = sphi 0, %s219
    %s221 = sphi 0, %s219
    %s222 = sphi 0, %s221
    %s236 = sphi 0, %s222
    %s240 = sphi 0, %s240
    %s242 = sphi 0, %s240
    %s243 = sphi 0, %s242
    %s257 = sphi 0, %s243
    %s265 = sphi 0, %s267
    %s268 = sphi 0, %s265
    %s269 = sphi 0, %s268
    %s285 = sphi 0, %s269
  $region4: #{bottleneck_forward.1} parent=0 // loop_header_branch
    %18 = sbr.rel (%p16) target = $region8
  $region5: #{bottleneck_forward.1} parent=0 // loop_body
    %s20 = ssub.s32 %s15, 1
    %s21 = ssub.s32 %s15, 2
    %s28 = sadd.s32 1, %s23
    %p29 = scmp.ge.s32.totalorder %s28, 1
    %s30 = scalar_select %p29, 0, %s28
    %s31 = sadd.s32 1, %s22
    %s32 = scalar_select %p29, %s31, %s22
    %p33 = scmp.ge.s32.totalorder %s32, 2
    %s34 = scalar_select %p33, 0, %s32
    %s35 = ssub.s32 %s22, %s34
    %s36 = ssub.s32 %s23, %s30
    %s37 = sor.u32 %s35, %s36
    %p38 = scmp.eq.s32.totalorder %s37, 0
    %s40 = sadd.s32 %s39, 1
    %s41 = scalar_select %p38, %s39, %s40
    %p44 = pneg %p38
    %p45 = scmp.eq.s32.totalorder %s15, 1
    %p46 = por %p44, %p45
    %p47 = scmp.ne.s32.totalorder %s39, %s42
    %p48 = scmp.eq.s32.totalorder %s15, 0
    %p49 = por %p47, %p48
    %p50 = scmp.ne.s32.totalorder %s39, %s42
    %p51 = scmp.eq.s32.totalorder %s20, 1
    %p52 = por %p50, %p51
    %p53 = scmp.ne.s32.totalorder %s42, %s43
    %p54 = scmp.eq.s32.totalorder %s20, 0
    %p55 = por %p53, %p54
    %p56 = scmp.ne.s32.totalorder %s42, %s43
    %p57 = scmp.eq.s32.totalorder %s21, 1
    %p58 = por %p56, %p57
    %p60 = scmp.ne.s32.totalorder %s43, %s59
    %p61 = scmp.eq.s32.totalorder %s21, 0
    %p62 = por %p60, %p61
    %s63 = smul.u32 %s23, 16
    %s64 = ssub.s32 %s63, 1
    %p65 = scmp.gt.s32.totalorder %s64, 0
    %s66 = scalar_select %p65, %s64, 0
    %s67 = smul.u32 %s30, 16
    %s68 = ssub.s32 %s67, 1
    %p69 = scmp.gt.s32.totalorder %s68, 0
    %s70 = scalar_select %p69, %s68, 0
    %s71 = ssub.s32 %s22, %s34
    %s72 = ssub.s32 %s66, %s70
    %s73 = sor.u32 %s71, %s72
    %p74 = scmp.eq.s32.totalorder %s73, 0
    %s76 = sadd.s32 %s75, 1
    %s77 = scalar_select %p74, %s75, %s76
    %p80 = pneg %p74
    %p81 = scmp.eq.s32.totalorder %s15, 1
    %p82 = por %p80, %p81
    %p83 = scmp.ne.s32.totalorder %s75, %s78
    %p84 = scmp.eq.s32.totalorder %s15, 0
    %p85 = por %p83, %p84
    %p86 = scmp.ne.s32.totalorder %s75, %s78
    %p87 = scmp.eq.s32.totalorder %s20, 1
    %p88 = por %p86, %p87
    %p89 = scmp.ne.s32.totalorder %s78, %s79
    %p90 = scmp.eq.s32.totalorder %s20, 0
    %p91 = por %p89, %p90
    %p92 = scmp.ne.s32.totalorder %s78, %s79
    %p93 = scmp.eq.s32.totalorder %s21, 1
    %p94 = por %p92, %p93
    %p96 = scmp.ne.s32.totalorder %s79, %s95
    %p97 = scmp.eq.s32.totalorder %s21, 0
    %p98 = por %p96, %p97
    %s99 = smul.u32 %s23, 16
    %s100 = sadd.s32 %s99, 16
    %p101 = scmp.lt.s32.totalorder %s100, 15
    %s102 = scalar_select %p101, %s100, 15
    %s103 = smul.u32 %s30, 16
    %s104 = sadd.s32 %s103, 16
    %p105 = scmp.lt.s32.totalorder %s104, 15
    %s106 = scalar_select %p105, %s104, 15
    %s107 = ssub.s32 %s22, %s34
    %s108 = ssub.s32 %s102, %s106
    %s109 = sor.u32 %s107, %s108
    %p110 = scmp.eq.s32.totalorder %s109, 0
    %s112 = sadd.s32 %s111, 1
    %s113 = scalar_select %p110, %s111, %s112
    %p116 = pneg %p110
    %p117 = scmp.eq.s32.totalorder %s15, 1
    %p118 = por %p116, %p117
    %p119 = scmp.ne.s32.totalorder %s111, %s114
    %p120 = scmp.eq.s32.totalorder %s15, 0
    %p121 = por %p119, %p120
    %p122 = scmp.ne.s32.totalorder %s111, %s114
    %p123 = scmp.eq.s32.totalorder %s20, 1
    %p124 = por %p122, %p123
    %p125 = scmp.ne.s32.totalorder %s114, %s115
    %p126 = scmp.eq.s32.totalorder %s20, 0
    %p127 = por %p125, %p126
    %p128 = scmp.ne.s32.totalorder %s114, %s115
    %p129 = scmp.eq.s32.totalorder %s21, 1
    %p130 = por %p128, %p129
    %p132 = scmp.ne.s32.totalorder %s115, %s131
    %p133 = scmp.eq.s32.totalorder %s21, 0
    %p134 = por %p132, %p133
    %s136 = sadd.s32 %s135, 1
    %p139 = scmp.eq.s32.totalorder %s15, 1
    %p140 = scmp.ne.s32.totalorder %s135, %s137
    %p141 = scmp.eq.s32.totalorder %s15, 0
    %p142 = por %p140, %p141
    %p143 = scmp.ne.s32.totalorder %s135, %s137
    %p144 = scmp.eq.s32.totalorder %s20, 1
    %p145 = por %p143, %p144
    %p146 = scmp.ne.s32.totalorder %s137, %s138
    %p147 = scmp.eq.s32.totalorder %s20, 0
    %p148 = por %p146, %p147
    %p149 = scmp.ne.s32.totalorder %s137, %s138
    %p150 = scmp.eq.s32.totalorder %s21, 1
    %p151 = por %p149, %p150
    %p153 = scmp.ne.s32.totalorder %s138, %s152
    %p154 = scmp.eq.s32.totalorder %s21, 0
    %p155 = por %p153, %p154
    %s157 = sadd.s32 %s156, 1
    %p160 = scmp.eq.s32.totalorder %s15, 1
    %p161 = scmp.ne.s32.totalorder %s156, %s158
    %p162 = scmp.eq.s32.totalorder %s15, 0
    %p163 = por %p161, %p162
    %p164 = scmp.ne.s32.totalorder %s156, %s158
    %p165 = scmp.eq.s32.totalorder %s20, 1
    %p166 = por %p164, %p165
    %p167 = scmp.ne.s32.totalorder %s158, %s159
    %p168 = scmp.eq.s32.totalorder %s20, 0
    %p169 = por %p167, %p168
    %p170 = scmp.ne.s32.totalorder %s158, %s159
    %p171 = scmp.eq.s32.totalorder %s21, 1
    %p172 = por %p170, %p171
    %p174 = scmp.ne.s32.totalorder %s159, %s173
    %p175 = scmp.eq.s32.totalorder %s21, 0
    %p176 = por %p174, %p175
    %s178 = sadd.s32 %s177, 1
    %p181 = scmp.eq.s32.totalorder %s15, 1
    %p182 = scmp.ne.s32.totalorder %s177, %s179
    %p183 = scmp.eq.s32.totalorder %s15, 0
    %p184 = por %p182, %p183
    %p185 = scmp.ne.s32.totalorder %s177, %s179
    %p186 = scmp.eq.s32.totalorder %s20, 1
    %p187 = por %p185, %p186
    %p188 = scmp.ne.s32.totalorder %s179, %s180
    %p189 = scmp.eq.s32.totalorder %s20, 0
    %p190 = por %p188, %p189
    %p191 = scmp.ne.s32.totalorder %s179, %s180
    %p192 = scmp.eq.s32.totalorder %s21, 1
    %p193 = por %p191, %p192
    %p195 = scmp.ne.s32.totalorder %s180, %s194
    %p196 = scmp.eq.s32.totalorder %s21, 0
    %p197 = por %p195, %p196
    %s199 = sadd.s32 %s198, 1
    %p202 = scmp.eq.s32.totalorder %s15, 1
    %p203 = scmp.ne.s32.totalorder %s198, %s200
    %p204 = scmp.eq.s32.totalorder %s15, 0
    %p205 = por %p203, %p204
    %p206 = scmp.ne.s32.totalorder %s198, %s200
    %p207 = scmp.eq.s32.totalorder %s20, 1
    %p208 = por %p206, %p207
    %p209 = scmp.ne.s32.totalorder %s200, %s201
    %p210 = scmp.eq.s32.totalorder %s20, 0
    %p211 = por %p209, %p210
    %p212 = scmp.ne.s32.totalorder %s200, %s201
    %p213 = scmp.eq.s32.totalorder %s21, 1
    %p214 = por %p212, %p213
    %p216 = scmp.ne.s32.totalorder %s201, %s215
    %p217 = scmp.eq.s32.totalorder %s21, 0
    %p218 = por %p216, %p217
    %s220 = sadd.s32 %s219, 1
    %p223 = scmp.eq.s32.totalorder %s15, 1
    %p224 = scmp.ne.s32.totalorder %s219, %s221
    %p225 = scmp.eq.s32.totalorder %s15, 0
    %p226 = por %p224, %p225
    %p227 = scmp.ne.s32.totalorder %s219, %s221
    %p228 = scmp.eq.s32.totalorder %s20, 1
    %p229 = por %p227, %p228
    %p230 = scmp.ne.s32.totalorder %s221, %s222
    %p231 = scmp.eq.s32.totalorder %s20, 0
    %p232 = por %p230, %p231
    %p233 = scmp.ne.s32.totalorder %s221, %s222
    %p234 = scmp.eq.s32.totalorder %s21, 1
    %p235 = por %p233, %p234
    %p237 = scmp.ne.s32.totalorder %s222, %s236
    %p238 = scmp.eq.s32.totalorder %s21, 0
    %p239 = por %p237, %p238
    %s241 = sadd.s32 %s240, 1
    %p244 = scmp.eq.s32.totalorder %s15, 1
    %p245 = scmp.ne.s32.totalorder %s240, %s242
    %p246 = scmp.eq.s32.totalorder %s15, 0
    %p247 = por %p245, %p246
    %p248 = scmp.ne.s32.totalorder %s240, %s242
    %p249 = scmp.eq.s32.totalorder %s20, 1
    %p250 = por %p248, %p249
    %p251 = scmp.ne.s32.totalorder %s242, %s243
    %p252 = scmp.eq.s32.totalorder %s20, 0
    %p253 = por %p251, %p252
    %p254 = scmp.ne.s32.totalorder %s242, %s243
    %p255 = scmp.eq.s32.totalorder %s21, 1
    %p256 = por %p254, %p255
    %p258 = scmp.ne.s32.totalorder %s243, %s257
    %p259 = scmp.eq.s32.totalorder %s21, 0
    %p260 = por %p258, %p259
    %s261 = ssub.s32 %s22, %s34
    %s262 = ssub.s32 %s23, %s30
    %s263 = sor.u32 %s261, %s262
    %p264 = scmp.eq.s32.totalorder %s263, 0
    %s266 = sadd.s32 %s265, 1
    %s267 = scalar_select %p264, %s265, %s266
    %p270 = pneg %p264
    %p271 = scmp.eq.s32.totalorder %s15, 1
    %p272 = por %p270, %p271
    %p273 = scmp.ne.s32.totalorder %s265, %s268
    %p274 = scmp.eq.s32.totalorder %s15, 0
    %p275 = por %p273, %p274
    %p276 = scmp.ne.s32.totalorder %s265, %s268
    %p277 = scmp.eq.s32.totalorder %s20, 1
    %p278 = por %p276, %p277
    %p279 = scmp.ne.s32.totalorder %s268, %s269
    %p280 = scmp.eq.s32.totalorder %s20, 0
    %p281 = por %p279, %p280
    %p282 = scmp.ne.s32.totalorder %s268, %s269
    %p283 = scmp.eq.s32.totalorder %s21, 1
    %p284 = por %p282, %p283
    %p286 = scmp.ne.s32.totalorder %s269, %s285
    %p287 = scmp.eq.s32.totalorder %s21, 0
    %p288 = por %p286, %p287
    %p289 = scmp.le.s32.totalorder 1, %s15
    %p290 = scmp.lt.s32.totalorder %s15, 3
    %p291 = pnand %p289, %p290
    %p292 = pneg %p291
    // Predicated region
    $region9: #{bottleneck_forward.1} parent=5 // pred_check
      _
    $region10: #{bottleneck_forward.1} parent=5 // pred_check_branch
      %294 = sbr.rel (%p291) target = $region12
    $region11: #{bottleneck_forward.1} parent=5 // pred_region
      %s295 = ssub.s32 %s15, 1
      // Predicated region
      $region13: #{bottleneck_forward.1} parent=11 // pred_check
        %p296 = pneg %p148
      $region14: #{bottleneck_forward.1} parent=11 // pred_check_branch
        %298 = sbr.rel (%p296) target = $region16
      $region15: #{bottleneck_forward.1} parent=11 // pred_region
        _
      $region16: #{bottleneck_forward.1} parent=11 // pred_fallthru
        _
      // Predicated region
      $region17: #{bottleneck_forward.1} parent=11 // pred_check
        %p299 = pneg %p169
      $region18: #{bottleneck_forward.1} parent=11 // pred_check_branch
        %301 = sbr.rel (%p299) target = $region20
      $region19: #{bottleneck_forward.1} parent=11 // pred_region
        _
      $region20: #{bottleneck_forward.1} parent=11 // pred_fallthru
        _
      // Predicated region
      $region21: #{bottleneck_forward.1} parent=11 // pred_check
        %p302 = pneg %p190
      $region22: #{bottleneck_forward.1} parent=11 // pred_check_branch
        %304 = sbr.rel (%p302) target = $region24
      $region23: #{bottleneck_forward.1} parent=11 // pred_region
        _
      $region24: #{bottleneck_forward.1} parent=11 // pred_fallthru
        _
      // Predicated region
      $region25: #{bottleneck_forward.1} parent=11 // pred_check
        %p305 = pneg %p211
      $region26: #{bottleneck_forward.1} parent=11 // pred_check_branch
        %307 = sbr.rel (%p305) target = $region28
      $region27: #{bottleneck_forward.1} parent=11 // pred_region
        _
      $region28: #{bottleneck_forward.1} parent=11 // pred_fallthru
        _
      // Predicated region
      $region29: #{bottleneck_forward.1} parent=11 // pred_check
        %p308 = pneg %p232
      $region30: #{bottleneck_forward.1} parent=11 // pred_check_branch
        %310 = sbr.rel (%p308) target = $region32
      $region31: #{bottleneck_forward.1} parent=11 // pred_region
        _
      $region32: #{bottleneck_forward.1} parent=11 // pred_fallthru
        _
      // Predicated region
      $region33: #{bottleneck_forward.1} parent=11 // pred_check
        %p311 = pneg %p253
      $region34: #{bottleneck_forward.1} parent=11 // pred_check_branch
        %313 = sbr.rel (%p311) target = $region36
      $region35: #{bottleneck_forward.1} parent=11 // pred_region
        _
      $region36: #{bottleneck_forward.1} parent=11 // pred_fallthru
        _
    $region12: #{bottleneck_forward.1} parent=5 // pred_fallthru
      _
    %p314 = scmp.lt.s32.totalorder %s15, 2
    // Predicated region
    $region37: #{bottleneck_forward.1} parent=5 // pred_check
      %p315 = pneg %p314
    $region38: #{bottleneck_forward.1} parent=5 // pred_check_branch
      %317 = sbr.rel (%p315) target = $region40
    $region39: #{bottleneck_forward.1} parent=5 // pred_region
      // Predicated region
      $region41: #{bottleneck_forward.1} parent=39 // pred_check
        %p318 = pneg %p49
      $region42: #{bottleneck_forward.1} parent=39 // pred_check_branch
        %320 = sbr.rel (%p318) target = $region44
      $region43: #{bottleneck_forward.1} parent=39 // pred_region
        %s321 = smul.u32 16, %s23
        %p322 = scmp.lt.s32.totalorder %s22, 1
        %s323 = scalar_select %p322, %s22, 1
        %p324 = scmp.lt.s32.totalorder %s321, 15
        %s325 = scalar_select %p324, %s321, 15
        %s326 = smul.addr %s325, 2
        %s327 = smul.addr %s323, 32
        %s328 = sadd.s32 %s326, %s327
        %s329 = smul.addr %s328, 8
        %s330 = scalar_lea.vmem %s0, %s329
        %s331 = smul.u32 16, %s23
      $region44: #{bottleneck_forward.1} parent=39 // pred_fallthru
        _
      // Predicated region
      $region45: #{bottleneck_forward.1} parent=39 // pred_check
        %p332 = pneg %p85
      $region46: #{bottleneck_forward.1} parent=39 // pred_check_branch
        %334 = sbr.rel (%p332) target = $region48
      $region47: #{bottleneck_forward.1} parent=39 // pred_region
        %s335 = smul.u32 %s23, 16
        %s336 = ssub.s32 %s335, 1
        %p337 = scmp.gt.s32.totalorder %s336, 0
        %s338 = scalar_select %p337, %s336, 0
        %p339 = scmp.lt.s32.totalorder %s22, 1
        %s340 = scalar_select %p339, %s22, 1
        %p341 = scmp.lt.s32.totalorder %s338, 15
        %s342 = scalar_select %p341, %s338, 15
        %s343 = smul.addr %s342, 2
        %s344 = smul.addr %s340, 32
        %s345 = sadd.s32 %s343, %s344
        %s346 = smul.addr %s345, 8
        %s347 = scalar_lea.vmem %s1, %s346
        %s348 = smul.u32 %s23, 16
        %s349 = ssub.s32 %s348, 1
        %p350 = scmp.gt.s32.totalorder %s349, 0
        %s351 = scalar_select %p350, %s349, 0
      $region48: #{bottleneck_forward.1} parent=39 // pred_fallthru
        _
      // Predicated region
      $region49: #{bottleneck_forward.1} parent=39 // pred_check
        %p352 = pneg %p121
      $region50: #{bottleneck_forward.1} parent=39 // pred_check_branch
        %354 = sbr.rel (%p352) target = $region52
      $region51: #{bottleneck_forward.1} parent=39 // pred_region
        %s355 = smul.u32 %s23, 16
        %s356 = sadd.s32 %s355, 16
        %p357 = scmp.lt.s32.totalorder %s356, 15
        %s358 = scalar_select %p357, %s356, 15
        %p359 = scmp.lt.s32.totalorder %s22, 1
        %s360 = scalar_select %p359, %s22, 1
        %p361 = scmp.lt.s32.totalorder %s358, 15
        %s362 = scalar_select %p361, %s358, 15
        %s363 = smul.addr %s362, 2
        %s364 = smul.addr %s360, 32
        %s365 = sadd.s32 %s363, %s364
        %s366 = smul.addr %s365, 8
        %s367 = scalar_lea.vmem %s2, %s366
        %s368 = smul.u32 %s23, 16
        %s369 = sadd.s32 %s368, 16
        %p370 = scmp.lt.s32.totalorder %s369, 15
        %s371 = scalar_select %p370, %s369, 15
      $region52: #{bottleneck_forward.1} parent=39 // pred_fallthru
        _
    $region40: #{bottleneck_forward.1} parent=5 // pred_fallthru
      _
    %p372 = scmp.le.s32.totalorder 1, %s15
    %p373 = scmp.lt.s32.totalorder %s15, 3
    %p374 = pnand %p372, %p373
    %p375 = pneg %p374
    // Predicated region
    $region53: #{bottleneck_forward.1} parent=5 // pred_check
      _
    $region54: #{bottleneck_forward.1} parent=5 // pred_check_branch
      %377 = sbr.rel (%p374) target = $region56
    $region55: #{bottleneck_forward.1} parent=5 // pred_region
      %s378 = ssub.s32 %s15, 1
      %s379 = smul.u32 16, %s25
      %p380 = scmp.lt.s32.totalorder %s24, 1
      %s381 = scalar_select %p380, %s24, 1
      %p382 = scmp.lt.s32.totalorder %s379, 15
      %s383 = scalar_select %p382, %s379, 15
      %s384 = smul.addr %s383, 2
      %s385 = smul.addr %s381, 32
      %s386 = sadd.s32 %s384, %s385
      %s387 = smul.addr %s386, 8
      %s388 = scalar_lea.vmem %s0, %s387
      %p389 = pneg %p55
      %p390 = pneg %p52
      %s391 = smul.u32 %s25, 16
      %s392 = ssub.s32 %s391, 1
      %p393 = scmp.gt.s32.totalorder %s392, 0
      %s394 = scalar_select %p393, %s392, 0
      %p395 = scmp.lt.s32.totalorder %s24, 1
      %s396 = scalar_select %p395, %s24, 1
      %p397 = scmp.lt.s32.totalorder %s394, 15
      %s398 = scalar_select %p397, %s394, 15
      %s399 = smul.addr %s398, 2
      %s400 = smul.addr %s396, 32
      %s401 = sadd.s32 %s399, %s400
      %s402 = smul.addr %s401, 8
      %s403 = scalar_lea.vmem %s1, %s402
      %p404 = pneg %p91
      %p405 = pneg %p88
      %s406 = smul.u32 %s25, 16
      %s407 = sadd.s32 %s406, 16
      %p408 = scmp.lt.s32.totalorder %s407, 15
      %s409 = scalar_select %p408, %s407, 15
      %p410 = scmp.lt.s32.totalorder %s24, 1
      %s411 = scalar_select %p410, %s24, 1
      %p412 = scmp.lt.s32.totalorder %s409, 15
      %s413 = scalar_select %p412, %s409, 15
      %s414 = smul.addr %s413, 2
      %s415 = smul.addr %s411, 32
      %s416 = sadd.s32 %s414, %s415
      %s417 = smul.addr %s416, 8
      %s418 = scalar_lea.vmem %s2, %s417
      %p419 = pneg %p127
      %p420 = pneg %p124
      %p421 = pneg %p148
      %p422 = pneg %p145
      %p423 = pneg %p169
      %p424 = pneg %p166
      %p425 = pneg %p190
      %p426 = pneg %p187
      %p427 = pneg %p211
      %p428 = pneg %p208
      %p429 = pneg %p232
      %p430 = pneg %p229
      %p431 = pneg %p253
      %p432 = pneg %p250
      %p433 = pneg %p281
      %p434 = pneg %p278
      %s435 = smul.u32 16, %s25
      %p436 = scmp.lt.s32.totalorder %s24, 1
      %s437 = scalar_select %p436, %s24, 1
      %p438 = scmp.lt.s32.totalorder %s435, 15
      %s439 = scalar_select %p438, %s435, 15
      %s440 = smul.addr %s439, 2
      %s441 = smul.addr %s437, 32
      %s442 = sadd.s32 %s440, %s441
      %s443 = smul.addr %s442, 8
      %s444 = scalar_lea.vmem %s9, %s443
      %s445 = smul.u32 16, %s25
      %p446 = scmp.lt.s32.totalorder %s24, 1
      %s447 = scalar_select %p446, %s24, 1
      %p448 = scmp.lt.s32.totalorder %s445, 15
      %s449 = scalar_select %p448, %s445, 15
      %s450 = smul.addr %s449, 2
      %s451 = smul.addr %s447, 32
      %s452 = sadd.s32 %s450, %s451
      %s453 = smul.addr %s452, 8
      %s454 = scalar_lea.vmem %s0, %s453
      %s455 = smul.u32 16, %s25
      %s456 = smul.u32 %s25, 16
      %s457 = ssub.s32 %s456, 1
      %p458 = scmp.gt.s32.totalorder %s457, 0
      %s459 = scalar_select %p458, %s457, 0
      %p460 = scmp.lt.s32.totalorder %s24, 1
      %s461 = scalar_select %p460, %s24, 1
      %p462 = scmp.lt.s32.totalorder %s459, 15
      %s463 = scalar_select %p462, %s459, 15
      %s464 = smul.addr %s463, 2
      %s465 = smul.addr %s461, 32
      %s466 = sadd.s32 %s464, %s465
      %s467 = smul.addr %s466, 8
      %s468 = scalar_lea.vmem %s1, %s467
      %s469 = smul.u32 %s25, 16
      %s470 = ssub.s32 %s469, 1
      %p471 = scmp.gt.s32.totalorder %s470, 0
      %s472 = scalar_select %p471, %s470, 0
      %s473 = smul.u32 %s25, 16
      %s474 = sadd.s32 %s473, 16
      %p475 = scmp.lt.s32.totalorder %s474, 15
      %s476 = scalar_select %p475, %s474, 15
      %p477 = scmp.lt.s32.totalorder %s24, 1
      %s478 = scalar_select %p477, %s24, 1
      %p479 = scmp.lt.s32.totalorder %s476, 15
      %s480 = scalar_select %p479, %s476, 15
      %s481 = smul.addr %s480, 2
      %s482 = smul.addr %s478, 32
      %s483 = sadd.s32 %s481, %s482
      %s484 = smul.addr %s483, 8
      %s485 = scalar_lea.vmem %s2, %s484
      %s486 = smul.u32 %s25, 16
      %s487 = sadd.s32 %s486, 16
      %p488 = scmp.lt.s32.totalorder %s487, 15
      %s489 = scalar_select %p488, %s487, 15
      %s490 = smul.u32 16, %s25
      %p491 = scmp.lt.s32.totalorder %s24, 1
      %s492 = scalar_select %p491, %s24, 1
      %p493 = scmp.lt.s32.totalorder %s490, 15
      %s494 = scalar_select %p493, %s490, 15
      %s495 = smul.addr %s494, 2
      %s496 = smul.addr %s492, 32
      %s497 = sadd.s32 %s495, %s496
      %s498 = smul.addr %s497, 8
      %s499 = scalar_lea.vmem %s9, %s498
      %s500 = smul.u32 16, %s25
      %v501 = vld [vmem:[%s454] sm:$0xff]
      %v502 = vld [vmem:[%s454 + $0x8] sm:$0xff]
      %v503 = vld [vmem:[%s454 + $0x10] sm:$0xff]
      %v504 = vld [vmem:[%s454 + $0x18] sm:$0xff]
      %v505 = vld [vmem:[%s454 + $0x20] sm:$0xff]
      %v506 = vld [vmem:[%s454 + $0x28] sm:$0xff]
      %v507 = vld [vmem:[%s454 + $0x30] sm:$0xff]
      %v508 = vld [vmem:[%s454 + $0x38] sm:$0xff]
      %v509 = vld [vmem:[%s454 + $0x40] sm:$0xff]
      %v510 = vld [vmem:[%s454 + $0x48] sm:$0xff]
      %v511 = vld [vmem:[%s454 + $0x50] sm:$0xff]
      %v512 = vld [vmem:[%s454 + $0x58] sm:$0xff]
      %v513 = vld [vmem:[%s454 + $0x60] sm:$0xff]
      %v514 = vld [vmem:[%s454 + $0x68] sm:$0xff]
      %v515 = vld [vmem:[%s454 + $0x70] sm:$0xff]
      %v516 = vld [vmem:[%s454 + $0x78] sm:$0xff]
      %v517 = vld [vmem:[%s454 + $0x80] sm:$0xff]
      %v518 = vld [vmem:[%s454 + $0x88] sm:$0xff]
      %v519 = vld [vmem:[%s454 + $0x90] sm:$0xff]
      %v520 = vld [vmem:[%s454 + $0x98] sm:$0xff]
      %v521 = vld [vmem:[%s454 + $0xa0] sm:$0xff]
      %v522 = vld [vmem:[%s454 + $0xa8] sm:$0xff]
      %v523 = vld [vmem:[%s454 + $0xb0] sm:$0xff]
      %v524 = vld [vmem:[%s454 + $0xb8] sm:$0xff]
      %v525 = vld [vmem:[%s454 + $0xc0] sm:$0xff]
      %v526 = vld [vmem:[%s454 + $0xc8] sm:$0xff]
      %v527 = vld [vmem:[%s454 + $0xd0] sm:$0xff]
      %v528 = vld [vmem:[%s454 + $0xd8] sm:$0xff]
      %v529 = vld [vmem:[%s454 + $0xe0] sm:$0xff]
      %v530 = vld [vmem:[%s454 + $0xe8] sm:$0xff]
      %v531 = vld [vmem:[%s454 + $0xf0] sm:$0xff]
      %v532 = vld [vmem:[%s454 + $0xf8] sm:$0xff]
      %v533 = vld [vmem:[%s468] sm:$0xff]
      %v534 = vld [vmem:[%s468 + $0x8] sm:$0xff]
      %v535 = vld [vmem:[%s485] sm:$0xff]
      %v536 = vld [vmem:[%s485 + $0x8] sm:$0xff]
      %v537 = vld [vmem:[%s3] sm:$0xff]
      %v538 = vld [vmem:[%s3 + $0x8] sm:$0xff]
      %v539 = vld [vmem:[%s4] sm:$0x1]
      %v541 = vlaneseq
      %v542 = vshrl.u32 %v541, 7
      %v543 = vsub.s32 0, %v542
      %v544 = vrot.slane %v539, %v543
      %vm546 = vcmask 130048
      %v548 = vsel %vm546, %v533, 0
      %v551 = vsel %vm546, %v534, 0
      %553 = vmatprep.subr.mxu0 0.0
      %554 = vmatpush1.msra.mxu0 %v537
      %555 = vmatprep.subr.mxu0 0.0
      %556 = vmatpush1.msra.mxu0 %v538
      %557 = vmatprep.subr.mxu0 0.0
      %558 = vmatpush1.msra.mxu0 0.0
      %559 = vmatprep.subr.mxu0 0.0
      %560 = vmatpush1.msra.mxu0 0.0
      %561 = vmatprep.subr.mxu0 0.0
      %562 = vmatpush1.msra.mxu0 0.0
      %563 = vmatprep.subr.mxu0 0.0
      %564 = vmatpush1.msra.mxu0 0.0
      %565 = vmatprep.subr.mxu0 0.0
      %566 = vmatpush1.msra.mxu0 0.0
      %567 = vmatprep.subr.mxu0 0.0
      %568 = vmatpush1.msra.mxu0 0.0
      %569 = vmatprep.subr.mxu0 0.0
      %570 = vmatpush1.msra.mxu0 0.0
      %571 = vmatprep.subr.mxu0 0.0
      %572 = vmatpush1.msra.mxu0 0.0
      %573 = vmatprep.subr.mxu0 0.0
      %574 = vmatpush1.msra.mxu0 0.0
      %575 = vmatprep.subr.mxu0 0.0
      %576 = vmatpush1.msra.mxu0 0.0
      %577 = vmatprep.subr.mxu0 0.0
      %578 = vmatpush1.msra.mxu0 0.0
      %579 = vmatprep.subr.mxu0 0.0
      %580 = vmatpush1.msra.mxu0 0.0
      %581 = vmatprep.subr.mxu0 0.0
      %582 = vmatpush1.msra.mxu0 0.0
      %583 = vmatprep.subr.mxu0 0.0
      %584 = vmatpush1.msra.mxu0 0.0
      %585 = vmatprep.subr.mxu0 0.0
      %586 = vmatpush1.msra.mxu0 0.0
      %587 = vmatprep.subr.mxu0 0.0
      %588 = vmatpush1.msra.mxu0 0.0
      %589 = vmatprep.subr.mxu0 0.0
      %590 = vmatpush1.msra.mxu0 0.0
      %591 = vmatprep.subr.mxu0 0.0
      %592 = vmatpush1.msra.mxu0 0.0
      %593 = vmatprep.subr.mxu0 0.0
      %594 = vmatpush1.msra.mxu0 0.0
      %595 = vmatprep.subr.mxu0 0.0
      %596 = vmatpush1.msra.mxu0 0.0
      %597 = vmatprep.subr.mxu0 0.0
      %598 = vmatpush1.msra.mxu0 0.0
      %599 = vmatprep.subr.mxu0 0.0
      %600 = vmatpush1.msra.mxu0 0.0
      %601 = vmatprep.subr.mxu0 0.0
      %602 = vmatpush1.msra.mxu0 0.0
      %603 = vmatprep.subr.mxu0 0.0
      %604 = vmatpush1.msra.mxu0 0.0
      %605 = vmatprep.subr.mxu0 0.0
      %606 = vmatpush1.msra.mxu0 0.0
      %607 = vmatprep.subr.mxu0 0.0
      %608 = vmatpush1.msra.mxu0 0.0
      %609 = vmatprep.subr.mxu0 0.0
      %610 = vmatpush1.msra.mxu0 0.0
      %611 = vmatprep.subr.mxu0 0.0
      %612 = vmatpush1.msra.mxu0 0.0
      %613 = vmatprep.subr.mxu0 0.0
      %614 = vmatpush1.msra.mxu0 0.0
      %615 = vmatprep.subr.mxu0 0.0
      %616 = vmatpush1.msra.mxu0 0.0
      %617 = vmatprep.mubr.f32.mxu0 0.0
      %618 = vmatmul.mubr.f32.gmra.mrb[0].mxu0 %v548
      %v619 = vpop.f32.mrb[0].mxu0
      %v620 = vadd.f32 %v544, %v619
      %v621 = vpop.f32.mrb[0].mxu0
      %622 = vmatprep.mubr.f32.mxu0 0.0
      %623 = vmatmul.mubr.f32.gmra.mrb[0].mxu0 %v551
      %v624 = vpop.f32.mrb[0].mxu0
      %v625 = vadd.f32 %v544, %v624
      %v626 = vpop.f32.mrb[0].mxu0
      %627 = vdwg.mxu0
      %v628 = vmax.f32 %v620, 0.0
      %v629 = vmax.f32 %v625, 0.0
      %v631 = vsel %vm546, %v501, 0
      %v634 = vsel %vm546, %v502, 0
      %v637 = vsel %vm546, %v503, 0
      %v640 = vsel %vm546, %v504, 0
      %v643 = vsel %vm546, %v505, 0
      %v646 = vsel %vm546, %v506, 0
      %v649 = vsel %vm546, %v507, 0
      %v652 = vsel %vm546, %v508, 0
      %v655 = vsel %vm546, %v509, 0
      %v658 = vsel %vm546, %v510, 0
      %v661 = vsel %vm546, %v511, 0
      %v664 = vsel %vm546, %v512, 0
      %v667 = vsel %vm546, %v513, 0
      %v670 = vsel %vm546, %v514, 0
      %v673 = vsel %vm546, %v515, 0
      %v676 = vsel %vm546, %v516, 0
      %v679 = vsel %vm546, %v517, 0
      %v682 = vsel %vm546, %v518, 0
      %v685 = vsel %vm546, %v519, 0
      %v688 = vsel %vm546, %v520, 0
      %v691 = vsel %vm546, %v521, 0
      %v694 = vsel %vm546, %v522, 0
      %v697 = vsel %vm546, %v523, 0
      %v700 = vsel %vm546, %v524, 0
      %v703 = vsel %vm546, %v525, 0
      %v706 = vsel %vm546, %v526, 0
      %v709 = vsel %vm546, %v527, 0
      %v712 = vsel %vm546, %v528, 0
      %v715 = vsel %vm546, %v529, 0
      %v718 = vsel %vm546, %v530, 0
      %v721 = vsel %vm546, %v531, 0
      %v724 = vsel %vm546, %v532, 0
      %726 = vmatprep.subr.mxu0 0.0
      %727 = vmatpush1.msra.mxu0 %v537
      %728 = vmatprep.subr.mxu0 0.0
      %729 = vmatpush1.msra.mxu0 %v538
      %730 = vmatprep.subr.mxu0 0.0
      %731 = vmatpush1.msra.mxu0 0.0
      %732 = vmatprep.subr.mxu0 0.0
      %733 = vmatpush1.msra.mxu0 0.0
      %734 = vmatprep.subr.mxu0 0.0
      %735 = vmatpush1.msra.mxu0 0.0
      %736 = vmatprep.subr.mxu0 0.0
      %737 = vmatpush1.msra.mxu0 0.0
      %738 = vmatprep.subr.mxu0 0.0
      %739 = vmatpush1.msra.mxu0 0.0
      %740 = vmatprep.subr.mxu0 0.0
      %741 = vmatpush1.msra.mxu0 0.0
      %742 = vmatprep.subr.mxu0 0.0
      %743 = vmatpush1.msra.mxu0 0.0
      %744 = vmatprep.subr.mxu0 0.0
      %745 = vmatpush1.msra.mxu0 0.0
      %746 = vmatprep.subr.mxu0 0.0
      %747 = vmatpush1.msra.mxu0 0.0
      %748 = vmatprep.subr.mxu0 0.0
      %749 = vmatpush1.msra.mxu0 0.0
      %750 = vmatprep.subr.mxu0 0.0
      %751 = vmatpush1.msra.mxu0 0.0
      %752 = vmatprep.subr.mxu0 0.0
      %753 = vmatpush1.msra.mxu0 0.0
      %754 = vmatprep.subr.mxu0 0.0
      %755 = vmatpush1.msra.mxu0 0.0
      %756 = vmatprep.subr.mxu0 0.0
      %757 = vmatpush1.msra.mxu0 0.0
      %758 = vmatprep.subr.mxu0 0.0
      %759 = vmatpush1.msra.mxu0 0.0
      %760 = vmatprep.subr.mxu0 0.0
      %761 = vmatpush1.msra.mxu0 0.0
      %762 = vmatprep.subr.mxu0 0.0
      %763 = vmatpush1.msra.mxu0 0.0
      %764 = vmatprep.subr.mxu0 0.0
      %765 = vmatpush1.msra.mxu0 0.0
      %766 = vmatprep.subr.mxu0 0.0
      %767 = vmatpush1.msra.mxu0 0.0
      %768 = vmatprep.subr.mxu0 0.0
      %769 = vmatpush1.msra.mxu0 0.0
      %770 = vmatprep.subr.mxu0 0.0
      %771 = vmatpush1.msra.mxu0 0.0
      %772 = vmatprep.subr.mxu0 0.0
      %773 = vmatpush1.msra.mxu0 0.0
      %774 = vmatprep.subr.mxu0 0.0
      %775 = vmatpush1.msra.mxu0 0.0
      %776 = vmatprep.subr.mxu0 0.0
      %777 = vmatpush1.msra.mxu0 0.0
      %778 = vmatprep.subr.mxu0 0.0
      %779 = vmatpush1.msra.mxu0 0.0
      %780 = vmatprep.subr.mxu0 0.0
      %781 = vmatpush1.msra.mxu0 0.0
      %782 = vmatprep.subr.mxu0 0.0
      %783 = vmatpush1.msra.mxu0 0.0
      %784 = vmatprep.subr.mxu0 0.0
      %785 = vmatpush1.msra.mxu0 0.0
      %786 = vmatprep.subr.mxu0 0.0
      %787 = vmatpush1.msra.mxu0 0.0
      %788 = vmatprep.subr.mxu0 0.0
      %789 = vmatpush1.msra.mxu0 0.0
      %790 = vmatprep.mubr.f32.mxu0 0.0
      %791 = vmatmul.mubr.f32.gmra.mrb[0].mxu0 %v631
      %v792 = vpop.f32.mrb[0].mxu0
      %v793 = vadd.f32 %v544, %v792
      %v794 = vpop.f32.mrb[0].mxu0
      %795 = vmatprep.mubr.f32.mxu0 0.0
      %796 = vmatmul.mubr.f32.gmra.mrb[0].mxu0 %v634
      %v797 = vpop.f32.mrb[0].mxu0
      %v798 = vadd.f32 %v544, %v797
      %v799 = vpop.f32.mrb[0].mxu0
      %800 = vmatprep.mubr.f32.mxu0 0.0
      %801 = vmatmul.mubr.f32.gmra.mrb[0].mxu0 %v637
      %v802 = vpop.f32.mrb[0].mxu0
      %v803 = vadd.f32 %v544, %v802
      %v804 = vpop.f32.mrb[0].mxu0
      %805 = vmatprep.mubr.f32.mxu0 0.0
      %806 = vmatmul.mubr.f32.gmra.mrb[0].mxu0 %v640
      %v807 = vpop.f32.mrb[0].mxu0
      %v808 = vadd.f32 %v544, %v807
      %v809 = vpop.f32.mrb[0].mxu0
      %810 = vmatprep.mubr.f32.mxu0 0.0
      %811 = vmatmul.mubr.f32.gmra.mrb[0].mxu0 %v643
      %v812 = vpop.f32.mrb[0].mxu0
      %v813 = vadd.f32 %v544, %v812
      %v814 = vpop.f32.mrb[0].mxu0
      %815 = vmatprep.mubr.f32.mxu0 0.0
      %816 = vmatmul.mubr.f32.gmra.mrb[0].mxu0 %v646
      %v817 = vpop.f32.mrb[0].mxu0
      %v818 = vadd.f32 %v544, %v817
      %v819 = vpop.f32.mrb[0].mxu0
      %820 = vmatprep.mubr.f32.mxu0 0.0
      %821 = vmatmul.mubr.f32.gmra.mrb[0].mxu0 %v649
      %v822 = vpop.f32.mrb[0].mxu0
      %v823 = vadd.f32 %v544, %v822
      %v824 = vpop.f32.mrb[0].mxu0
      %825 = vmatprep.mubr.f32.mxu0 0.0
      %826 = vmatmul.mubr.f32.gmra.mrb[0].mxu0 %v652
      %v827 = vpop.f32.mrb[0].mxu0
      %v828 = vadd.f32 %v544, %v827
      %v829 = vpop.f32.mrb[0].mxu0
      %830 = vmatprep.mubr.f32.mxu0 0.0
      %831 = vmatmul.mubr.f32.gmra.mrb[0].mxu0 %v655
      %v832 = vpop.f32.mrb[0].mxu0
      %v833 = vadd.f32 %v544, %v832
      %v834 = vpop.f32.mrb[0].mxu0
      %835 = vmatprep.mubr.f32.mxu0 0.0
      %836 = vmatmul.mubr.f32.gmra.mrb[0].mxu0 %v658
      %v837 = vpop.f32.mrb[0].mxu0
      %v838 = vadd.f32 %v544, %v837
      %v839 = vpop.f32.mrb[0].mxu0
      %840 = vmatprep.mubr.f32.mxu0 0.0
      %841 = vmatmul.mubr.f32.gmra.mrb[0].mxu0 %v661
      %v842 = vpop.f32.mrb[0].mxu0
      %v843 = vadd.f32 %v544, %v842
      %v844 = vpop.f32.mrb[0].mxu0
      %845 = vmatprep.mubr.f32.mxu0 0.0
      %846 = vmatmul.mubr.f32.gmra.mrb[0].mxu0 %v664
      %v847 = vpop.f32.mrb[0].mxu0
      %v848 = vadd.f32 %v544, %v847
      %v849 = vpop.f32.mrb[0].mxu0
      %850 = vmatprep.mubr.f32.mxu0 0.0
      %851 = vmatmul.mubr.f32.gmra.mrb[0].mxu0 %v667
      %v852 = vpop.f32.mrb[0].mxu0
      %v853 = vadd.f32 %v544, %v852
      %v854 = vpop.f32.mrb[0].mxu0
      %855 = vmatprep.mubr.f32.mxu0 0.0
      %856 = vmatmul.mubr.f32.gmra.mrb[0].mxu0 %v670
      %v857 = vpop.f32.mrb[0].mxu0
      %v858 = vadd.f32 %v544, %v857
      %v859 = vpop.f32.mrb[0].mxu0
      %860 = vmatprep.mubr.f32.mxu0 0.0
      %861 = vmatmul.mubr.f32.gmra.mrb[0].mxu0 %v673
      %v862 = vpop.f32.mrb[0].mxu0
      %v863 = vadd.f32 %v544, %v862
      %v864 = vpop.f32.mrb[0].mxu0
      %865 = vmatprep.mubr.f32.mxu0 0.0
      %866 = vmatmul.mubr.f32.gmra.mrb[0].mxu0 %v676
      %v867 = vpop.f32.mrb[0].mxu0
      %v868 = vadd.f32 %v544, %v867
      %v869 = vpop.f32.mrb[0].mxu0
      %870 = vmatprep.mubr.f32.mxu0 0.0
      %871 = vmatmul.mubr.f32.gmra.mrb[0].mxu0 %v679
      %v872 = vpop.f32.mrb[0].mxu0
      %v873 = vadd.f32 %v544, %v872
      %v874 = vpop.f32.mrb[0].mxu0
      %875 = vmatprep.mubr.f32.mxu0 0.0
      %876 = vmatmul.mubr.f32.gmra.mrb[0].mxu0 %v682
      %v877 = vpop.f32.mrb[0].mxu0
      %v878 = vadd.f32 %v544, %v877
      %v879 = vpop.f32.mrb[0].mxu0
      %880 = vmatprep.mubr.f32.mxu0 0.0
      %881 = vmatmul.mubr.f32.gmra.mrb[0].mxu0 %v685
      %v882 = vpop.f32.mrb[0].mxu0
      %v883 = vadd.f32 %v544, %v882
      %v884 = vpop.f32.mrb[0].mxu0
      %885 = vmatprep.mubr.f32.mxu0 0.0
      %886 = vmatmul.mubr.f32.gmra.mrb[0].mxu0 %v688
      %v887 = vpop.f32.mrb[0].mxu0
      %v888 = vadd.f32 %v544, %v887
      %v889 = vpop.f32.mrb[0].mxu0
      %890 = vmatprep.mubr.f32.mxu0 0.0
      %891 = vmatmul.mubr.f32.gmra.mrb[0].mxu0 %v691
      %v892 = vpop.f32.mrb[0].mxu0
      %v893 = vadd.f32 %v544, %v892
      %v894 = vpop.f32.mrb[0].mxu0
      %895 = vmatprep.mubr.f32.mxu0 0.0
      %896 = vmatmul.mubr.f32.gmra.mrb[0].mxu0 %v694
      %v897 = vpop.f32.mrb[0].mxu0
      %v898 = vadd.f32 %v544, %v897
      %v899 = vpop.f32.mrb[0].mxu0
      %900 = vmatprep.mubr.f32.mxu0 0.0
      %901 = vmatmul.mubr.f32.gmra.mrb[0].mxu0 %v697
      %v902 = vpop.f32.mrb[0].mxu0
      %v903 = vadd.f32 %v544, %v902
      %v904 = vpop.f32.mrb[0].mxu0
      %905 = vmatprep.mubr.f32.mxu0 0.0
      %906 = vmatmul.mubr.f32.gmra.mrb[0].mxu0 %v700
      %v907 = vpop.f32.mrb[0].mxu0
      %v908 = vadd.f32 %v544, %v907
      %v909 = vpop.f32.mrb[0].mxu0
      %910 = vmatprep.mubr.f32.mxu0 0.0
      %911 = vmatmul.mubr.f32.gmra.mrb[0].mxu0 %v703
      %v912 = vpop.f32.mrb[0].mxu0
      %v913 = vadd.f32 %v544, %v912
      %v914 = vpop.f32.mrb[0].mxu0
      %915 = vmatprep.mubr.f32.mxu0 0.0
      %916 = vmatmul.mubr.f32.gmra.mrb[0].mxu0 %v706
      %v917 = vpop.f32.mrb[0].mxu0
      %v918 = vadd.f32 %v544, %v917
      %v919 = vpop.f32.mrb[0].mxu0
      %920 = vmatprep.mubr.f32.mxu0 0.0
      %921 = vmatmul.mubr.f32.gmra.mrb[0].mxu0 %v709
      %v922 = vpop.f32.mrb[0].mxu0
      %v923 = vadd.f32 %v544, %v922
      %v924 = vpop.f32.mrb[0].mxu0
      %925 = vmatprep.mubr.f32.mxu0 0.0
      %926 = vmatmul.mubr.f32.gmra.mrb[0].mxu0 %v712
      %v927 = vpop.f32.mrb[0].mxu0
      %v928 = vadd.f32 %v544, %v927
      %v929 = vpop.f32.mrb[0].mxu0
      %930 = vmatprep.mubr.f32.mxu0 0.0
      %931 = vmatmul.mubr.f32.gmra.mrb[0].mxu0 %v715
      %v932 = vpop.f32.mrb[0].mxu0
      %v933 = vadd.f32 %v544, %v932
      %v934 = vpop.f32.mrb[0].mxu0
      %935 = vmatprep.mubr.f32.mxu0 0.0
      %936 = vmatmul.mubr.f32.gmra.mrb[0].mxu0 %v718
      %v937 = vpop.f32.mrb[0].mxu0
      %v938 = vadd.f32 %v544, %v937
      %v939 = vpop.f32.mrb[0].mxu0
      %940 = vmatprep.mubr.f32.mxu0 0.0
      %941 = vmatmul.mubr.f32.gmra.mrb[0].mxu0 %v721
      %v942 = vpop.f32.mrb[0].mxu0
      %v943 = vadd.f32 %v544, %v942
      %v944 = vpop.f32.mrb[0].mxu0
      %945 = vmatprep.mubr.f32.mxu0 0.0
      %946 = vmatmul.mubr.f32.gmra.mrb[0].mxu0 %v724
      %v947 = vpop.f32.mrb[0].mxu0
      %v948 = vadd.f32 %v544, %v947
      %v949 = vpop.f32.mrb[0].mxu0
      %950 = vdwg.mxu0
      %v951 = vmax.f32 %v793, 0.0
      %v952 = vmax.f32 %v798, 0.0
      %v953 = vmax.f32 %v803, 0.0
      %v954 = vmax.f32 %v808, 0.0
      %v955 = vmax.f32 %v813, 0.0
      %v956 = vmax.f32 %v818, 0.0
      %v957 = vmax.f32 %v823, 0.0
      %v958 = vmax.f32 %v828, 0.0
      %v959 = vmax.f32 %v833, 0.0
      %v960 = vmax.f32 %v838, 0.0
      %v961 = vmax.f32 %v843, 0.0
      %v962 = vmax.f32 %v848, 0.0
      %v963 = vmax.f32 %v853, 0.0
      %v964 = vmax.f32 %v858, 0.0
      %v965 = vmax.f32 %v863, 0.0
      %v966 = vmax.f32 %v868, 0.0
      %v967 = vmax.f32 %v873, 0.0
      %v968 = vmax.f32 %v878, 0.0
      %v969 = vmax.f32 %v883, 0.0
      %v970 = vmax.f32 %v888, 0.0
      %v971 = vmax.f32 %v893, 0.0
      %v972 = vmax.f32 %v898, 0.0
      %v973 = vmax.f32 %v903, 0.0
      %v974 = vmax.f32 %v908, 0.0
      %v975 = vmax.f32 %v913, 0.0
      %v976 = vmax.f32 %v918, 0.0
      %v977 = vmax.f32 %v923, 0.0
      %v978 = vmax.f32 %v928, 0.0
      %v979 = vmax.f32 %v933, 0.0
      %v980 = vmax.f32 %v938, 0.0
      %v981 = vmax.f32 %v943, 0.0
      %v982 = vmax.f32 %v948, 0.0
      %v984 = vsel %vm546, %v535, 0
      %v987 = vsel %vm546, %v536, 0
      %989 = vmatprep.subr.mxu0 0.0
      %990 = vmatpush1.msra.mxu0 %v537
      %991 = vmatprep.subr.mxu0 0.0
      %992 = vmatpush1.msra.mxu0 %v538
      %993 = vmatprep.subr.mxu0 0.0
      %994 = vmatpush1.msra.mxu0 0.0
      %995 = vmatprep.subr.mxu0 0.0
      %996 = vmatpush1.msra.mxu0 0.0
      %997 = vmatprep.subr.mxu0 0.0
      %998 = vmatpush1.msra.mxu0 0.0
      %999 = vmatprep.subr.mxu0 0.0
      %1000 = vmatpush1.msra.mxu0 0.0
      %1001 = vmatprep.subr.mxu0 0.0
      %1002 = vmatpush1.msra.mxu0 0.0
      %1003 = vmatprep.subr.mxu0 0.0
      %1004 = vmatpush1.msra.mxu0 0.0
      %1005 = vmatprep.subr.mxu0 0.0
      %1006 = vmatpush1.msra.mxu0 0.0
      %1007 = vmatprep.subr.mxu0 0.0
      %1008 = vmatpush1.msra.mxu0 0.0
      %1009 = vmatprep.subr.mxu0 0.0
      %1010 = vmatpush1.msra.mxu0 0.0
      %1011 = vmatprep.subr.mxu0 0.0
      %1012 = vmatpush1.msra.mxu0 0.0
      %1013 = vmatprep.subr.mxu0 0.0
      %1014 = vmatpush1.msra.mxu0 0.0
      %1015 = vmatprep.subr.mxu0 0.0
      %1016 = vmatpush1.msra.mxu0 0.0
      %1017 = vmatprep.subr.mxu0 0.0
      %1018 = vmatpush1.msra.mxu0 0.0
      %1019 = vmatprep.subr.mxu0 0.0
      %1020 = vmatpush1.msra.mxu0 0.0
      %1021 = vmatprep.subr.mxu0 0.0
      %1022 = vmatpush1.msra.mxu0 0.0
      %1023 = vmatprep.subr.mxu0 0.0
      %1024 = vmatpush1.msra.mxu0 0.0
      %1025 = vmatprep.subr.mxu0 0.0
      %1026 = vmatpush1.msra.mxu0 0.0
      %1027 = vmatprep.subr.mxu0 0.0
      %1028 = vmatpush1.msra.mxu0 0.0
      %1029 = vmatprep.subr.mxu0 0.0
      %1030 = vmatpush1.msra.mxu0 0.0
      %1031 = vmatprep.subr.mxu0 0.0
      %1032 = vmatpush1.msra.mxu0 0.0
      %1033 = vmatprep.subr.mxu0 0.0
      %1034 = vmatpush1.msra.mxu0 0.0
      %1035 = vmatprep.subr.mxu0 0.0
      %1036 = vmatpush1.msra.mxu0 0.0
      %1037 = vmatprep.subr.mxu0 0.0
      %1038 = vmatpush1.msra.mxu0 0.0
      %1039 = vmatprep.subr.mxu0 0.0
      %1040 = vmatpush1.msra.mxu0 0.0
      %1041 = vmatprep.subr.mxu0 0.0
      %1042 = vmatpush1.msra.mxu0 0.0
      %1043 = vmatprep.subr.mxu0 0.0
      %1044 = vmatpush1.msra.mxu0 0.0
      %1045 = vmatprep.subr.mxu0 0.0
      %1046 = vmatpush1.msra.mxu0 0.0
      %1047 = vmatprep.subr.mxu0 0.0
      %1048 = vmatpush1.msra.mxu0 0.0
      %1049 = vmatprep.subr.mxu0 0.0
      %1050 = vmatpush1.msra.mxu0 0.0
      %1051 = vmatprep.subr.mxu0 0.0
      %1052 = vmatpush1.msra.mxu0 0.0
      %1053 = vmatprep.mubr.f32.mxu0 0.0
      %1054 = vmatmul.mubr.f32.gmra.mrb[0].mxu0 %v984
      %v1055 = vpop.f32.mrb[0].mxu0
      %v1056 = vadd.f32 %v544, %v1055
      %v1057 = vpop.f32.mrb[0].mxu0
      %1058 = vmatprep.mubr.f32.mxu0 0.0
      %1059 = vmatmul.mubr.f32.gmra.mrb[0].mxu0 %v987
      %v1060 = vpop.f32.mrb[0].mxu0
      %v1061 = vadd.f32 %v544, %v1060
      %v1062 = vpop.f32.mrb[0].mxu0
      %1063 = vdwg.mxu0
      %v1064 = vmax.f32 %v1056, 0.0
      %v1065 = vmax.f32 %v1061, 0.0
      %v1066 = vlaneseq
      %v1067 = vshrl.u32 %v1066, 7
      %v1068 = vadd.s32 %v1067, 8
      %v1069 = vadd.s32 %v1067, 16
      %v1070 = vadd.s32 %v1067, 24
      %v1071 = vadd.s32 %v1067, 32
      %v1072 = vadd.s32 %v1067, 40
      %v1073 = vadd.s32 %v1067, 48
      %v1074 = vadd.s32 %v1067, 56
      %v1075 = vadd.s32 %v1067, 64
      %v1076 = vadd.s32 %v1067, 72
      %v1077 = vadd.s32 %v1067, 80
      %v1078 = vadd.s32 %v1067, 88
      %v1079 = vadd.s32 %v1067, 96
      %v1080 = vadd.s32 %v1067, 104
      %v1081 = vadd.s32 %v1067, 112
      %v1082 = vadd.s32 %v1067, 120
      %v1083 = vadd.s32 %v1067, 128
      %v1084 = vadd.s32 %v1067, 136
      %v1085 = vadd.s32 %v1067, 144
      %v1086 = vadd.s32 %v1067, 152
      %v1087 = vadd.s32 %v1067, 160
      %v1088 = vadd.s32 %v1067, 168
      %v1089 = vadd.s32 %v1067, 176
      %v1090 = vadd.s32 %v1067, 184
      %v1091 = vadd.s32 %v1067, 192
      %v1092 = vadd.s32 %v1067, 200
      %v1093 = vadd.s32 %v1067, 208
      %v1094 = vadd.s32 %v1067, 216
      %v1095 = vadd.s32 %v1067, 224
      %v1096 = vadd.s32 %v1067, 232
      %v1097 = vadd.s32 %v1067, 240
      %v1098 = vadd.s32 %v1067, 248
      %v1099 = vadd.s32 %v1067, 256
      %v1100 = vadd.s32 %v1067, 264
      %v1101 = vadd.s32 %v1067, 272
      %v1102 = vadd.s32 %v1067, 280
      %p1103 = scmp.gt.s32.totalorder %s25, 0
      %vm1104 = vcmp.ge.s32.totalorder %v1067, 16
      %vm1105 = vcmp.ge.s32.totalorder %v1068, 16
      %vm1106 = vcmp.ge.s32.totalorder %v1069, 16
      %vm1107 = vcmp.ge.s32.totalorder %v1070, 16
      %vm1108 = vcmp.ge.s32.totalorder %v1071, 16
      %vm1109 = vcmp.ge.s32.totalorder %v1072, 16
      %vm1110 = vcmp.ge.s32.totalorder %v1073, 16
      %vm1111 = vcmp.ge.s32.totalorder %v1074, 16
      %vm1112 = vcmp.ge.s32.totalorder %v1075, 16
      %vm1113 = vcmp.ge.s32.totalorder %v1076, 16
      %vm1114 = vcmp.ge.s32.totalorder %v1077, 16
      %vm1115 = vcmp.ge.s32.totalorder %v1078, 16
      %vm1116 = vcmp.ge.s32.totalorder %v1079, 16
      %vm1117 = vcmp.ge.s32.totalorder %v1080, 16
      %vm1118 = vcmp.ge.s32.totalorder %v1081, 16
      %vm1119 = vcmp.ge.s32.totalorder %v1082, 16
      %vm1120 = vcmp.ge.s32.totalorder %v1083, 16
      %vm1121 = vcmp.ge.s32.totalorder %v1084, 16
      %vm1122 = vcmp.ge.s32.totalorder %v1085, 16
      %vm1123 = vcmp.ge.s32.totalorder %v1086, 16
      %vm1124 = vcmp.ge.s32.totalorder %v1087, 16
      %vm1125 = vcmp.ge.s32.totalorder %v1088, 16
      %vm1126 = vcmp.ge.s32.totalorder %v1089, 16
      %vm1127 = vcmp.ge.s32.totalorder %v1090, 16
      %vm1128 = vcmp.ge.s32.totalorder %v1091, 16
      %vm1129 = vcmp.ge.s32.totalorder %v1092, 16
      %vm1130 = vcmp.ge.s32.totalorder %v1093, 16
      %vm1131 = vcmp.ge.s32.totalorder %v1094, 16
      %vm1132 = vcmp.ge.s32.totalorder %v1095, 16
      %vm1133 = vcmp.ge.s32.totalorder %v1096, 16
      %vm1134 = vcmp.ge.s32.totalorder %v1097, 16
      %vm1135 = vcmp.ge.s32.totalorder %v1098, 16
      %vm1136 = vcmp.ge.s32.totalorder %v1099, 16
      %vm1137 = vcmp.ge.s32.totalorder %v1100, 16
      %vm1138 = vcmp.ge.s32.totalorder %v1101, 16
      %vm1139 = vcmp.ge.s32.totalorder %v1102, 16
      %s1140 = scalar_select %p1103, 1, 0
      %v1141 = vstv %s1140
      %vm1142 = vcmp.eq.s32.totalorder %v1141, 1
      %vm1143 = vmor %vm1142, %vm1104
      %vm1144 = vmor %vm1142, %vm1105
      %vm1145 = vmor %vm1142, %vm1106
      %vm1146 = vmor %vm1142, %vm1107
      %vm1147 = vmor %vm1142, %vm1108
      %vm1148 = vmor %vm1142, %vm1109
      %vm1149 = vmor %vm1142, %vm1110
      %vm1150 = vmor %vm1142, %vm1111
      %vm1151 = vmor %vm1142, %vm1112
      %vm1152 = vmor %vm1142, %vm1113
      %vm1153 = vmor %vm1142, %vm1114
      %vm1154 = vmor %vm1142, %vm1115
      %vm1155 = vmor %vm1142, %vm1116
      %vm1156 = vmor %vm1142, %vm1117
      %vm1157 = vmor %vm1142, %vm1118
      %vm1158 = vmor %vm1142, %vm1119
      %vm1159 = vmor %vm1142, %vm1120
      %vm1160 = vmor %vm1142, %vm1121
      %vm1161 = vmor %vm1142, %vm1122
      %vm1162 = vmor %vm1142, %vm1123
      %vm1163 = vmor %vm1142, %vm1124
      %vm1164 = vmor %vm1142, %vm1125
      %vm1165 = vmor %vm1142, %vm1126
      %vm1166 = vmor %vm1142, %vm1127
      %vm1167 = vmor %vm1142, %vm1128
      %vm1168 = vmor %vm1142, %vm1129
      %vm1169 = vmor %vm1142, %vm1130
      %vm1170 = vmor %vm1142, %vm1131
      %vm1171 = vmor %vm1142, %vm1132
      %vm1172 = vmor %vm1142, %vm1133
      %vm1173 = vmor %vm1142, %vm1134
      %vm1174 = vmor %vm1142, %vm1135
      %vm1175 = vmor %vm1142, %vm1136
      %vm1176 = vmor %vm1142, %vm1137
      %vm1177 = vmor %vm1142, %vm1138
      %vm1178 = vmor %vm1142, %vm1139
      %p1179 = scmp.lt.s32.totalorder %s25, 0
      %vm1180 = vcmp.lt.s32.totalorder %v1067, 272
      %vm1181 = vcmp.lt.s32.totalorder %v1068, 272
      %vm1182 = vcmp.lt.s32.totalorder %v1069, 272
      %vm1183 = vcmp.lt.s32.totalorder %v1070, 272
      %vm1184 = vcmp.lt.s32.totalorder %v1071, 272
      %vm1185 = vcmp.lt.s32.totalorder %v1072, 272
      %vm1186 = vcmp.lt.s32.totalorder %v1073, 272
      %vm1187 = vcmp.lt.s32.totalorder %v1074, 272
      %vm1188 = vcmp.lt.s32.totalorder %v1075, 272
      %vm1189 = vcmp.lt.s32.totalorder %v1076, 272
      %vm1190 = vcmp.lt.s32.totalorder %v1077, 272
      %vm1191 = vcmp.lt.s32.totalorder %v1078, 272
      %vm1192 = vcmp.lt.s32.totalorder %v1079, 272
      %vm1193 = vcmp.lt.s32.totalorder %v1080, 272
      %vm1194 = vcmp.lt.s32.totalorder %v1081, 272
      %vm1195 = vcmp.lt.s32.totalorder %v1082, 272
      %vm1196 = vcmp.lt.s32.totalorder %v1083, 272
      %vm1197 = vcmp.lt.s32.totalorder %v1084, 272
      %vm1198 = vcmp.lt.s32.totalorder %v1085, 272
      %vm1199 = vcmp.lt.s32.totalorder %v1086, 272
      %vm1200 = vcmp.lt.s32.totalorder %v1087, 272
      %vm1201 = vcmp.lt.s32.totalorder %v1088, 272
      %vm1202 = vcmp.lt.s32.totalorder %v1089, 272
      %vm1203 = vcmp.lt.s32.totalorder %v1090, 272
      %vm1204 = vcmp.lt.s32.totalorder %v1091, 272
      %vm1205 = vcmp.lt.s32.totalorder %v1092, 272
      %vm1206 = vcmp.lt.s32.totalorder %v1093, 272
      %vm1207 = vcmp.lt.s32.totalorder %v1094, 272
      %vm1208 = vcmp.lt.s32.totalorder %v1095, 272
      %vm1209 = vcmp.lt.s32.totalorder %v1096, 272
      %vm1210 = vcmp.lt.s32.totalorder %v1097, 272
      %vm1211 = vcmp.lt.s32.totalorder %v1098, 272
      %vm1212 = vcmp.lt.s32.totalorder %v1099, 272
      %vm1213 = vcmp.lt.s32.totalorder %v1100, 272
      %vm1214 = vcmp.lt.s32.totalorder %v1101, 272
      %vm1215 = vcmp.lt.s32.totalorder %v1102, 272
      %s1216 = scalar_select %p1179, 1, 0
      %v1217 = vstv %s1216
      %vm1218 = vcmp.eq.s32.totalorder %v1217, 1
      %vm1219 = vmor %vm1218, %vm1180
      %vm1220 = vmor %vm1218, %vm1181
      %vm1221 = vmor %vm1218, %vm1182
      %vm1222 = vmor %vm1218, %vm1183
      %vm1223 = vmor %vm1218, %vm1184
      %vm1224 = vmor %vm1218, %vm1185
      %vm1225 = vmor %vm1218, %vm1186
      %vm1226 = vmor %vm1218, %vm1187
      %vm1227 = vmor %vm1218, %vm1188
      %vm1228 = vmor %vm1218, %vm1189
      %vm1229 = vmor %vm1218, %vm1190
      %vm1230 = vmor %vm1218, %vm1191
      %vm1231 = vmor %vm1218, %vm1192
      %vm1232 = vmor %vm1218, %vm1193
      %vm1233 = vmor %vm1218, %vm1194
      %vm1234 = vmor %vm1218, %vm1195
      %vm1235 = vmor %vm1218, %vm1196
      %vm1236 = vmor %vm1218, %vm1197
      %vm1237 = vmor %vm1218, %vm1198
      %vm1238 = vmor %vm1218, %vm1199
      %vm1239 = vmor %vm1218, %vm1200
      %vm1240 = vmor %vm1218, %vm1201
      %vm1241 = vmor %vm1218, %vm1202
      %vm1242 = vmor %vm1218, %vm1203
      %vm1243 = vmor %vm1218, %vm1204
      %vm1244 = vmor %vm1218, %vm1205
      %vm1245 = vmor %vm1218, %vm1206
      %vm1246 = vmor %vm1218, %vm1207
      %vm1247 = vmor %vm1218, %vm1208
      %vm1248 = vmor %vm1218, %vm1209
      %vm1249 = vmor %vm1218, %vm1210
      %vm1250 = vmor %vm1218, %vm1211
      %vm1251 = vmor %vm1218, %vm1212
      %vm1252 = vmor %vm1218, %vm1213
      %vm1253 = vmor %vm1218, %vm1214
      %vm1254 = vmor %vm1218, %vm1215
      %vm1255 = vmand %vm1143, %vm1219
      %vm1256 = vmand %vm1144, %vm1220
      %vm1257 = vmand %vm1145, %vm1221
      %vm1258 = vmand %vm1146, %vm1222
      %vm1259 = vmand %vm1147, %vm1223
      %vm1260 = vmand %vm1148, %vm1224
      %vm1261 = vmand %vm1149, %vm1225
      %vm1262 = vmand %vm1150, %vm1226
      %vm1263 = vmand %vm1151, %vm1227
      %vm1264 = vmand %vm1152, %vm1228
      %vm1265 = vmand %vm1153, %vm1229
      %vm1266 = vmand %vm1154, %vm1230
      %vm1267 = vmand %vm1155, %vm1231
      %vm1268 = vmand %vm1156, %vm1232
      %vm1269 = vmand %vm1157, %vm1233
      %vm1270 = vmand %vm1158, %vm1234
      %vm1271 = vmand %vm1159, %vm1235
      %vm1272 = vmand %vm1160, %vm1236
      %vm1273 = vmand %vm1161, %vm1237
      %vm1274 = vmand %vm1162, %vm1238
      %vm1275 = vmand %vm1163, %vm1239
      %vm1276 = vmand %vm1164, %vm1240
      %vm1277 = vmand %vm1165, %vm1241
      %vm1278 = vmand %vm1166, %vm1242
      %vm1279 = vmand %vm1167, %vm1243
      %vm1280 = vmand %vm1168, %vm1244
      %vm1281 = vmand %vm1169, %vm1245
      %vm1282 = vmand %vm1170, %vm1246
      %vm1283 = vmand %vm1171, %vm1247
      %vm1284 = vmand %vm1172, %vm1248
      %vm1285 = vmand %vm1173, %vm1249
      %vm1286 = vmand %vm1174, %vm1250
      %vm1287 = vmand %vm1175, %vm1251
      %vm1288 = vmand %vm1176, %vm1252
      %vm1289 = vmand %vm1177, %vm1253
      %vm1290 = vmand %vm1178, %vm1254
      %v1291 = vsel %vm1255, 1, 0
      %v1292 = vsel %vm1256, 1, 0
      %v1293 = vsel %vm1257, 1, 0
      %v1294 = vsel %vm1258, 1, 0
      %v1295 = vsel %vm1259, 1, 0
      %v1296 = vsel %vm1260, 1, 0
      %v1297 = vsel %vm1261, 1, 0
      %v1298 = vsel %vm1262, 1, 0
      %v1299 = vsel %vm1263, 1, 0
      %v1300 = vsel %vm1264, 1, 0
      %v1301 = vsel %vm1265, 1, 0
      %v1302 = vsel %vm1266, 1, 0
      %v1303 = vsel %vm1267, 1, 0
      %v1304 = vsel %vm1268, 1, 0
      %v1305 = vsel %vm1269, 1, 0
      %v1306 = vsel %vm1270, 1, 0
      %v1307 = vsel %vm1271, 1, 0
      %v1308 = vsel %vm1272, 1, 0
      %v1309 = vsel %vm1273, 1, 0
      %v1310 = vsel %vm1274, 1, 0
      %v1311 = vsel %vm1275, 1, 0
      %v1312 = vsel %vm1276, 1, 0
      %v1313 = vsel %vm1277, 1, 0
      %v1314 = vsel %vm1278, 1, 0
      %v1315 = vsel %vm1279, 1, 0
      %v1316 = vsel %vm1280, 1, 0
      %v1317 = vsel %vm1281, 1, 0
      %v1318 = vsel %vm1282, 1, 0
      %v1319 = vsel %vm1283, 1, 0
      %v1320 = vsel %vm1284, 1, 0
      %v1321 = vsel %vm1285, 1, 0
      %v1322 = vsel %vm1286, 1, 0
      %v1323 = vsel %vm1287, 1, 0
      %v1324 = vsel %vm1288, 1, 0
      %v1325 = vsel %vm1289, 1, 0
      %v1326 = vsel %vm1290, 1, 0
      %vm1327 = vcmp.eq.s32.totalorder %v1291, 1
      %vm1328 = vcmp.eq.s32.totalorder %v1292, 1
      %vm1329 = vcmp.eq.s32.totalorder %v1293, 1
      %vm1330 = vcmp.eq.s32.totalorder %v1294, 1
      %vm1331 = vcmp.eq.s32.totalorder %v1295, 1
      %vm1332 = vcmp.eq.s32.totalorder %v1296, 1
      %vm1333 = vcmp.eq.s32.totalorder %v1297, 1
      %vm1334 = vcmp.eq.s32.totalorder %v1298, 1
      %vm1335 = vcmp.eq.s32.totalorder %v1299, 1
      %vm1336 = vcmp.eq.s32.totalorder %v1300, 1
      %vm1337 = vcmp.eq.s32.totalorder %v1301, 1
      %vm1338 = vcmp.eq.s32.totalorder %v1302, 1
      %vm1339 = vcmp.eq.s32.totalorder %v1303, 1
      %vm1340 = vcmp.eq.s32.totalorder %v1304, 1
      %vm1341 = vcmp.eq.s32.totalorder %v1305, 1
      %vm1342 = vcmp.eq.s32.totalorder %v1306, 1
      %vm1343 = vcmp.eq.s32.totalorder %v1307, 1
      %vm1344 = vcmp.eq.s32.totalorder %v1308, 1
      %vm1345 = vcmp.eq.s32.totalorder %v1309, 1
      %vm1346 = vcmp.eq.s32.totalorder %v1310, 1
      %vm1347 = vcmp.eq.s32.totalorder %v1311, 1
      %vm1348 = vcmp.eq.s32.totalorder %v1312, 1
      %vm1349 = vcmp.eq.s32.totalorder %v1313, 1
      %vm1350 = vcmp.eq.s32.totalorder %v1314, 1
      %vm1351 = vcmp.eq.s32.totalorder %v1315, 1
      %vm1352 = vcmp.eq.s32.totalorder %v1316, 1
      %vm1353 = vcmp.eq.s32.totalorder %v1317, 1
      %vm1354 = vcmp.eq.s32.totalorder %v1318, 1
      %vm1355 = vcmp.eq.s32.totalorder %v1319, 1
      %vm1356 = vcmp.eq.s32.totalorder %v1320, 1
      %vm1357 = vcmp.eq.s32.totalorder %v1321, 1
      %vm1358 = vcmp.eq.s32.totalorder %v1322, 1
      %vm1359 = vcmp.eq.s32.totalorder %v1323, 1
      %vm1360 = vcmp.eq.s32.totalorder %v1324, 1
      %vm1361 = vcmp.eq.s32.totalorder %v1325, 1
      %vm1362 = vcmp.eq.s32.totalorder %v1326, 1
      %v1363 = vsel %vm1327, %v628, 0.0
      %v1364 = vsel %vm1328, %v629, 0.0
      %v1365 = vsel %vm1329, %v951, 0.0
      %v1366 = vsel %vm1330, %v952, 0.0
      %v1367 = vsel %vm1331, %v953, 0.0
      %v1368 = vsel %vm1332, %v954, 0.0
      %v1369 = vsel %vm1333, %v955, 0.0
      %v1370 = vsel %vm1334, %v956, 0.0
      %v1371 = vsel %vm1335, %v957, 0.0
      %v1372 = vsel %vm1336, %v958, 0.0
      %v1373 = vsel %vm1337, %v959, 0.0
      %v1374 = vsel %vm1338, %v960, 0.0
      %v1375 = vsel %vm1339, %v961, 0.0
      %v1376 = vsel %vm1340, %v962, 0.0
      %v1377 = vsel %vm1341, %v963, 0.0
      %v1378 = vsel %vm1342, %v964, 0.0
      %v1379 = vsel %vm1343, %v965, 0.0
      %v1380 = vsel %vm1344, %v966, 0.0
      %v1381 = vsel %vm1345, %v967, 0.0
      %v1382 = vsel %vm1346, %v968, 0.0
      %v1383 = vsel %vm1347, %v969, 0.0
      %v1384 = vsel %vm1348, %v970, 0.0
      %v1385 = vsel %vm1349, %v971, 0.0
      %v1386 = vsel %vm1350, %v972, 0.0
      %v1387 = vsel %vm1351, %v973, 0.0
      %v1388 = vsel %vm1352, %v974, 0.0
      %v1389 = vsel %vm1353, %v975, 0.0
      %v1390 = vsel %vm1354, %v976, 0.0
      %v1391 = vsel %vm1355, %v977, 0.0
      %v1392 = vsel %vm1356, %v978, 0.0
      %v1393 = vsel %vm1357, %v979, 0.0
      %v1394 = vsel %vm1358, %v980, 0.0
      %v1395 = vsel %vm1359, %v981, 0.0
      %v1396 = vsel %vm1360, %v982, 0.0
      %v1397 = vsel %vm1361, %v1064, 0.0
      %v1398 = vsel %vm1362, %v1065, 0.0
      %vm1399 = vcmp.lt.s32.totalorder %v1067, 0
      %v1400 = vsub.s32 0, %v1067
      %v1401 = vsel %vm1399, %v1400, %v1067
      %v1402 = vshrl.u32 %v1401, 4
      %v1403 = vand.u32 %v1401, 15
      %v1404 = vsub.s32 0, %v1403
      %v1405 = vsel %vm1399, %v1404, %v1403
      %vm1406 = vcmp.lt.s32.totalorder %v1068, 0
      %v1407 = vsub.s32 0, %v1068
      %v1408 = vsel %vm1406, %v1407, %v1068
      %v1409 = vshrl.u32 %v1408, 4
      %v1410 = vand.u32 %v1408, 15
      %v1411 = vsub.s32 0, %v1410
      %v1412 = vsel %vm1406, %v1411, %v1410
      %vm1413 = vcmp.lt.s32.totalorder %v1069, 0
      %v1414 = vsub.s32 0, %v1069
      %v1415 = vsel %vm1413, %v1414, %v1069
      %v1416 = vshrl.u32 %v1415, 4
      %v1417 = vand.u32 %v1415, 15
      %v1418 = vsub.s32 0, %v1417
      %v1419 = vsel %vm1413, %v1418, %v1417
      %vm1420 = vcmp.lt.s32.totalorder %v1070, 0
      %v1421 = vsub.s32 0, %v1070
      %v1422 = vsel %vm1420, %v1421, %v1070
      %v1423 = vshrl.u32 %v1422, 4
      %v1424 = vand.u32 %v1422, 15
      %v1425 = vsub.s32 0, %v1424
      %v1426 = vsel %vm1420, %v1425, %v1424
      %vm1427 = vcmp.lt.s32.totalorder %v1071, 0
      %v1428 = vsub.s32 0, %v1071
      %v1429 = vsel %vm1427, %v1428, %v1071
      %v1430 = vshrl.u32 %v1429, 4
      %v1431 = vand.u32 %v1429, 15
      %v1432 = vsub.s32 0, %v1431
      %v1433 = vsel %vm1427, %v1432, %v1431
      %vm1434 = vcmp.lt.s32.totalorder %v1072, 0
      %v1435 = vsub.s32 0, %v1072
      %v1436 = vsel %vm1434, %v1435, %v1072
      %v1437 = vshrl.u32 %v1436, 4
      %v1438 = vand.u32 %v1436, 15
      %v1439 = vsub.s32 0, %v1438
      %v1440 = vsel %vm1434, %v1439, %v1438
      %vm1441 = vcmp.lt.s32.totalorder %v1073, 0
      %v1442 = vsub.s32 0, %v1073
      %v1443 = vsel %vm1441, %v1442, %v1073
      %v1444 = vshrl.u32 %v1443, 4
      %v1445 = vand.u32 %v1443, 15
      %v1446 = vsub.s32 0, %v1445
      %v1447 = vsel %vm1441, %v1446, %v1445
      %vm1448 = vcmp.lt.s32.totalorder %v1074, 0
      %v1449 = vsub.s32 0, %v1074
      %v1450 = vsel %vm1448, %v1449, %v1074
      %v1451 = vshrl.u32 %v1450, 4
      %v1452 = vand.u32 %v1450, 15
      %v1453 = vsub.s32 0, %v1452
      %v1454 = vsel %vm1448, %v1453, %v1452
      %vm1455 = vcmp.lt.s32.totalorder %v1075, 0
      %v1456 = vsub.s32 0, %v1075
      %v1457 = vsel %vm1455, %v1456, %v1075
      %v1458 = vshrl.u32 %v1457, 4
      %v1459 = vand.u32 %v1457, 15
      %v1460 = vsub.s32 0, %v1459
      %v1461 = vsel %vm1455, %v1460, %v1459
      %vm1462 = vcmp.lt.s32.totalorder %v1076, 0
      %v1463 = vsub.s32 0, %v1076
      %v1464 = vsel %vm1462, %v1463, %v1076
      %v1465 = vshrl.u32 %v1464, 4
      %v1466 = vand.u32 %v1464, 15
      %v1467 = vsub.s32 0, %v1466
      %v1468 = vsel %vm1462, %v1467, %v1466
      %vm1469 = vcmp.lt.s32.totalorder %v1077, 0
      %v1470 = vsub.s32 0, %v1077
      %v1471 = vsel %vm1469, %v1470, %v1077
      %v1472 = vshrl.u32 %v1471, 4
      %v1473 = vand.u32 %v1471, 15
      %v1474 = vsub.s32 0, %v1473
      %v1475 = vsel %vm1469, %v1474, %v1473
      %vm1476 = vcmp.lt.s32.totalorder %v1078, 0
      %v1477 = vsub.s32 0, %v1078
      %v1478 = vsel %vm1476, %v1477, %v1078
      %v1479 = vshrl.u32 %v1478, 4
      %v1480 = vand.u32 %v1478, 15
      %v1481 = vsub.s32 0, %v1480
      %v1482 = vsel %vm1476, %v1481, %v1480
      %vm1483 = vcmp.lt.s32.totalorder %v1079, 0
      %v1484 = vsub.s32 0, %v1079
      %v1485 = vsel %vm1483, %v1484, %v1079
      %v1486 = vshrl.u32 %v1485, 4
      %v1487 = vand.u32 %v1485, 15
      %v1488 = vsub.s32 0, %v1487
      %v1489 = vsel %vm1483, %v1488, %v1487
      %vm1490 = vcmp.lt.s32.totalorder %v1080, 0
      %v1491 = vsub.s32 0, %v1080
      %v1492 = vsel %vm1490, %v1491, %v1080
      %v1493 = vshrl.u32 %v1492, 4
      %v1494 = vand.u32 %v1492, 15
      %v1495 = vsub.s32 0, %v1494
      %v1496 = vsel %vm1490, %v1495, %v1494
      %vm1497 = vcmp.lt.s32.totalorder %v1081, 0
      %v1498 = vsub.s32 0, %v1081
      %v1499 = vsel %vm1497, %v1498, %v1081
      %v1500 = vshrl.u32 %v1499, 4
      %v1501 = vand.u32 %v1499, 15
      %v1502 = vsub.s32 0, %v1501
      %v1503 = vsel %vm1497, %v1502, %v1501
      %vm1504 = vcmp.lt.s32.totalorder %v1082, 0
      %v1505 = vsub.s32 0, %v1082
      %v1506 = vsel %vm1504, %v1505, %v1082
      %v1507 = vshrl.u32 %v1506, 4
      %v1508 = vand.u32 %v1506, 15
      %v1509 = vsub.s32 0, %v1508
      %v1510 = vsel %vm1504, %v1509, %v1508
      %vm1511 = vcmp.lt.s32.totalorder %v1083, 0
      %v1512 = vsub.s32 0, %v1083
      %v1513 = vsel %vm1511, %v1512, %v1083
      %v1514 = vshrl.u32 %v1513, 4
      %v1515 = vand.u32 %v1513, 15
      %v1516 = vsub.s32 0, %v1515
      %v1517 = vsel %vm1511, %v1516, %v1515
      %vm1518 = vcmp.lt.s32.totalorder %v1084, 0
      %v1519 = vsub.s32 0, %v1084
      %v1520 = vsel %vm1518, %v1519, %v1084
      %v1521 = vshrl.u32 %v1520, 4
      %v1522 = vand.u32 %v1520, 15
      %v1523 = vsub.s32 0, %v1522
      %v1524 = vsel %vm1518, %v1523, %v1522
      %vm1525 = vcmp.lt.s32.totalorder %v1085, 0
      %v1526 = vsub.s32 0, %v1085
      %v1527 = vsel %vm1525, %v1526, %v1085
      %v1528 = vshrl.u32 %v1527, 4
      %v1529 = vand.u32 %v1527, 15
      %v1530 = vsub.s32 0, %v1529
      %v1531 = vsel %vm1525, %v1530, %v1529
      %vm1532 = vcmp.lt.s32.totalorder %v1086, 0
      %v1533 = vsub.s32 0, %v1086
      %v1534 = vsel %vm1532, %v1533, %v1086
      %v1535 = vshrl.u32 %v1534, 4
      %v1536 = vand.u32 %v1534, 15
      %v1537 = vsub.s32 0, %v1536
      %v1538 = vsel %vm1532, %v1537, %v1536
      %vm1539 = vcmp.lt.s32.totalorder %v1087, 0
      %v1540 = vsub.s32 0, %v1087
      %v1541 = vsel %vm1539, %v1540, %v1087
      %v1542 = vshrl.u32 %v1541, 4
      %v1543 = vand.u32 %v1541, 15
      %v1544 = vsub.s32 0, %v1543
      %v1545 = vsel %vm1539, %v1544, %v1543
      %vm1546 = vcmp.lt.s32.totalorder %v1088, 0
      %v1547 = vsub.s32 0, %v1088
      %v1548 = vsel %vm1546, %v1547, %v1088
      %v1549 = vshrl.u32 %v1548, 4
      %v1550 = vand.u32 %v1548, 15
      %v1551 = vsub.s32 0, %v1550
      %v1552 = vsel %vm1546, %v1551, %v1550
      %vm1553 = vcmp.lt.s32.totalorder %v1089, 0
      %v1554 = vsub.s32 0, %v1089
      %v1555 = vsel %vm1553, %v1554, %v1089
      %v1556 = vshrl.u32 %v1555, 4
      %v1557 = vand.u32 %v1555, 15
      %v1558 = vsub.s32 0, %v1557
      %v1559 = vsel %vm1553, %v1558, %v1557
      %vm1560 = vcmp.lt.s32.totalorder %v1090, 0
      %v1561 = vsub.s32 0, %v1090
      %v1562 = vsel %vm1560, %v1561, %v1090
      %v1563 = vshrl.u32 %v1562, 4
      %v1564 = vand.u32 %v1562, 15
      %v1565 = vsub.s32 0, %v1564
      %v1566 = vsel %vm1560, %v1565, %v1564
      %vm1567 = vcmp.lt.s32.totalorder %v1091, 0
      %v1568 = vsub.s32 0, %v1091
      %v1569 = vsel %vm1567, %v1568, %v1091
      %v1570 = vshrl.u32 %v1569, 4
      %v1571 = vand.u32 %v1569, 15
      %v1572 = vsub.s32 0, %v1571
      %v1573 = vsel %vm1567, %v1572, %v1571
      %vm1574 = vcmp.lt.s32.totalorder %v1092, 0
      %v1575 = vsub.s32 0, %v1092
      %v1576 = vsel %vm1574, %v1575, %v1092
      %v1577 = vshrl.u32 %v1576, 4
      %v1578 = vand.u32 %v1576, 15
      %v1579 = vsub.s32 0, %v1578
      %v1580 = vsel %vm1574, %v1579, %v1578
      %vm1581 = vcmp.lt.s32.totalorder %v1093, 0
      %v1582 = vsub.s32 0, %v1093
      %v1583 = vsel %vm1581, %v1582, %v1093
      %v1584 = vshrl.u32 %v1583, 4
      %v1585 = vand.u32 %v1583, 15
      %v1586 = vsub.s32 0, %v1585
      %v1587 = vsel %vm1581, %v1586, %v1585
      %vm1588 = vcmp.lt.s32.totalorder %v1094, 0
      %v1589 = vsub.s32 0, %v1094
      %v1590 = vsel %vm1588, %v1589, %v1094
      %v1591 = vshrl.u32 %v1590, 4
      %v1592 = vand.u32 %v1590, 15
      %v1593 = vsub.s32 0, %v1592
      %v1594 = vsel %vm1588, %v1593, %v1592
      %vm1595 = vcmp.lt.s32.totalorder %v1095, 0
      %v1596 = vsub.s32 0, %v1095
      %v1597 = vsel %vm1595, %v1596, %v1095
      %v1598 = vshrl.u32 %v1597, 4
      %v1599 = vand.u32 %v1597, 15
      %v1600 = vsub.s32 0, %v1599
      %v1601 = vsel %vm1595, %v1600, %v1599
      %vm1602 = vcmp.lt.s32.totalorder %v1096, 0
      %v1603 = vsub.s32 0, %v1096
      %v1604 = vsel %vm1602, %v1603, %v1096
      %v1605 = vshrl.u32 %v1604, 4
      %v1606 = vand.u32 %v1604, 15
      %v1607 = vsub.s32 0, %v1606
      %v1608 = vsel %vm1602, %v1607, %v1606
      %vm1609 = vcmp.lt.s32.totalorder %v1097, 0
      %v1610 = vsub.s32 0, %v1097
      %v1611 = vsel %vm1609, %v1610, %v1097
      %v1612 = vshrl.u32 %v1611, 4
      %v1613 = vand.u32 %v1611, 15
      %v1614 = vsub.s32 0, %v1613
      %v1615 = vsel %vm1609, %v1614, %v1613
      %vm1616 = vcmp.lt.s32.totalorder %v1098, 0
      %v1617 = vsub.s32 0, %v1098
      %v1618 = vsel %vm1616, %v1617, %v1098
      %v1619 = vshrl.u32 %v1618, 4
      %v1620 = vand.u32 %v1618, 15
      %v1621 = vsub.s32 0, %v1620
      %v1622 = vsel %vm1616, %v1621, %v1620
      %vm1623 = vcmp.lt.s32.totalorder %v1099, 0
      %v1624 = vsub.s32 0, %v1099
      %v1625 = vsel %vm1623, %v1624, %v1099
      %v1626 = vshrl.u32 %v1625, 4
      %v1627 = vand.u32 %v1625, 15
      %v1628 = vsub.s32 0, %v1627
      %v1629 = vsel %vm1623, %v1628, %v1627
      %vm1630 = vcmp.lt.s32.totalorder %v1100, 0
      %v1631 = vsub.s32 0, %v1100
      %v1632 = vsel %vm1630, %v1631, %v1100
      %v1633 = vshrl.u32 %v1632, 4
      %v1634 = vand.u32 %v1632, 15
      %v1635 = vsub.s32 0, %v1634
      %v1636 = vsel %vm1630, %v1635, %v1634
      %vm1637 = vcmp.lt.s32.totalorder %v1101, 0
      %v1638 = vsub.s32 0, %v1101
      %v1639 = vsel %vm1637, %v1638, %v1101
      %v1640 = vshrl.u32 %v1639, 4
      %v1641 = vand.u32 %v1639, 15
      %v1642 = vsub.s32 0, %v1641
      %v1643 = vsel %vm1637, %v1642, %v1641
      %vm1644 = vcmp.lt.s32.totalorder %v1102, 0
      %v1645 = vsub.s32 0, %v1102
      %v1646 = vsel %vm1644, %v1645, %v1102
      %v1647 = vshrl.u32 %v1646, 4
      %v1648 = vand.u32 %v1646, 15
      %v1649 = vsub.s32 0, %v1648
      %v1650 = vsel %vm1644, %v1649, %v1648
      %vm1651 = vcmp.ne.s32.totalorder %v1405, 0
      %vm1652 = vcmp.ne.s32.totalorder %v1412, 0
      %vm1653 = vcmp.ne.s32.totalorder %v1419, 0
      %vm1654 = vcmp.ne.s32.totalorder %v1426, 0
      %vm1655 = vcmp.ne.s32.totalorder %v1433, 0
      %vm1656 = vcmp.ne.s32.totalorder %v1440, 0
      %vm1657 = vcmp.ne.s32.totalorder %v1447, 0
      %vm1658 = vcmp.ne.s32.totalorder %v1454, 0
      %vm1659 = vcmp.ne.s32.totalorder %v1461, 0
      %vm1660 = vcmp.ne.s32.totalorder %v1468, 0
      %vm1661 = vcmp.ne.s32.totalorder %v1475, 0
      %vm1662 = vcmp.ne.s32.totalorder %v1482, 0
      %vm1663 = vcmp.ne.s32.totalorder %v1489, 0
      %vm1664 = vcmp.ne.s32.totalorder %v1496, 0
      %vm1665 = vcmp.ne.s32.totalorder %v1503, 0
      %vm1666 = vcmp.ne.s32.totalorder %v1510, 0
      %vm1667 = vcmp.ne.s32.totalorder %v1517, 0
      %vm1668 = vcmp.ne.s32.totalorder %v1524, 0
      %vm1669 = vcmp.ne.s32.totalorder %v1531, 0
      %vm1670 = vcmp.ne.s32.totalorder %v1538, 0
      %vm1671 = vcmp.ne.s32.totalorder %v1545, 0
      %vm1672 = vcmp.ne.s32.totalorder %v1552, 0
      %vm1673 = vcmp.ne.s32.totalorder %v1559, 0
      %vm1674 = vcmp.ne.s32.totalorder %v1566, 0
      %vm1675 = vcmp.ne.s32.totalorder %v1573, 0
      %vm1676 = vcmp.ne.s32.totalorder %v1580, 0
      %vm1677 = vcmp.ne.s32.totalorder %v1587, 0
      %vm1678 = vcmp.ne.s32.totalorder %v1594, 0
      %vm1679 = vcmp.ne.s32.totalorder %v1601, 0
      %vm1680 = vcmp.ne.s32.totalorder %v1608, 0
      %vm1681 = vcmp.ne.s32.totalorder %v1615, 0
      %vm1682 = vcmp.ne.s32.totalorder %v1622, 0
      %vm1683 = vcmp.ne.s32.totalorder %v1629, 0
      %vm1684 = vcmp.ne.s32.totalorder %v1636, 0
      %vm1685 = vcmp.ne.s32.totalorder %v1643, 0
      %vm1686 = vcmp.ne.s32.totalorder %v1650, 0
      %vm1687 = vcmp.lt.s32.totalorder %v1405, 0
      %vm1688 = vcmp.lt.s32.totalorder %v1412, 0
      %vm1689 = vcmp.lt.s32.totalorder %v1419, 0
      %vm1690 = vcmp.lt.s32.totalorder %v1426, 0
      %vm1691 = vcmp.lt.s32.totalorder %v1433, 0
      %vm1692 = vcmp.lt.s32.totalorder %v1440, 0
      %vm1693 = vcmp.lt.s32.totalorder %v1447, 0
      %vm1694 = vcmp.lt.s32.totalorder %v1454, 0
      %vm1695 = vcmp.lt.s32.totalorder %v1461, 0
      %vm1696 = vcmp.lt.s32.totalorder %v1468, 0
      %vm1697 = vcmp.lt.s32.totalorder %v1475, 0
      %vm1698 = vcmp.lt.s32.totalorder %v1482, 0
      %vm1699 = vcmp.lt.s32.totalorder %v1489, 0
      %vm1700 = vcmp.lt.s32.totalorder %v1496, 0
      %vm1701 = vcmp.lt.s32.totalorder %v1503, 0
      %vm1702 = vcmp.lt.s32.totalorder %v1510, 0
      %vm1703 = vcmp.lt.s32.totalorder %v1517, 0
      %vm1704 = vcmp.lt.s32.totalorder %v1524, 0
      %vm1705 = vcmp.lt.s32.totalorder %v1531, 0
      %vm1706 = vcmp.lt.s32.totalorder %v1538, 0
      %vm1707 = vcmp.lt.s32.totalorder %v1545, 0
      %vm1708 = vcmp.lt.s32.totalorder %v1552, 0
      %vm1709 = vcmp.lt.s32.totalorder %v1559, 0
      %vm1710 = vcmp.lt.s32.totalorder %v1566, 0
      %vm1711 = vcmp.lt.s32.totalorder %v1573, 0
      %vm1712 = vcmp.lt.s32.totalorder %v1580, 0
      %vm1713 = vcmp.lt.s32.totalorder %v1587, 0
      %vm1714 = vcmp.lt.s32.totalorder %v1594, 0
      %vm1715 = vcmp.lt.s32.totalorder %v1601, 0
      %vm1716 = vcmp.lt.s32.totalorder %v1608, 0
      %vm1717 = vcmp.lt.s32.totalorder %v1615, 0
      %vm1718 = vcmp.lt.s32.totalorder %v1622, 0
      %vm1719 = vcmp.lt.s32.totalorder %v1629, 0
      %vm1720 = vcmp.lt.s32.totalorder %v1636, 0
      %vm1721 = vcmp.lt.s32.totalorder %v1643, 0
      %vm1722 = vcmp.lt.s32.totalorder %v1650, 0
      %vm1723 = vmand %vm1687, %vm1651
      %vm1724 = vmand %vm1688, %vm1652
      %vm1725 = vmand %vm1689, %vm1653
      %vm1726 = vmand %vm1690, %vm1654
      %vm1727 = vmand %vm1691, %vm1655
      %vm1728 = vmand %vm1692, %vm1656
      %vm1729 = vmand %vm1693, %vm1657
      %vm1730 = vmand %vm1694, %vm1658
      %vm1731 = vmand %vm1695, %vm1659
      %vm1732 = vmand %vm1696, %vm1660
      %vm1733 = vmand %vm1697, %vm1661
      %vm1734 = vmand %vm1698, %vm1662
      %vm1735 = vmand %vm1699, %vm1663
      %vm1736 = vmand %vm1700, %vm1664
      %vm1737 = vmand %vm1701, %vm1665
      %vm1738 = vmand %vm1702, %vm1666
      %vm1739 = vmand %vm1703, %vm1667
      %vm1740 = vmand %vm1704, %vm1668
      %vm1741 = vmand %vm1705, %vm1669
      %vm1742 = vmand %vm1706, %vm1670
      %vm1743 = vmand %vm1707, %vm1671
      %vm1744 = vmand %vm1708, %vm1672
      %vm1745 = vmand %vm1709, %vm1673
      %vm1746 = vmand %vm1710, %vm1674
      %vm1747 = vmand %vm1711, %vm1675
      %vm1748 = vmand %vm1712, %vm1676
      %vm1749 = vmand %vm1713, %vm1677
      %vm1750 = vmand %vm1714, %vm1678
      %vm1751 = vmand %vm1715, %vm1679
      %vm1752 = vmand %vm1716, %vm1680
      %vm1753 = vmand %vm1717, %vm1681
      %vm1754 = vmand %vm1718, %vm1682
      %vm1755 = vmand %vm1719, %vm1683
      %vm1756 = vmand %vm1720, %vm1684
      %vm1757 = vmand %vm1721, %vm1685
      %vm1758 = vmand %vm1722, %vm1686
      %v1759 = vadd.s32 %v1405, 16
      %v1760 = vadd.s32 %v1412, 16
      %v1761 = vadd.s32 %v1419, 16
      %v1762 = vadd.s32 %v1426, 16
      %v1763 = vadd.s32 %v1433, 16
      %v1764 = vadd.s32 %v1440, 16
      %v1765 = vadd.s32 %v1447, 16
      %v1766 = vadd.s32 %v1454, 16
      %v1767 = vadd.s32 %v1461, 16
      %v1768 = vadd.s32 %v1468, 16
      %v1769 = vadd.s32 %v1475, 16
      %v1770 = vadd.s32 %v1482, 16
      %v1771 = vadd.s32 %v1489, 16
      %v1772 = vadd.s32 %v1496, 16
      %v1773 = vadd.s32 %v1503, 16
      %v1774 = vadd.s32 %v1510, 16
      %v1775 = vadd.s32 %v1517, 16
      %v1776 = vadd.s32 %v1524, 16
      %v1777 = vadd.s32 %v1531, 16
      %v1778 = vadd.s32 %v1538, 16
      %v1779 = vadd.s32 %v1545, 16
      %v1780 = vadd.s32 %v1552, 16
      %v1781 = vadd.s32 %v1559, 16
      %v1782 = vadd.s32 %v1566, 16
      %v1783 = vadd.s32 %v1573, 16
      %v1784 = vadd.s32 %v1580, 16
      %v1785 = vadd.s32 %v1587, 16
      %v1786 = vadd.s32 %v1594, 16
      %v1787 = vadd.s32 %v1601, 16
      %v1788 = vadd.s32 %v1608, 16
      %v1789 = vadd.s32 %v1615, 16
      %v1790 = vadd.s32 %v1622, 16
      %v1791 = vadd.s32 %v1629, 16
      %v1792 = vadd.s32 %v1636, 16
      %v1793 = vadd.s32 %v1643, 16
      %v1794 = vadd.s32 %v1650, 16
      %v1795 = vsel %vm1723, %v1759, %v1405
      %v1796 = vsel %vm1724, %v1760, %v1412
      %v1797 = vsel %vm1725, %v1761, %v1419
      %v1798 = vsel %vm1726, %v1762, %v1426
      %v1799 = vsel %vm1727, %v1763, %v1433
      %v1800 = vsel %vm1728, %v1764, %v1440
      %v1801 = vsel %vm1729, %v1765, %v1447
      %v1802 = vsel %vm1730, %v1766, %v1454
      %v1803 = vsel %vm1731, %v1767, %v1461
      %v1804 = vsel %vm1732, %v1768, %v1468
      %v1805 = vsel %vm1733, %v1769, %v1475
      %v1806 = vsel %vm1734, %v1770, %v1482
      %v1807 = vsel %vm1735, %v1771, %v1489
      %v1808 = vsel %vm1736, %v1772, %v1496
      %v1809 = vsel %vm1737, %v1773, %v1503
      %v1810 = vsel %vm1738, %v1774, %v1510
      %v1811 = vsel %vm1739, %v1775, %v1517
      %v1812 = vsel %vm1740, %v1776, %v1524
      %v1813 = vsel %vm1741, %v1777, %v1531
      %v1814 = vsel %vm1742, %v1778, %v1538
      %v1815 = vsel %vm1743, %v1779, %v1545
      %v1816 = vsel %vm1744, %v1780, %v1552
      %v1817 = vsel %vm1745, %v1781, %v1559
      %v1818 = vsel %vm1746, %v1782, %v1566
      %v1819 = vsel %vm1747, %v1783, %v1573
      %v1820 = vsel %vm1748, %v1784, %v1580
      %v1821 = vsel %vm1749, %v1785, %v1587
      %v1822 = vsel %vm1750, %v1786, %v1594
      %v1823 = vsel %vm1751, %v1787, %v1601
      %v1824 = vsel %vm1752, %v1788, %v1608
      %v1825 = vsel %vm1753, %v1789, %v1615
      %v1826 = vsel %vm1754, %v1790, %v1622
      %v1827 = vsel %vm1755, %v1791, %v1629
      %v1828 = vsel %vm1756, %v1792, %v1636
      %v1829 = vsel %vm1757, %v1793, %v1643
      %v1830 = vsel %vm1758, %v1794, %v1650
      %vm1831 = vcmp.eq.s32.totalorder %v1795, 0
      %vm1832 = vcmp.eq.s32.totalorder %v1796, 0
      %vm1833 = vcmp.eq.s32.totalorder %v1797, 0
      %vm1834 = vcmp.eq.s32.totalorder %v1798, 0
      %vm1835 = vcmp.eq.s32.totalorder %v1799, 0
      %vm1836 = vcmp.eq.s32.totalorder %v1800, 0
      %vm1837 = vcmp.eq.s32.totalorder %v1801, 0
      %vm1838 = vcmp.eq.s32.totalorder %v1802, 0
      %vm1839 = vcmp.eq.s32.totalorder %v1803, 0
      %vm1840 = vcmp.eq.s32.totalorder %v1804, 0
      %vm1841 = vcmp.eq.s32.totalorder %v1805, 0
      %vm1842 = vcmp.eq.s32.totalorder %v1806, 0
      %vm1843 = vcmp.eq.s32.totalorder %v1807, 0
      %vm1844 = vcmp.eq.s32.totalorder %v1808, 0
      %vm1845 = vcmp.eq.s32.totalorder %v1809, 0
      %vm1846 = vcmp.eq.s32.totalorder %v1810, 0
      %vm1847 = vcmp.eq.s32.totalorder %v1811, 0
      %vm1848 = vcmp.eq.s32.totalorder %v1812, 0
      %vm1849 = vcmp.eq.s32.totalorder %v1813, 0
      %vm1850 = vcmp.eq.s32.totalorder %v1814, 0
      %vm1851 = vcmp.eq.s32.totalorder %v1815, 0
      %vm1852 = vcmp.eq.s32.totalorder %v1816, 0
      %vm1853 = vcmp.eq.s32.totalorder %v1817, 0
      %vm1854 = vcmp.eq.s32.totalorder %v1818, 0
      %vm1855 = vcmp.eq.s32.totalorder %v1819, 0
      %vm1856 = vcmp.eq.s32.totalorder %v1820, 0
      %vm1857 = vcmp.eq.s32.totalorder %v1821, 0
      %vm1858 = vcmp.eq.s32.totalorder %v1822, 0
      %vm1859 = vcmp.eq.s32.totalorder %v1823, 0
      %vm1860 = vcmp.eq.s32.totalorder %v1824, 0
      %vm1861 = vcmp.eq.s32.totalorder %v1825, 0
      %vm1862 = vcmp.eq.s32.totalorder %v1826, 0
      %vm1863 = vcmp.eq.s32.totalorder %v1827, 0
      %vm1864 = vcmp.eq.s32.totalorder %v1828, 0
      %vm1865 = vcmp.eq.s32.totalorder %v1829, 0
      %vm1866 = vcmp.eq.s32.totalorder %v1830, 0
      %v1867 = vrot.slane %v1363, 7
      %v1868 = vrot.slane %v1364, 7
      %v1869 = vrot.slane %v1365, 7
      %v1870 = vrot.slane %v1366, 7
      %v1871 = vrot.slane %v1367, 7
      %v1872 = vrot.slane %v1368, 7
      %v1873 = vrot.slane %v1369, 7
      %v1874 = vrot.slane %v1370, 7
      %v1875 = vrot.slane %v1371, 7
      %v1876 = vrot.slane %v1372, 7
      %v1877 = vrot.slane %v1373, 7
      %v1878 = vrot.slane %v1374, 7
      %v1879 = vrot.slane %v1375, 7
      %v1880 = vrot.slane %v1376, 7
      %v1881 = vrot.slane %v1377, 7
      %v1882 = vrot.slane %v1378, 7
      %v1883 = vrot.slane %v1379, 7
      %v1884 = vrot.slane %v1380, 7
      %v1885 = vrot.slane %v1381, 7
      %v1886 = vrot.slane %v1382, 7
      %v1887 = vrot.slane %v1383, 7
      %v1888 = vrot.slane %v1384, 7
      %v1889 = vrot.slane %v1385, 7
      %v1890 = vrot.slane %v1386, 7
      %v1891 = vrot.slane %v1387, 7
      %v1892 = vrot.slane %v1388, 7
      %v1893 = vrot.slane %v1389, 7
      %v1894 = vrot.slane %v1390, 7
      %v1895 = vrot.slane %v1391, 7
      %v1896 = vrot.slane %v1392, 7
      %v1897 = vrot.slane %v1393, 7
      %v1898 = vrot.slane %v1394, 7
      %v1899 = vrot.slane %v1395, 7
      %v1900 = vrot.slane %v1396, 7
      %v1901 = vrot.slane %v1397, 7
      %v1902 = vrot.slane %v1398, 7
      %vm1903 = vcmp.lt.s32.totalorder %v1067, 1
      %v1904 = vsel %vm1903, %v1901, %v1902
      %v1905 = vsel %vm1903, %v1900, %v1901
      %v1906 = vsel %vm1903, %v1899, %v1900
      %v1907 = vsel %vm1903, %v1898, %v1899
      %v1908 = vsel %vm1903, %v1897, %v1898
      %v1909 = vsel %vm1903, %v1896, %v1897
      %v1910 = vsel %vm1903, %v1895, %v1896
      %v1911 = vsel %vm1903, %v1894, %v1895
      %v1912 = vsel %vm1903, %v1893, %v1894
      %v1913 = vsel %vm1903, %v1892, %v1893
      %v1914 = vsel %vm1903, %v1891, %v1892
      %v1915 = vsel %vm1903, %v1890, %v1891
      %v1916 = vsel %vm1903, %v1889, %v1890
      %v1917 = vsel %vm1903, %v1888, %v1889
      %v1918 = vsel %vm1903, %v1887, %v1888
      %v1919 = vsel %vm1903, %v1886, %v1887
      %v1920 = vsel %vm1903, %v1885, %v1886
      %v1921 = vsel %vm1903, %v1884, %v1885
      %v1922 = vsel %vm1903, %v1883, %v1884
      %v1923 = vsel %vm1903, %v1882, %v1883
      %v1924 = vsel %vm1903, %v1881, %v1882
      %v1925 = vsel %vm1903, %v1880, %v1881
      %v1926 = vsel %vm1903, %v1879, %v1880
      %v1927 = vsel %vm1903, %v1878, %v1879
      %v1928 = vsel %vm1903, %v1877, %v1878
      %v1929 = vsel %vm1903, %v1876, %v1877
      %v1930 = vsel %vm1903, %v1875, %v1876
      %v1931 = vsel %vm1903, %v1874, %v1875
      %v1932 = vsel %vm1903, %v1873, %v1874
      %v1933 = vsel %vm1903, %v1872, %v1873
      %v1934 = vsel %vm1903, %v1871, %v1872
      %v1935 = vsel %vm1903, %v1870, %v1871
      %v1936 = vsel %vm1903, %v1869, %v1870
      %v1937 = vsel %vm1903, %v1868, %v1869
      %v1938 = vsel %vm1903, %v1867, %v1868
      %v1939 = vsel %vm1903, %v1902, %v1867
      %v1940 = vsel %vm1831, 1, 0
      %v1941 = vsel %vm1832, 1, 0
      %v1942 = vsel %vm1833, 1, 0
      %v1943 = vsel %vm1834, 1, 0
      %v1944 = vsel %vm1835, 1, 0
      %v1945 = vsel %vm1836, 1, 0
      %v1946 = vsel %vm1837, 1, 0
      %v1947 = vsel %vm1838, 1, 0
      %v1948 = vsel %vm1839, 1, 0
      %v1949 = vsel %vm1840, 1, 0
      %v1950 = vsel %vm1841, 1, 0
      %v1951 = vsel %vm1842, 1, 0
      %v1952 = vsel %vm1843, 1, 0
      %v1953 = vsel %vm1844, 1, 0
      %v1954 = vsel %vm1845, 1, 0
      %v1955 = vsel %vm1846, 1, 0
      %v1956 = vsel %vm1847, 1, 0
      %v1957 = vsel %vm1848, 1, 0
      %v1958 = vsel %vm1849, 1, 0
      %v1959 = vsel %vm1850, 1, 0
      %v1960 = vsel %vm1851, 1, 0
      %v1961 = vsel %vm1852, 1, 0
      %v1962 = vsel %vm1853, 1, 0
      %v1963 = vsel %vm1854, 1, 0
      %v1964 = vsel %vm1855, 1, 0
      %v1965 = vsel %vm1856, 1, 0
      %v1966 = vsel %vm1857, 1, 0
      %v1967 = vsel %vm1858, 1, 0
      %v1968 = vsel %vm1859, 1, 0
      %v1969 = vsel %vm1860, 1, 0
      %v1970 = vsel %vm1861, 1, 0
      %v1971 = vsel %vm1862, 1, 0
      %v1972 = vsel %vm1863, 1, 0
      %v1973 = vsel %vm1864, 1, 0
      %v1974 = vsel %vm1865, 1, 0
      %v1975 = vsel %vm1866, 1, 0
      %vm1976 = vcmp.eq.s32.totalorder %v1940, 1
      %vm1977 = vcmp.eq.s32.totalorder %v1941, 1
      %vm1978 = vcmp.eq.s32.totalorder %v1942, 1
      %vm1979 = vcmp.eq.s32.totalorder %v1943, 1
      %vm1980 = vcmp.eq.s32.totalorder %v1944, 1
      %vm1981 = vcmp.eq.s32.totalorder %v1945, 1
      %vm1982 = vcmp.eq.s32.totalorder %v1946, 1
      %vm1983 = vcmp.eq.s32.totalorder %v1947, 1
      %vm1984 = vcmp.eq.s32.totalorder %v1948, 1
      %vm1985 = vcmp.eq.s32.totalorder %v1949, 1
      %vm1986 = vcmp.eq.s32.totalorder %v1950, 1
      %vm1987 = vcmp.eq.s32.totalorder %v1951, 1
      %vm1988 = vcmp.eq.s32.totalorder %v1952, 1
      %vm1989 = vcmp.eq.s32.totalorder %v1953, 1
      %vm1990 = vcmp.eq.s32.totalorder %v1954, 1
      %vm1991 = vcmp.eq.s32.totalorder %v1955, 1
      %vm1992 = vcmp.eq.s32.totalorder %v1956, 1
      %vm1993 = vcmp.eq.s32.totalorder %v1957, 1
      %vm1994 = vcmp.eq.s32.totalorder %v1958, 1
      %vm1995 = vcmp.eq.s32.totalorder %v1959, 1
      %vm1996 = vcmp.eq.s32.totalorder %v1960, 1
      %vm1997 = vcmp.eq.s32.totalorder %v1961, 1
      %vm1998 = vcmp.eq.s32.totalorder %v1962, 1
      %vm1999 = vcmp.eq.s32.totalorder %v1963, 1
      %vm2000 = vcmp.eq.s32.totalorder %v1964, 1
      %vm2001 = vcmp.eq.s32.totalorder %v1965, 1
      %vm2002 = vcmp.eq.s32.totalorder %v1966, 1
      %vm2003 = vcmp.eq.s32.totalorder %v1967, 1
      %vm2004 = vcmp.eq.s32.totalorder %v1968, 1
      %vm2005 = vcmp.eq.s32.totalorder %v1969, 1
      %vm2006 = vcmp.eq.s32.totalorder %v1970, 1
      %vm2007 = vcmp.eq.s32.totalorder %v1971, 1
      %vm2008 = vcmp.eq.s32.totalorder %v1972, 1
      %vm2009 = vcmp.eq.s32.totalorder %v1973, 1
      %vm2010 = vcmp.eq.s32.totalorder %v1974, 1
      %vm2011 = vcmp.eq.s32.totalorder %v1975, 1
      %v2012 = vsel %vm1976, 0.0, %v1939
      %v2013 = vsel %vm1977, 0.0, %v1938
      %v2014 = vsel %vm1978, 0.0, %v1937
      %v2015 = vsel %vm1979, 0.0, %v1936
      %v2016 = vsel %vm1980, 0.0, %v1935
      %v2017 = vsel %vm1981, 0.0, %v1934
      %v2018 = vsel %vm1982, 0.0, %v1933
      %v2019 = vsel %vm1983, 0.0, %v1932
      %v2020 = vsel %vm1984, 0.0, %v1931
      %v2021 = vsel %vm1985, 0.0, %v1930
      %v2022 = vsel %vm1986, 0.0, %v1929
      %v2023 = vsel %vm1987, 0.0, %v1928
      %v2024 = vsel %vm1988, 0.0, %v1927
      %v2025 = vsel %vm1989, 0.0, %v1926
      %v2026 = vsel %vm1990, 0.0, %v1925
      %v2027 = vsel %vm1991, 0.0, %v1924
      %v2028 = vsel %vm1992, 0.0, %v1923
      %v2029 = vsel %vm1993, 0.0, %v1922
      %v2030 = vsel %vm1994, 0.0, %v1921
      %v2031 = vsel %vm1995, 0.0, %v1920
      %v2032 = vsel %vm1996, 0.0, %v1919
      %v2033 = vsel %vm1997, 0.0, %v1918
      %v2034 = vsel %vm1998, 0.0, %v1917
      %v2035 = vsel %vm1999, 0.0, %v1916
      %v2036 = vsel %vm2000, 0.0, %v1915
      %v2037 = vsel %vm2001, 0.0, %v1914
      %v2038 = vsel %vm2002, 0.0, %v1913
      %v2039 = vsel %vm2003, 0.0, %v1912
      %v2040 = vsel %vm2004, 0.0, %v1911
      %v2041 = vsel %vm2005, 0.0, %v1910
      %v2042 = vsel %vm2006, 0.0, %v1909
      %v2043 = vsel %vm2007, 0.0, %v1908
      %v2044 = vsel %vm2008, 0.0, %v1907
      %v2045 = vsel %vm2009, 0.0, %v1906
      %v2046 = vsel %vm2010, 0.0, %v1905
      %v2047 = vsel %vm2011, 0.0, %v1904
      %vm2048 = vcmp.eq.s32.totalorder %v1795, 15
      %vm2049 = vcmp.eq.s32.totalorder %v1796, 15
      %vm2050 = vcmp.eq.s32.totalorder %v1797, 15
      %vm2051 = vcmp.eq.s32.totalorder %v1798, 15
      %vm2052 = vcmp.eq.s32.totalorder %v1799, 15
      %vm2053 = vcmp.eq.s32.totalorder %v1800, 15
      %vm2054 = vcmp.eq.s32.totalorder %v1801, 15
      %vm2055 = vcmp.eq.s32.totalorder %v1802, 15
      %vm2056 = vcmp.eq.s32.totalorder %v1803, 15
      %vm2057 = vcmp.eq.s32.totalorder %v1804, 15
      %vm2058 = vcmp.eq.s32.totalorder %v1805, 15
      %vm2059 = vcmp.eq.s32.totalorder %v1806, 15
      %vm2060 = vcmp.eq.s32.totalorder %v1807, 15
      %vm2061 = vcmp.eq.s32.totalorder %v1808, 15
      %vm2062 = vcmp.eq.s32.totalorder %v1809, 15
      %vm2063 = vcmp.eq.s32.totalorder %v1810, 15
      %vm2064 = vcmp.eq.s32.totalorder %v1811, 15
      %vm2065 = vcmp.eq.s32.totalorder %v1812, 15
      %vm2066 = vcmp.eq.s32.totalorder %v1813, 15
      %vm2067 = vcmp.eq.s32.totalorder %v1814, 15
      %vm2068 = vcmp.eq.s32.totalorder %v1815, 15
      %vm2069 = vcmp.eq.s32.totalorder %v1816, 15
      %vm2070 = vcmp.eq.s32.totalorder %v1817, 15
      %vm2071 = vcmp.eq.s32.totalorder %v1818, 15
      %vm2072 = vcmp.eq.s32.totalorder %v1819, 15
      %vm2073 = vcmp.eq.s32.totalorder %v1820, 15
      %vm2074 = vcmp.eq.s32.totalorder %v1821, 15
      %vm2075 = vcmp.eq.s32.totalorder %v1822, 15
      %vm2076 = vcmp.eq.s32.totalorder %v1823, 15
      %vm2077 = vcmp.eq.s32.totalorder %v1824, 15
      %vm2078 = vcmp.eq.s32.totalorder %v1825, 15
      %vm2079 = vcmp.eq.s32.totalorder %v1826, 15
      %vm2080 = vcmp.eq.s32.totalorder %v1827, 15
      %vm2081 = vcmp.eq.s32.totalorder %v1828, 15
      %vm2082 = vcmp.eq.s32.totalorder %v1829, 15
      %vm2083 = vcmp.eq.s32.totalorder %v1830, 15
      %v2084 = vrot.slane %v1363, 1
      %v2085 = vrot.slane %v1364, 1
      %v2086 = vrot.slane %v1365, 1
      %v2087 = vrot.slane %v1366, 1
      %v2088 = vrot.slane %v1367, 1
      %v2089 = vrot.slane %v1368, 1
      %v2090 = vrot.slane %v1369, 1
      %v2091 = vrot.slane %v1370, 1
      %v2092 = vrot.slane %v1371, 1
      %v2093 = vrot.slane %v1372, 1
      %v2094 = vrot.slane %v1373, 1
      %v2095 = vrot.slane %v1374, 1
      %v2096 = vrot.slane %v1375, 1
      %v2097 = vrot.slane %v1376, 1
      %v2098 = vrot.slane %v1377, 1
      %v2099 = vrot.slane %v1378, 1
      %v2100 = vrot.slane %v1379, 1
      %v2101 = vrot.slane %v1380, 1
      %v2102 = vrot.slane %v1381, 1
      %v2103 = vrot.slane %v1382, 1
      %v2104 = vrot.slane %v1383, 1
      %v2105 = vrot.slane %v1384, 1
      %v2106 = vrot.slane %v1385, 1
      %v2107 = vrot.slane %v1386, 1
      %v2108 = vrot.slane %v1387, 1
      %v2109 = vrot.slane %v1388, 1
      %v2110 = vrot.slane %v1389, 1
      %v2111 = vrot.slane %v1390, 1
      %v2112 = vrot.slane %v1391, 1
      %v2113 = vrot.slane %v1392, 1
      %v2114 = vrot.slane %v1393, 1
      %v2115 = vrot.slane %v1394, 1
      %v2116 = vrot.slane %v1395, 1
      %v2117 = vrot.slane %v1396, 1
      %v2118 = vrot.slane %v1397, 1
      %v2119 = vrot.slane %v1398, 1
      %vm2120 = vcmp.lt.s32.totalorder %v1067, 7
      %v2121 = vsel %vm2120, %v2118, %v2119
      %v2122 = vsel %vm2120, %v2117, %v2118
      %v2123 = vsel %vm2120, %v2116, %v2117
      %v2124 = vsel %vm2120, %v2115, %v2116
      %v2125 = vsel %vm2120, %v2114, %v2115
      %v2126 = vsel %vm2120, %v2113, %v2114
      %v2127 = vsel %vm2120, %v2112, %v2113
      %v2128 = vsel %vm2120, %v2111, %v2112
      %v2129 = vsel %vm2120, %v2110, %v2111
      %v2130 = vsel %vm2120, %v2109, %v2110
      %v2131 = vsel %vm2120, %v2108, %v2109
      %v2132 = vsel %vm2120, %v2107, %v2108
      %v2133 = vsel %vm2120, %v2106, %v2107
      %v2134 = vsel %vm2120, %v2105, %v2106
      %v2135 = vsel %vm2120, %v2104, %v2105
      %v2136 = vsel %vm2120, %v2103, %v2104
      %v2137 = vsel %vm2120, %v2102, %v2103
      %v2138 = vsel %vm2120, %v2101, %v2102
      %v2139 = vsel %vm2120, %v2100, %v2101
      %v2140 = vsel %vm2120, %v2099, %v2100
      %v2141 = vsel %vm2120, %v2098, %v2099
      %v2142 = vsel %vm2120, %v2097, %v2098
      %v2143 = vsel %vm2120, %v2096, %v2097
      %v2144 = vsel %vm2120, %v2095, %v2096
      %v2145 = vsel %vm2120, %v2094, %v2095
      %v2146 = vsel %vm2120, %v2093, %v2094
      %v2147 = vsel %vm2120, %v2092, %v2093
      %v2148 = vsel %vm2120, %v2091, %v2092
      %v2149 = vsel %vm2120, %v2090, %v2091
      %v2150 = vsel %vm2120, %v2089, %v2090
      %v2151 = vsel %vm2120, %v2088, %v2089
      %v2152 = vsel %vm2120, %v2087, %v2088
      %v2153 = vsel %vm2120, %v2086, %v2087
      %v2154 = vsel %vm2120, %v2085, %v2086
      %v2155 = vsel %vm2120, %v2084, %v2085
      %v2156 = vsel %vm2120, %v2119, %v2084
      %v2157 = vsel %vm2048, 1, 0
      %v2158 = vsel %vm2049, 1, 0
      %v2159 = vsel %vm2050, 1, 0
      %v2160 = vsel %vm2051, 1, 0
      %v2161 = vsel %vm2052, 1, 0
      %v2162 = vsel %vm2053, 1, 0
      %v2163 = vsel %vm2054, 1, 0
      %v2164 = vsel %vm2055, 1, 0
      %v2165 = vsel %vm2056, 1, 0
      %v2166 = vsel %vm2057, 1, 0
      %v2167 = vsel %vm2058, 1, 0
      %v2168 = vsel %vm2059, 1, 0
      %v2169 = vsel %vm2060, 1, 0
      %v2170 = vsel %vm2061, 1, 0
      %v2171 = vsel %vm2062, 1, 0
      %v2172 = vsel %vm2063, 1, 0
      %v2173 = vsel %vm2064, 1, 0
      %v2174 = vsel %vm2065, 1, 0
      %v2175 = vsel %vm2066, 1, 0
      %v2176 = vsel %vm2067, 1, 0
      %v2177 = vsel %vm2068, 1, 0
      %v2178 = vsel %vm2069, 1, 0
      %v2179 = vsel %vm2070, 1, 0
      %v2180 = vsel %vm2071, 1, 0
      %v2181 = vsel %vm2072, 1, 0
      %v2182 = vsel %vm2073, 1, 0
      %v2183 = vsel %vm2074, 1, 0
      %v2184 = vsel %vm2075, 1, 0
      %v2185 = vsel %vm2076, 1, 0
      %v2186 = vsel %vm2077, 1, 0
      %v2187 = vsel %vm2078, 1, 0
      %v2188 = vsel %vm2079, 1, 0
      %v2189 = vsel %vm2080, 1, 0
      %v2190 = vsel %vm2081, 1, 0
      %v2191 = vsel %vm2082, 1, 0
      %v2192 = vsel %vm2083, 1, 0
      %vm2193 = vcmp.eq.s32.totalorder %v2157, 1
      %vm2194 = vcmp.eq.s32.totalorder %v2158, 1
      %vm2195 = vcmp.eq.s32.totalorder %v2159, 1
      %vm2196 = vcmp.eq.s32.totalorder %v2160, 1
      %vm2197 = vcmp.eq.s32.totalorder %v2161, 1
      %vm2198 = vcmp.eq.s32.totalorder %v2162, 1
      %vm2199 = vcmp.eq.s32.totalorder %v2163, 1
      %vm2200 = vcmp.eq.s32.totalorder %v2164, 1
      %vm2201 = vcmp.eq.s32.totalorder %v2165, 1
      %vm2202 = vcmp.eq.s32.totalorder %v2166, 1
      %vm2203 = vcmp.eq.s32.totalorder %v2167, 1
      %vm2204 = vcmp.eq.s32.totalorder %v2168, 1
      %vm2205 = vcmp.eq.s32.totalorder %v2169, 1
      %vm2206 = vcmp.eq.s32.totalorder %v2170, 1
      %vm2207 = vcmp.eq.s32.totalorder %v2171, 1
      %vm2208 = vcmp.eq.s32.totalorder %v2172, 1
      %vm2209 = vcmp.eq.s32.totalorder %v2173, 1
      %vm2210 = vcmp.eq.s32.totalorder %v2174, 1
      %vm2211 = vcmp.eq.s32.totalorder %v2175, 1
      %vm2212 = vcmp.eq.s32.totalorder %v2176, 1
      %vm2213 = vcmp.eq.s32.totalorder %v2177, 1
      %vm2214 = vcmp.eq.s32.totalorder %v2178, 1
      %vm2215 = vcmp.eq.s32.totalorder %v2179, 1
      %vm2216 = vcmp.eq.s32.totalorder %v2180, 1
      %vm2217 = vcmp.eq.s32.totalorder %v2181, 1
      %vm2218 = vcmp.eq.s32.totalorder %v2182, 1
      %vm2219 = vcmp.eq.s32.totalorder %v2183, 1
      %vm2220 = vcmp.eq.s32.totalorder %v2184, 1
      %vm2221 = vcmp.eq.s32.totalorder %v2185, 1
      %vm2222 = vcmp.eq.s32.totalorder %v2186, 1
      %vm2223 = vcmp.eq.s32.totalorder %v2187, 1
      %vm2224 = vcmp.eq.s32.totalorder %v2188, 1
      %vm2225 = vcmp.eq.s32.totalorder %v2189, 1
      %vm2226 = vcmp.eq.s32.totalorder %v2190, 1
      %vm2227 = vcmp.eq.s32.totalorder %v2191, 1
      %vm2228 = vcmp.eq.s32.totalorder %v2192, 1
      %v2229 = vsel %vm2193, 0.0, %v2155
      %v2230 = vsel %vm2194, 0.0, %v2154
      %v2231 = vsel %vm2195, 0.0, %v2153
      %v2232 = vsel %vm2196, 0.0, %v2152
      %v2233 = vsel %vm2197, 0.0, %v2151
      %v2234 = vsel %vm2198, 0.0, %v2150
      %v2235 = vsel %vm2199, 0.0, %v2149
      %v2236 = vsel %vm2200, 0.0, %v2148
      %v2237 = vsel %vm2201, 0.0, %v2147
      %v2238 = vsel %vm2202, 0.0, %v2146
      %v2239 = vsel %vm2203, 0.0, %v2145
      %v2240 = vsel %vm2204, 0.0, %v2144
      %v2241 = vsel %vm2205, 0.0, %v2143
      %v2242 = vsel %vm2206, 0.0, %v2142
      %v2243 = vsel %vm2207, 0.0, %v2141
      %v2244 = vsel %vm2208, 0.0, %v2140
      %v2245 = vsel %vm2209, 0.0, %v2139
      %v2246 = vsel %vm2210, 0.0, %v2138
      %v2247 = vsel %vm2211, 0.0, %v2137
      %v2248 = vsel %vm2212, 0.0, %v2136
      %v2249 = vsel %vm2213, 0.0, %v2135
      %v2250 = vsel %vm2214, 0.0, %v2134
      %v2251 = vsel %vm2215, 0.0, %v2133
      %v2252 = vsel %vm2216, 0.0, %v2132
      %v2253 = vsel %vm2217, 0.0, %v2131
      %v2254 = vsel %vm2218, 0.0, %v2130
      %v2255 = vsel %vm2219, 0.0, %v2129
      %v2256 = vsel %vm2220, 0.0, %v2128
      %v2257 = vsel %vm2221, 0.0, %v2127
      %v2258 = vsel %vm2222, 0.0, %v2126
      %v2259 = vsel %vm2223, 0.0, %v2125
      %v2260 = vsel %vm2224, 0.0, %v2124
      %v2261 = vsel %vm2225, 0.0, %v2123
      %v2262 = vsel %vm2226, 0.0, %v2122
      %v2263 = vsel %vm2227, 0.0, %v2121
      %v2264 = vsel %vm2228, 0.0, %v2156
      %v2265 = vld [vmem:[%s5] sm:$0xff]
      %v2266 = vld [vmem:[%s5 + $0x8] sm:$0xff]
      %v2267 = vld [vmem:[%s5 + $0x10] sm:$0xff]
      %v2268 = vld [vmem:[%s5 + $0x18] sm:$0xff]
      %v2269 = vld [vmem:[%s5 + $0x20] sm:$0xff]
      %v2270 = vld [vmem:[%s5 + $0x28] sm:$0xff]
      %v2271 = vld [vmem:[%s5 + $0x30] sm:$0xff]
      %v2272 = vld [vmem:[%s5 + $0x38] sm:$0xff]
      %v2273 = vld [vmem:[%s5 + $0x40] sm:$0xff]
      %v2274 = vld [vmem:[%s5 + $0x48] sm:$0xff]
      %v2275 = vld [vmem:[%s5 + $0x50] sm:$0xff]
      %v2276 = vld [vmem:[%s5 + $0x58] sm:$0xff]
      %v2277 = vld [vmem:[%s5 + $0x60] sm:$0xff]
      %v2278 = vld [vmem:[%s5 + $0x68] sm:$0xff]
      %v2279 = vld [vmem:[%s5 + $0x70] sm:$0xff]
      %v2280 = vld [vmem:[%s5 + $0x78] sm:$0xff]
      %v2281 = vld [vmem:[%s5 + $0x80] sm:$0xff]
      %v2282 = vld [vmem:[%s5 + $0x88] sm:$0xff]
      %v2283 = vld [vmem:[%s5 + $0x90] sm:$0xff]
      %v2284 = vld [vmem:[%s5 + $0x98] sm:$0xff]
      %v2285 = vld [vmem:[%s5 + $0xa0] sm:$0xff]
      %v2286 = vld [vmem:[%s5 + $0xa8] sm:$0xff]
      %v2287 = vld [vmem:[%s5 + $0xb0] sm:$0xff]
      %v2288 = vld [vmem:[%s5 + $0xb8] sm:$0xff]
      %v2289 = vld [vmem:[%s5 + $0xc0] sm:$0xff]
      %v2290 = vld [vmem:[%s5 + $0xc8] sm:$0xff]
      %v2291 = vld [vmem:[%s5 + $0xd0] sm:$0xff]
      %v2292 = vld [vmem:[%s5 + $0xd8] sm:$0xff]
      %v2293 = vld [vmem:[%s5 + $0xe0] sm:$0xff]
      %v2294 = vld [vmem:[%s5 + $0xe8] sm:$0xff]
      %v2295 = vld [vmem:[%s5 + $0xf0] sm:$0xff]
      %v2296 = vld [vmem:[%s5 + $0xf8] sm:$0xff]
      %v2297 = vld [vmem:[%s5 + $0x100] sm:$0xff]
      %v2298 = vld [vmem:[%s5 + $0x108] sm:$0xff]
      %v2299 = vld [vmem:[%s5 + $0x110] sm:$0xff]
      %v2300 = vld [vmem:[%s5 + $0x118] sm:$0xff]
      %v2301 = vld [vmem:[%s5 + $0x120] sm:$0xff]
      %v2302 = vld [vmem:[%s5 + $0x128] sm:$0xff]
      %v2303 = vld [vmem:[%s5 + $0x130] sm:$0xff]
      %v2304 = vld [vmem:[%s5 + $0x138] sm:$0xff]
      %v2305 = vld [vmem:[%s5 + $0x140] sm:$0xff]
      %v2306 = vld [vmem:[%s5 + $0x148] sm:$0xff]
      %v2307 = vld [vmem:[%s5 + $0x150] sm:$0xff]
      %v2308 = vld [vmem:[%s5 + $0x158] sm:$0xff]
      %v2309 = vld [vmem:[%s5 + $0x160] sm:$0xff]
      %v2310 = vld [vmem:[%s5 + $0x168] sm:$0xff]
      %v2311 = vld [vmem:[%s5 + $0x170] sm:$0xff]
      %v2312 = vld [vmem:[%s5 + $0x178] sm:$0xff]
      %s2313 = scalar_lea.vmem %s5, 384
      %v2314 = vld [vmem:[%s2313] sm:$0xff]
      %v2315 = vld [vmem:[%s2313 + $0x8] sm:$0xff]
      %v2316 = vld [vmem:[%s2313 + $0x10] sm:$0xff]
      %v2317 = vld [vmem:[%s2313 + $0x18] sm:$0xff]
      %v2318 = vld [vmem:[%s2313 + $0x20] sm:$0xff]
      %v2319 = vld [vmem:[%s2313 + $0x28] sm:$0xff]
      %v2320 = vld [vmem:[%s2313 + $0x30] sm:$0xff]
      %v2321 = vld [vmem:[%s2313 + $0x38] sm:$0xff]
      %v2322 = vld [vmem:[%s2313 + $0x40] sm:$0xff]
      %v2323 = vld [vmem:[%s2313 + $0x48] sm:$0xff]
      %v2324 = vld [vmem:[%s2313 + $0x50] sm:$0xff]
      %v2325 = vld [vmem:[%s2313 + $0x58] sm:$0xff]
      %v2326 = vld [vmem:[%s2313 + $0x60] sm:$0xff]
      %v2327 = vld [vmem:[%s2313 + $0x68] sm:$0xff]
      %v2328 = vld [vmem:[%s2313 + $0x70] sm:$0xff]
      %v2329 = vld [vmem:[%s2313 + $0x78] sm:$0xff]
      %v2330 = vld [vmem:[%s2313 + $0x80] sm:$0xff]
      %v2331 = vld [vmem:[%s2313 + $0x88] sm:$0xff]
      %v2332 = vld [vmem:[%s2313 + $0x90] sm:$0xff]
      %v2333 = vld [vmem:[%s2313 + $0x98] sm:$0xff]
      %v2334 = vld [vmem:[%s2313 + $0xa0] sm:$0xff]
      %v2335 = vld [vmem:[%s2313 + $0xa8] sm:$0xff]
      %v2336 = vld [vmem:[%s2313 + $0xb0] sm:$0xff]
      %v2337 = vld [vmem:[%s2313 + $0xb8] sm:$0xff]
      %v2338 = vld [vmem:[%s2313 + $0xc0] sm:$0xff]
      %v2339 = vld [vmem:[%s2313 + $0xc8] sm:$0xff]
      %v2340 = vld [vmem:[%s2313 + $0xd0] sm:$0xff]
      %v2341 = vld [vmem:[%s2313 + $0xd8] sm:$0xff]
      %v2342 = vld [vmem:[%s2313 + $0xe0] sm:$0xff]
      %v2343 = vld [vmem:[%s2313 + $0xe8] sm:$0xff]
      %v2344 = vld [vmem:[%s2313 + $0xf0] sm:$0xff]
      %v2345 = vld [vmem:[%s2313 + $0xf8] sm:$0xff]
      %v2346 = vld [vmem:[%s2313 + $0x100] sm:$0xff]
      %v2347 = vld [vmem:[%s2313 + $0x108] sm:$0xff]
      %v2348 = vld [vmem:[%s2313 + $0x110] sm:$0xff]
      %v2349 = vld [vmem:[%s2313 + $0x118] sm:$0xff]
      %v2350 = vld [vmem:[%s2313 + $0x120] sm:$0xff]
      %v2351 = vld [vmem:[%s2313 + $0x128] sm:$0xff]
      %v2352 = vld [vmem:[%s2313 + $0x130] sm:$0xff]
      %v2353 = vld [vmem:[%s2313 + $0x138] sm:$0xff]
      %v2354 = vld [vmem:[%s2313 + $0x140] sm:$0xff]
      %v2355 = vld [vmem:[%s2313 + $0x148] sm:$0xff]
      %v2356 = vld [vmem:[%s2313 + $0x150] sm:$0xff]
      %v2357 = vld [vmem:[%s2313 + $0x158] sm:$0xff]
      %v2358 = vld [vmem:[%s2313 + $0x160] sm:$0xff]
      %v2359 = vld [vmem:[%s2313 + $0x168] sm:$0xff]
      %v2360 = vld [vmem:[%s2313 + $0x170] sm:$0xff]
      %v2361 = vld [vmem:[%s2313 + $0x178] sm:$0xff]
      %2362 = vmatprep.subr.mxu0 0.0
      %2363 = vmatpush1.msra.mxu0 %v2314
      %2364 = vmatprep.subr.mxu0 0.0
      %2365 = vmatpush1.msra.mxu0 %v2315
      %2366 = vmatprep.subr.mxu0 0.0
      %2367 = vmatpush1.msra.mxu0 %v2316
      %2368 = vmatprep.subr.mxu0 0.0
      %2369 = vmatpush1.msra.mxu0 %v2317
      %2370 = vmatprep.subr.mxu0 0.0
      %2371 = vmatpush1.msra.mxu0 %v2318
      %2372 = vmatprep.subr.mxu0 0.0
      %2373 = vmatpush1.msra.mxu0 %v2319
      %2374 = vmatprep.subr.mxu0 0.0
      %2375 = vmatpush1.msra.mxu0 %v2320
      %2376 = vmatprep.subr.mxu0 0.0
      %2377 = vmatpush1.msra.mxu0 %v2321
      %2378 = vmatprep.subr.mxu0 0.0
      %2379 = vmatpush1.msra.mxu0 %v2322
      %2380 = vmatprep.subr.mxu0 0.0
      %2381 = vmatpush1.msra.mxu0 %v2323
      %2382 = vmatprep.subr.mxu0 0.0
      %2383 = vmatpush1.msra.mxu0 %v2324
      %2384 = vmatprep.subr.mxu0 0.0
      %2385 = vmatpush1.msra.mxu0 %v2325
      %2386 = vmatprep.subr.mxu0 0.0
      %2387 = vmatpush1.msra.mxu0 %v2326
      %2388 = vmatprep.subr.mxu0 0.0
      %2389 = vmatpush1.msra.mxu0 %v2327
      %2390 = vmatprep.subr.mxu0 0.0
      %2391 = vmatpush1.msra.mxu0 %v2328
      %2392 = vmatprep.subr.mxu0 0.0
      %2393 = vmatpush1.msra.mxu0 %v2329
      %2394 = vmatprep.subr.mxu0 0.0
      %2395 = vmatpush1.msra.mxu0 %v2330
      %2396 = vmatprep.subr.mxu0 0.0
      %2397 = vmatpush1.msra.mxu0 %v2331
      %2398 = vmatprep.subr.mxu0 0.0
      %2399 = vmatpush1.msra.mxu0 %v2332
      %2400 = vmatprep.subr.mxu0 0.0
      %2401 = vmatpush1.msra.mxu0 %v2333
      %2402 = vmatprep.subr.mxu0 0.0
      %2403 = vmatpush1.msra.mxu0 %v2334
      %2404 = vmatprep.subr.mxu0 0.0
      %2405 = vmatpush1.msra.mxu0 %v2335
      %2406 = vmatprep.subr.mxu0 0.0
      %2407 = vmatpush1.msra.mxu0 %v2336
      %2408 = vmatprep.subr.mxu0 0.0
      %2409 = vmatpush1.msra.mxu0 %v2337
      %2410 = vmatprep.subr.mxu0 0.0
      %2411 = vmatpush1.msra.mxu0 %v2338
      %2412 = vmatprep.subr.mxu0 0.0
      %2413 = vmatpush1.msra.mxu0 %v2339
      %2414 = vmatprep.subr.mxu0 0.0
      %2415 = vmatpush1.msra.mxu0 %v2340
      %2416 = vmatprep.subr.mxu0 0.0
      %2417 = vmatpush1.msra.mxu0 %v2341
      %2418 = vmatprep.subr.mxu0 0.0
      %2419 = vmatpush1.msra.mxu0 %v2342
      %2420 = vmatprep.subr.mxu0 0.0
      %2421 = vmatpush1.msra.mxu0 %v2343
      %2422 = vmatprep.subr.mxu0 0.0
      %2423 = vmatpush1.msra.mxu0 %v2344
      %2424 = vmatprep.subr.mxu0 0.0
      %2425 = vmatpush1.msra.mxu0 %v2345
      %2426 = vmatprep.mubr.f32.mxu0 %v1365
      %2427 = vmatmul.mubr.f32.gmra.mrb[0].mxu0 %v2014
      %v2428 = vpop.f32.mrb[0].mxu0
      %v2429 = vadd.f32 0.0, %v2428
      %v2430 = vpop.f32.mrb[0].mxu0
      %2431 = vmatprep.mubr.f32.mxu0 %v1366
      %2432 = vmatmul.mubr.f32.gmra.mrb[0].mxu0 %v2015
      %v2433 = vpop.f32.mrb[0].mxu0
      %v2434 = vadd.f32 0.0, %v2433
      %v2435 = vpop.f32.mrb[0].mxu0
      %2436 = vmatprep.mubr.f32.mxu0 %v1367
      %2437 = vmatmul.mubr.f32.gmra.mrb[0].mxu0 %v2016
      %v2438 = vpop.f32.mrb[0].mxu0
      %v2439 = vadd.f32 0.0, %v2438
      %v2440 = vpop.f32.mrb[0].mxu0
      %2441 = vmatprep.mubr.f32.mxu0 %v1368
      %2442 = vmatmul.mubr.f32.gmra.mrb[0].mxu0 %v2017
      %v2443 = vpop.f32.mrb[0].mxu0
      %v2444 = vadd.f32 0.0, %v2443
      %v2445 = vpop.f32.mrb[0].mxu0
      %2446 = vmatprep.mubr.f32.mxu0 %v1369
      %2447 = vmatmul.mubr.f32.gmra.mrb[0].mxu0 %v2018
      %v2448 = vpop.f32.mrb[0].mxu0
      %v2449 = vadd.f32 0.0, %v2448
      %v2450 = vpop.f32.mrb[0].mxu0
      %2451 = vmatprep.mubr.f32.mxu0 %v1370
      %2452 = vmatmul.mubr.f32.gmra.mrb[0].mxu0 %v2019
      %v2453 = vpop.f32.mrb[0].mxu0
      %v2454 = vadd.f32 0.0, %v2453
      %v2455 = vpop.f32.mrb[0].mxu0
      %2456 = vmatprep.mubr.f32.mxu0 %v1371
      %2457 = vmatmul.mubr.f32.gmra.mrb[0].mxu0 %v2020
      %v2458 = vpop.f32.mrb[0].mxu0
      %v2459 = vadd.f32 0.0, %v2458
      %v2460 = vpop.f32.mrb[0].mxu0
      %2461 = vmatprep.mubr.f32.mxu0 %v1372
      %2462 = vmatmul.mubr.f32.gmra.mrb[0].mxu0 %v2021
      %v2463 = vpop.f32.mrb[0].mxu0
      %v2464 = vadd.f32 0.0, %v2463
      %v2465 = vpop.f32.mrb[0].mxu0
      %2466 = vmatprep.mubr.f32.mxu0 %v1373
      %2467 = vmatmul.mubr.f32.gmra.mrb[0].mxu0 %v2022
      %v2468 = vpop.f32.mrb[0].mxu0
      %v2469 = vadd.f32 0.0, %v2468
      %v2470 = vpop.f32.mrb[0].mxu0
      %2471 = vmatprep.mubr.f32.mxu0 %v1374
      %2472 = vmatmul.mubr.f32.gmra.mrb[0].mxu0 %v2023
      %v2473 = vpop.f32.mrb[0].mxu0
      %v2474 = vadd.f32 0.0, %v2473
      %v2475 = vpop.f32.mrb[0].mxu0
      %2476 = vmatprep.mubr.f32.mxu0 %v1375
      %2477 = vmatmul.mubr.f32.gmra.mrb[0].mxu0 %v2024
      %v2478 = vpop.f32.mrb[0].mxu0
      %v2479 = vadd.f32 0.0, %v2478
      %v2480 = vpop.f32.mrb[0].mxu0
      %2481 = vmatprep.mubr.f32.mxu0 %v1376
      %2482 = vmatmul.mubr.f32.gmra.mrb[0].mxu0 %v2025
      %v2483 = vpop.f32.mrb[0].mxu0
      %v2484 = vadd.f32 0.0, %v2483
      %v2485 = vpop.f32.mrb[0].mxu0
      %2486 = vmatprep.mubr.f32.mxu0 %v1377
      %2487 = vmatmul.mubr.f32.gmra.mrb[0].mxu0 %v2026
      %v2488 = vpop.f32.mrb[0].mxu0
      %v2489 = vadd.f32 0.0, %v2488
      %v2490 = vpop.f32.mrb[0].mxu0
      %2491 = vmatprep.mubr.f32.mxu0 %v1378
      %2492 = vmatmul.mubr.f32.gmra.mrb[0].mxu0 %v2027
      %v2493 = vpop.f32.mrb[0].mxu0
      %v2494 = vadd.f32 0.0, %v2493
      %v2495 = vpop.f32.mrb[0].mxu0
      %2496 = vmatprep.mubr.f32.mxu0 %v1379
      %2497 = vmatmul.mubr.f32.gmra.mrb[0].mxu0 %v2028
      %v2498 = vpop.f32.mrb[0].mxu0
      %v2499 = vadd.f32 0.0, %v2498
      %v2500 = vpop.f32.mrb[0].mxu0
      %2501 = vmatprep.mubr.f32.mxu0 %v1380
      %2502 = vmatmul.mubr.f32.gmra.mrb[0].mxu0 %v2029
      %v2503 = vpop.f32.mrb[0].mxu0
      %v2504 = vadd.f32 0.0, %v2503
      %v2505 = vpop.f32.mrb[0].mxu0
      %2506 = vmatprep.mubr.f32.mxu0 %v1381
      %2507 = vmatmul.mubr.f32.gmra.mrb[0].mxu0 %v2030
      %v2508 = vpop.f32.mrb[0].mxu0
      %v2509 = vadd.f32 0.0, %v2508
      %v2510 = vpop.f32.mrb[0].mxu0
      %2511 = vmatprep.mubr.f32.mxu0 %v1382
      %2512 = vmatmul.mubr.f32.gmra.mrb[0].mxu0 %v2031
      %v2513 = vpop.f32.mrb[0].mxu0
      %v2514 = vadd.f32 0.0, %v2513
      %v2515 = vpop.f32.mrb[0].mxu0
      %2516 = vmatprep.mubr.f32.mxu0 %v1383
      %2517 = vmatmul.mubr.f32.gmra.mrb[0].mxu0 %v2032
      %v2518 = vpop.f32.mrb[0].mxu0
      %v2519 = vadd.f32 0.0, %v2518
      %v2520 = vpop.f32.mrb[0].mxu0
      %2521 = vmatprep.mubr.f32.mxu0 %v1384
      %2522 = vmatmul.mubr.f32.gmra.mrb[0].mxu0 %v2033
      %v2523 = vpop.f32.mrb[0].mxu0
      %v2524 = vadd.f32 0.0, %v2523
      %v2525 = vpop.f32.mrb[0].mxu0
      %2526 = vmatprep.mubr.f32.mxu0 %v1385
      %2527 = vmatmul.mubr.f32.gmra.mrb[0].mxu0 %v2034
      %v2528 = vpop.f32.mrb[0].mxu0
      %v2529 = vadd.f32 0.0, %v2528
      %v2530 = vpop.f32.mrb[0].mxu0
      %2531 = vmatprep.mubr.f32.mxu0 %v1386
      %2532 = vmatmul.mubr.f32.gmra.mrb[0].mxu0 %v2035
      %v2533 = vpop.f32.mrb[0].mxu0
      %v2534 = vadd.f32 0.0, %v2533
      %v2535 = vpop.f32.mrb[0].mxu0
      %2536 = vmatprep.mubr.f32.mxu0 %v1387
      %2537 = vmatmul.mubr.f32.gmra.mrb[0].mxu0 %v2036
      %v2538 = vpop.f32.mrb[0].mxu0
      %v2539 = vadd.f32 0.0, %v2538
      %v2540 = vpop.f32.mrb[0].mxu0
      %2541 = vmatprep.mubr.f32.mxu0 %v1388
      %2542 = vmatmul.mubr.f32.gmra.mrb[0].mxu0 %v2037
      %v2543 = vpop.f32.mrb[0].mxu0
      %v2544 = vadd.f32 0.0, %v2543
      %v2545 = vpop.f32.mrb[0].mxu0
      %2546 = vmatprep.mubr.f32.mxu0 %v1389
      %2547 = vmatmul.mubr.f32.gmra.mrb[0].mxu0 %v2038
      %v2548 = vpop.f32.mrb[0].mxu0
      %v2549 = vadd.f32 0.0, %v2548
      %v2550 = vpop.f32.mrb[0].mxu0
      %2551 = vmatprep.mubr.f32.mxu0 %v1390
      %2552 = vmatmul.mubr.f32.gmra.mrb[0].mxu0 %v2039
      %v2553 = vpop.f32.mrb[0].mxu0
      %v2554 = vadd.f32 0.0, %v2553
      %v2555 = vpop.f32.mrb[0].mxu0
      %2556 = vmatprep.mubr.f32.mxu0 %v1391
      %2557 = vmatmul.mubr.f32.gmra.mrb[0].mxu0 %v2040
      %v2558 = vpop.f32.mrb[0].mxu0
      %v2559 = vadd.f32 0.0, %v2558
      %v2560 = vpop.f32.mrb[0].mxu0
      %2561 = vmatprep.mubr.f32.mxu0 %v1392
      %2562 = vmatmul.mubr.f32.gmra.mrb[0].mxu0 %v2041
      %v2563 = vpop.f32.mrb[0].mxu0
      %v2564 = vadd.f32 0.0, %v2563
      %v2565 = vpop.f32.mrb[0].mxu0
      %2566 = vmatprep.mubr.f32.mxu0 %v1393
      %2567 = vmatmul.mubr.f32.gmra.mrb[0].mxu0 %v2042
      %v2568 = vpop.f32.mrb[0].mxu0
      %v2569 = vadd.f32 0.0, %v2568
      %v2570 = vpop.f32.mrb[0].mxu0
      %2571 = vmatprep.mubr.f32.mxu0 %v1394
      %2572 = vmatmul.mubr.f32.gmra.mrb[0].mxu0 %v2043
      %v2573 = vpop.f32.mrb[0].mxu0
      %v2574 = vadd.f32 0.0, %v2573
      %v2575 = vpop.f32.mrb[0].mxu0
      %2576 = vmatprep.mubr.f32.mxu0 %v1395
      %2577 = vmatmul.mubr.f32.gmra.mrb[0].mxu0 %v2044
      %v2578 = vpop.f32.mrb[0].mxu0
      %v2579 = vadd.f32 0.0, %v2578
      %v2580 = vpop.f32.mrb[0].mxu0
      %2581 = vmatprep.mubr.f32.mxu0 %v1396
      %2582 = vmatmul.mubr.f32.gmra.mrb[0].mxu0 %v2045
      %v2583 = vpop.f32.mrb[0].mxu0
      %v2584 = vadd.f32 0.0, %v2583
      %v2585 = vpop.f32.mrb[0].mxu0
      %2586 = vdwg.mxu0
      %2587 = vmatprep.subr.mxu0 0.0
      %2588 = vmatpush1.msra.mxu0 %v2346
      %2589 = vmatprep.subr.mxu0 0.0
      %2590 = vmatpush1.msra.mxu0 %v2347
      %2591 = vmatprep.subr.mxu0 0.0
      %2592 = vmatpush1.msra.mxu0 %v2348
      %2593 = vmatprep.subr.mxu0 0.0
      %2594 = vmatpush1.msra.mxu0 %v2349
      %2595 = vmatprep.subr.mxu0 0.0
      %2596 = vmatpush1.msra.mxu0 %v2350
      %2597 = vmatprep.subr.mxu0 0.0
      %2598 = vmatpush1.msra.mxu0 %v2351
      %2599 = vmatprep.subr.mxu0 0.0
      %2600 = vmatpush1.msra.mxu0 %v2352
      %2601 = vmatprep.subr.mxu0 0.0
      %2602 = vmatpush1.msra.mxu0 %v2353
      %2603 = vmatprep.subr.mxu0 0.0
      %2604 = vmatpush1.msra.mxu0 %v2354
      %2605 = vmatprep.subr.mxu0 0.0
      %2606 = vmatpush1.msra.mxu0 %v2355
      %2607 = vmatprep.subr.mxu0 0.0
      %2608 = vmatpush1.msra.mxu0 %v2356
      %2609 = vmatprep.subr.mxu0 0.0
      %2610 = vmatpush1.msra.mxu0 %v2357
      %2611 = vmatprep.subr.mxu0 0.0
      %2612 = vmatpush1.msra.mxu0 %v2358
      %2613 = vmatprep.subr.mxu0 0.0
      %2614 = vmatpush1.msra.mxu0 %v2359
      %2615 = vmatprep.subr.mxu0 0.0
      %2616 = vmatpush1.msra.mxu0 %v2360
      %2617 = vmatprep.subr.mxu0 0.0
      %2618 = vmatpush1.msra.mxu0 %v2361
      %2619 = vmatprep.subr.mxu0 0.0
      %2620 = vmatpush1.msra.mxu0 0.0
      %2621 = vmatprep.subr.mxu0 0.0
      %2622 = vmatpush1.msra.mxu0 0.0
      %2623 = vmatprep.subr.mxu0 0.0
      %2624 = vmatpush1.msra.mxu0 0.0
      %2625 = vmatprep.subr.mxu0 0.0
      %2626 = vmatpush1.msra.mxu0 0.0
      %2627 = vmatprep.subr.mxu0 0.0
      %2628 = vmatpush1.msra.mxu0 0.0
      %2629 = vmatprep.subr.mxu0 0.0
      %2630 = vmatpush1.msra.mxu0 0.0
      %2631 = vmatprep.subr.mxu0 0.0
      %2632 = vmatpush1.msra.mxu0 0.0
      %2633 = vmatprep.subr.mxu0 0.0
      %2634 = vmatpush1.msra.mxu0 0.0
      %2635 = vmatprep.subr.mxu0 0.0
      %2636 = vmatpush1.msra.mxu0 0.0
      %2637 = vmatprep.subr.mxu0 0.0
      %2638 = vmatpush1.msra.mxu0 0.0
      %2639 = vmatprep.subr.mxu0 0.0
      %2640 = vmatpush1.msra.mxu0 0.0
      %2641 = vmatprep.subr.mxu0 0.0
      %2642 = vmatpush1.msra.mxu0 0.0
      %2643 = vmatprep.subr.mxu0 0.0
      %2644 = vmatpush1.msra.mxu0 0.0
      %2645 = vmatprep.subr.mxu0 0.0
      %2646 = vmatpush1.msra.mxu0 0.0
      %2647 = vmatprep.subr.mxu0 0.0
      %2648 = vmatpush1.msra.mxu0 0.0
      %2649 = vmatprep.subr.mxu0 0.0
      %2650 = vmatpush1.msra.mxu0 0.0
      %2651 = vmatprep.mubr.f32.mxu0 0.0
      %2652 = vmatmul.mubr.f32.gmra.mrb[0].mxu0 %v2231
      %v2653 = vpop.f32.mrb[0].mxu0
      %v2654 = vadd.f32 %v2429, %v2653
      %v2655 = vpop.f32.mrb[0].mxu0
      %2656 = vmatprep.mubr.f32.mxu0 0.0
      %2657 = vmatmul.mubr.f32.gmra.mrb[0].mxu0 %v2232
      %v2658 = vpop.f32.mrb[0].mxu0
      %v2659 = vadd.f32 %v2434, %v2658
      %v2660 = vpop.f32.mrb[0].mxu0
      %2661 = vmatprep.mubr.f32.mxu0 0.0
      %2662 = vmatmul.mubr.f32.gmra.mrb[0].mxu0 %v2233
      %v2663 = vpop.f32.mrb[0].mxu0
      %v2664 = vadd.f32 %v2439, %v2663
      %v2665 = vpop.f32.mrb[0].mxu0
      %2666 = vmatprep.mubr.f32.mxu0 0.0
      %2667 = vmatmul.mubr.f32.gmra.mrb[0].mxu0 %v2234
      %v2668 = vpop.f32.mrb[0].mxu0
      %v2669 = vadd.f32 %v2444, %v2668
      %v2670 = vpop.f32.mrb[0].mxu0
      %2671 = vmatprep.mubr.f32.mxu0 0.0
      %2672 = vmatmul.mubr.f32.gmra.mrb[0].mxu0 %v2235
      %v2673 = vpop.f32.mrb[0].mxu0
      %v2674 = vadd.f32 %v2449, %v2673
      %v2675 = vpop.f32.mrb[0].mxu0
      %2676 = vmatprep.mubr.f32.mxu0 0.0
      %2677 = vmatmul.mubr.f32.gmra.mrb[0].mxu0 %v2236
      %v2678 = vpop.f32.mrb[0].mxu0
      %v2679 = vadd.f32 %v2454, %v2678
      %v2680 = vpop.f32.mrb[0].mxu0
      %2681 = vmatprep.mubr.f32.mxu0 0.0
      %2682 = vmatmul.mubr.f32.gmra.mrb[0].mxu0 %v2237
      %v2683 = vpop.f32.mrb[0].mxu0
      %v2684 = vadd.f32 %v2459, %v2683
      %v2685 = vpop.f32.mrb[0].mxu0
      %2686 = vmatprep.mubr.f32.mxu0 0.0
      %2687 = vmatmul.mubr.f32.gmra.mrb[0].mxu0 %v2238
      %v2688 = vpop.f32.mrb[0].mxu0
      %v2689 = vadd.f32 %v2464, %v2688
      %v2690 = vpop.f32.mrb[0].mxu0
      %2691 = vmatprep.mubr.f32.mxu0 0.0
      %2692 = vmatmul.mubr.f32.gmra.mrb[0].mxu0 %v2239
      %v2693 = vpop.f32.mrb[0].mxu0
      %v2694 = vadd.f32 %v2469, %v2693
      %v2695 = vpop.f32.mrb[0].mxu0
      %2696 = vmatprep.mubr.f32.mxu0 0.0
      %2697 = vmatmul.mubr.f32.gmra.mrb[0].mxu0 %v2240
      %v2698 = vpop.f32.mrb[0].mxu0
      %v2699 = vadd.f32 %v2474, %v2698
      %v2700 = vpop.f32.mrb[0].mxu0
      %2701 = vmatprep.mubr.f32.mxu0 0.0
      %2702 = vmatmul.mubr.f32.gmra.mrb[0].mxu0 %v2241
      %v2703 = vpop.f32.mrb[0].mxu0
      %v2704 = vadd.f32 %v2479, %v2703
      %v2705 = vpop.f32.mrb[0].mxu0
      %2706 = vmatprep.mubr.f32.mxu0 0.0
      %2707 = vmatmul.mubr.f32.gmra.mrb[0].mxu0 %v2242
      %v2708 = vpop.f32.mrb[0].mxu0
      %v2709 = vadd.f32 %v2484, %v2708
      %v2710 = vpop.f32.mrb[0].mxu0
      %2711 = vmatprep.mubr.f32.mxu0 0.0
      %2712 = vmatmul.mubr.f32.gmra.mrb[0].mxu0 %v2243
      %v2713 = vpop.f32.mrb[0].mxu0
      %v2714 = vadd.f32 %v2489, %v2713
      %v2715 = vpop.f32.mrb[0].mxu0
      %2716 = vmatprep.mubr.f32.mxu0 0.0
      %2717 = vmatmul.mubr.f32.gmra.mrb[0].mxu0 %v2244
      %v2718 = vpop.f32.mrb[0].mxu0
      %v2719 = vadd.f32 %v2494, %v2718
      %v2720 = vpop.f32.mrb[0].mxu0
      %2721 = vmatprep.mubr.f32.mxu0 0.0
      %2722 = vmatmul.mubr.f32.gmra.mrb[0].mxu0 %v2245
      %v2723 = vpop.f32.mrb[0].mxu0
      %v2724 = vadd.f32 %v2499, %v2723
      %v2725 = vpop.f32.mrb[0].mxu0
      %2726 = vmatprep.mubr.f32.mxu0 0.0
      %2727 = vmatmul.mubr.f32.gmra.mrb[0].mxu0 %v2246
      %v2728 = vpop.f32.mrb[0].mxu0
      %v2729 = vadd.f32 %v2504, %v2728
      %v2730 = vpop.f32.mrb[0].mxu0
      %2731 = vmatprep.mubr.f32.mxu0 0.0
      %2732 = vmatmul.mubr.f32.gmra.mrb[0].mxu0 %v2247
      %v2733 = vpop.f32.mrb[0].mxu0
      %v2734 = vadd.f32 %v2509, %v2733
      %v2735 = vpop.f32.mrb[0].mxu0
      %2736 = vmatprep.mubr.f32.mxu0 0.0
      %2737 = vmatmul.mubr.f32.gmra.mrb[0].mxu0 %v2248
      %v2738 = vpop.f32.mrb[0].mxu0
      %v2739 = vadd.f32 %v2514, %v2738
      %v2740 = vpop.f32.mrb[0].mxu0
      %2741 = vmatprep.mubr.f32.mxu0 0.0
      %2742 = vmatmul.mubr.f32.gmra.mrb[0].mxu0 %v2249
      %v2743 = vpop.f32.mrb[0].mxu0
      %v2744 = vadd.f32 %v2519, %v2743
      %v2745 = vpop.f32.mrb[0].mxu0
      %2746 = vmatprep.mubr.f32.mxu0 0.0
      %2747 = vmatmul.mubr.f32.gmra.mrb[0].mxu0 %v2250
      %v2748 = vpop.f32.mrb[0].mxu0
      %v2749 = vadd.f32 %v2524, %v2748
      %v2750 = vpop.f32.mrb[0].mxu0
      %2751 = vmatprep.mubr.f32.mxu0 0.0
      %2752 = vmatmul.mubr.f32.gmra.mrb[0].mxu0 %v2251
      %v2753 = vpop.f32.mrb[0].mxu0
      %v2754 = vadd.f32 %v2529, %v2753
      %v2755 = vpop.f32.mrb[0].mxu0
      %2756 = vmatprep.mubr.f32.mxu0 0.0
      %2757 = vmatmul.mubr.f32.gmra.mrb[0].mxu0 %v2252
      %v2758 = vpop.f32.mrb[0].mxu0
      %v2759 = vadd.f32 %v2534, %v2758
      %v2760 = vpop.f32.mrb[0].mxu0
      %2761 = vmatprep.mubr.f32.mxu0 0.0
      %2762 = vmatmul.mubr.f32.gmra.mrb[0].mxu0 %v2253
      %v2763 = vpop.f32.mrb[0].mxu0
      %v2764 = vadd.f32 %v2539, %v2763
      %v2765 = vpop.f32.mrb[0].mxu0
      %2766 = vmatprep.mubr.f32.mxu0 0.0
      %2767 = vmatmul.mubr.f32.gmra.mrb[0].mxu0 %v2254
      %v2768 = vpop.f32.mrb[0].mxu0
      %v2769 = vadd.f32 %v2544, %v2768
      %v2770 = vpop.f32.mrb[0].mxu0
      %2771 = vmatprep.mubr.f32.mxu0 0.0
      %2772 = vmatmul.mubr.f32.gmra.mrb[0].mxu0 %v2255
      %v2773 = vpop.f32.mrb[0].mxu0
      %v2774 = vadd.f32 %v2549, %v2773
      %v2775 = vpop.f32.mrb[0].mxu0
      %2776 = vmatprep.mubr.f32.mxu0 0.0
      %2777 = vmatmul.mubr.f32.gmra.mrb[0].mxu0 %v2256
      %v2778 = vpop.f32.mrb[0].mxu0
      %v2779 = vadd.f32 %v2554, %v2778
      %v2780 = vpop.f32.mrb[0].mxu0
      %2781 = vmatprep.mubr.f32.mxu0 0.0
      %2782 = vmatmul.mubr.f32.gmra.mrb[0].mxu0 %v2257
      %v2783 = vpop.f32.mrb[0].mxu0
      %v2784 = vadd.f32 %v2559, %v2783
      %v2785 = vpop.f32.mrb[0].mxu0
      %2786 = vmatprep.mubr.f32.mxu0 0.0
      %2787 = vmatmul.mubr.f32.gmra.mrb[0].mxu0 %v2258
      %v2788 = vpop.f32.mrb[0].mxu0
      %v2789 = vadd.f32 %v2564, %v2788
      %v2790 = vpop.f32.mrb[0].mxu0
      %2791 = vmatprep.mubr.f32.mxu0 0.0
      %2792 = vmatmul.mubr.f32.gmra.mrb[0].mxu0 %v2259
      %v2793 = vpop.f32.mrb[0].mxu0
      %v2794 = vadd.f32 %v2569, %v2793
      %v2795 = vpop.f32.mrb[0].mxu0
      %2796 = vmatprep.mubr.f32.mxu0 0.0
      %2797 = vmatmul.mubr.f32.gmra.mrb[0].mxu0 %v2260
      %v2798 = vpop.f32.mrb[0].mxu0
      %v2799 = vadd.f32 %v2574, %v2798
      %v2800 = vpop.f32.mrb[0].mxu0
      %2801 = vmatprep.mubr.f32.mxu0 0.0
      %2802 = vmatmul.mubr.f32.gmra.mrb[0].mxu0 %v2261
      %v2803 = vpop.f32.mrb[0].mxu0
      %v2804 = vadd.f32 %v2579, %v2803
      %v2805 = vpop.f32.mrb[0].mxu0
      %2806 = vmatprep.mubr.f32.mxu0 0.0
      %2807 = vmatmul.mubr.f32.gmra.mrb[0].mxu0 %v2262
      %v2808 = vpop.f32.mrb[0].mxu0
      %v2809 = vadd.f32 %v2584, %v2808
      %v2810 = vpop.f32.mrb[0].mxu0
      %2811 = vdwg.mxu0
      %2812 = vmatprep.subr.mxu0 0.0
      %2813 = vmatpush1.msra.mxu0 %v2265
      %2814 = vmatprep.subr.mxu0 0.0
      %2815 = vmatpush1.msra.mxu0 %v2266
      %2816 = vmatprep.subr.mxu0 0.0
      %2817 = vmatpush1.msra.mxu0 %v2267
      %2818 = vmatprep.subr.mxu0 0.0
      %2819 = vmatpush1.msra.mxu0 %v2268
      %2820 = vmatprep.subr.mxu0 0.0
      %2821 = vmatpush1.msra.mxu0 %v2269
      %2822 = vmatprep.subr.mxu0 0.0
      %2823 = vmatpush1.msra.mxu0 %v2270
      %2824 = vmatprep.subr.mxu0 0.0
      %2825 = vmatpush1.msra.mxu0 %v2271
      %2826 = vmatprep.subr.mxu0 0.0
      %2827 = vmatpush1.msra.mxu0 %v2272
      %2828 = vmatprep.subr.mxu0 0.0
      %2829 = vmatpush1.msra.mxu0 %v2273
      %2830 = vmatprep.subr.mxu0 0.0
      %2831 = vmatpush1.msra.mxu0 %v2274
      %2832 = vmatprep.subr.mxu0 0.0
      %2833 = vmatpush1.msra.mxu0 %v2275
      %2834 = vmatprep.subr.mxu0 0.0
      %2835 = vmatpush1.msra.mxu0 %v2276
      %2836 = vmatprep.subr.mxu0 0.0
      %2837 = vmatpush1.msra.mxu0 %v2277
      %2838 = vmatprep.subr.mxu0 0.0
      %2839 = vmatpush1.msra.mxu0 %v2278
      %2840 = vmatprep.subr.mxu0 0.0
      %2841 = vmatpush1.msra.mxu0 %v2279
      %2842 = vmatprep.subr.mxu0 0.0
      %2843 = vmatpush1.msra.mxu0 %v2280
      %2844 = vmatprep.subr.mxu0 0.0
      %2845 = vmatpush1.msra.mxu0 %v2281
      %2846 = vmatprep.subr.mxu0 0.0
      %2847 = vmatpush1.msra.mxu0 %v2282
      %2848 = vmatprep.subr.mxu0 0.0
      %2849 = vmatpush1.msra.mxu0 %v2283
      %2850 = vmatprep.subr.mxu0 0.0
      %2851 = vmatpush1.msra.mxu0 %v2284
      %2852 = vmatprep.subr.mxu0 0.0
      %2853 = vmatpush1.msra.mxu0 %v2285
      %2854 = vmatprep.subr.mxu0 0.0
      %2855 = vmatpush1.msra.mxu0 %v2286
      %2856 = vmatprep.subr.mxu0 0.0
      %2857 = vmatpush1.msra.mxu0 %v2287
      %2858 = vmatprep.subr.mxu0 0.0
      %2859 = vmatpush1.msra.mxu0 %v2288
      %2860 = vmatprep.subr.mxu0 0.0
      %2861 = vmatpush1.msra.mxu0 %v2289
      %2862 = vmatprep.subr.mxu0 0.0
      %2863 = vmatpush1.msra.mxu0 %v2290
      %2864 = vmatprep.subr.mxu0 0.0
      %2865 = vmatpush1.msra.mxu0 %v2291
      %2866 = vmatprep.subr.mxu0 0.0
      %2867 = vmatpush1.msra.mxu0 %v2292
      %2868 = vmatprep.subr.mxu0 0.0
      %2869 = vmatpush1.msra.mxu0 %v2293
      %2870 = vmatprep.subr.mxu0 0.0
      %2871 = vmatpush1.msra.mxu0 %v2294
      %2872 = vmatprep.subr.mxu0 0.0
      %2873 = vmatpush1.msra.mxu0 %v2295
      %2874 = vmatprep.subr.mxu0 0.0
      %2875 = vmatpush1.msra.mxu0 %v2296
      %2876 = vmatprep.mubr.f32.mxu0 %v1363
      %2877 = vmatmul.mubr.f32.gmra.mrb[0].mxu0 %v2012
      %v2878 = vpop.f32.mrb[0].mxu0
      %v2879 = vadd.f32 %v2654, %v2878
      %v2880 = vpop.f32.mrb[0].mxu0
      %2881 = vmatprep.mubr.f32.mxu0 %v1364
      %2882 = vmatmul.mubr.f32.gmra.mrb[0].mxu0 %v2013
      %v2883 = vpop.f32.mrb[0].mxu0
      %v2884 = vadd.f32 %v2659, %v2883
      %v2885 = vpop.f32.mrb[0].mxu0
      %2886 = vmatprep.mubr.f32.mxu0 %v1365
      %2887 = vmatmul.mubr.f32.gmra.mrb[0].mxu0 %v2014
      %v2888 = vpop.f32.mrb[0].mxu0
      %v2889 = vadd.f32 %v2664, %v2888
      %v2890 = vpop.f32.mrb[0].mxu0
      %2891 = vmatprep.mubr.f32.mxu0 %v1366
      %2892 = vmatmul.mubr.f32.gmra.mrb[0].mxu0 %v2015
      %v2893 = vpop.f32.mrb[0].mxu0
      %v2894 = vadd.f32 %v2669, %v2893
      %v2895 = vpop.f32.mrb[0].mxu0
      %2896 = vmatprep.mubr.f32.mxu0 %v1367
      %2897 = vmatmul.mubr.f32.gmra.mrb[0].mxu0 %v2016
      %v2898 = vpop.f32.mrb[0].mxu0
      %v2899 = vadd.f32 %v2674, %v2898
      %v2900 = vpop.f32.mrb[0].mxu0
      %2901 = vmatprep.mubr.f32.mxu0 %v1368
      %2902 = vmatmul.mubr.f32.gmra.mrb[0].mxu0 %v2017
      %v2903 = vpop.f32.mrb[0].mxu0
      %v2904 = vadd.f32 %v2679, %v2903
      %v2905 = vpop.f32.mrb[0].mxu0
      %2906 = vmatprep.mubr.f32.mxu0 %v1369
      %2907 = vmatmul.mubr.f32.gmra.mrb[0].mxu0 %v2018
      %v2908 = vpop.f32.mrb[0].mxu0
      %v2909 = vadd.f32 %v2684, %v2908
      %v2910 = vpop.f32.mrb[0].mxu0
      %2911 = vmatprep.mubr.f32.mxu0 %v1370
      %2912 = vmatmul.mubr.f32.gmra.mrb[0].mxu0 %v2019
      %v2913 = vpop.f32.mrb[0].mxu0
      %v2914 = vadd.f32 %v2689, %v2913
      %v2915 = vpop.f32.mrb[0].mxu0
      %2916 = vmatprep.mubr.f32.mxu0 %v1371
      %2917 = vmatmul.mubr.f32.gmra.mrb[0].mxu0 %v2020
      %v2918 = vpop.f32.mrb[0].mxu0
      %v2919 = vadd.f32 %v2694, %v2918
      %v2920 = vpop.f32.mrb[0].mxu0
      %2921 = vmatprep.mubr.f32.mxu0 %v1372
      %2922 = vmatmul.mubr.f32.gmra.mrb[0].mxu0 %v2021
      %v2923 = vpop.f32.mrb[0].mxu0
      %v2924 = vadd.f32 %v2699, %v2923
      %v2925 = vpop.f32.mrb[0].mxu0
      %2926 = vmatprep.mubr.f32.mxu0 %v1373
      %2927 = vmatmul.mubr.f32.gmra.mrb[0].mxu0 %v2022
      %v2928 = vpop.f32.mrb[0].mxu0
      %v2929 = vadd.f32 %v2704, %v2928
      %v2930 = vpop.f32.mrb[0].mxu0
      %2931 = vmatprep.mubr.f32.mxu0 %v1374
      %2932 = vmatmul.mubr.f32.gmra.mrb[0].mxu0 %v2023
      %v2933 = vpop.f32.mrb[0].mxu0
      %v2934 = vadd.f32 %v2709, %v2933
      %v2935 = vpop.f32.mrb[0].mxu0
      %2936 = vmatprep.mubr.f32.mxu0 %v1375
      %2937 = vmatmul.mubr.f32.gmra.mrb[0].mxu0 %v2024
      %v2938 = vpop.f32.mrb[0].mxu0
      %v2939 = vadd.f32 %v2714, %v2938
      %v2940 = vpop.f32.mrb[0].mxu0
      %2941 = vmatprep.mubr.f32.mxu0 %v1376
      %2942 = vmatmul.mubr.f32.gmra.mrb[0].mxu0 %v2025
      %v2943 = vpop.f32.mrb[0].mxu0
      %v2944 = vadd.f32 %v2719, %v2943
      %v2945 = vpop.f32.mrb[0].mxu0
      %2946 = vmatprep.mubr.f32.mxu0 %v1377
      %2947 = vmatmul.mubr.f32.gmra.mrb[0].mxu0 %v2026
      %v2948 = vpop.f32.mrb[0].mxu0
      %v2949 = vadd.f32 %v2724, %v2948
      %v2950 = vpop.f32.mrb[0].mxu0
      %2951 = vmatprep.mubr.f32.mxu0 %v1378
      %2952 = vmatmul.mubr.f32.gmra.mrb[0].mxu0 %v2027
      %v2953 = vpop.f32.mrb[0].mxu0
      %v2954 = vadd.f32 %v2729, %v2953
      %v2955 = vpop.f32.mrb[0].mxu0
      %2956 = vmatprep.mubr.f32.mxu0 %v1379
      %2957 = vmatmul.mubr.f32.gmra.mrb[0].mxu0 %v2028
      %v2958 = vpop.f32.mrb[0].mxu0
      %v2959 = vadd.f32 %v2734, %v2958
      %v2960 = vpop.f32.mrb[0].mxu0
      %2961 = vmatprep.mubr.f32.mxu0 %v1380
      %2962 = vmatmul.mubr.f32.gmra.mrb[0].mxu0 %v2029
      %v2963 = vpop.f32.mrb[0].mxu0
      %v2964 = vadd.f32 %v2739, %v2963
      %v2965 = vpop.f32.mrb[0].mxu0
      %2966 = vmatprep.mubr.f32.mxu0 %v1381
      %2967 = vmatmul.mubr.f32.gmra.mrb[0].mxu0 %v2030
      %v2968 = vpop.f32.mrb[0].mxu0
      %v2969 = vadd.f32 %v2744, %v2968
      %v2970 = vpop.f32.mrb[0].mxu0
      %2971 = vmatprep.mubr.f32.mxu0 %v1382
      %2972 = vmatmul.mubr.f32.gmra.mrb[0].mxu0 %v2031
      %v2973 = vpop.f32.mrb[0].mxu0
      %v2974 = vadd.f32 %v2749, %v2973
      %v2975 = vpop.f32.mrb[0].mxu0
      %2976 = vmatprep.mubr.f32.mxu0 %v1383
      %2977 = vmatmul.mubr.f32.gmra.mrb[0].mxu0 %v2032
      %v2978 = vpop.f32.mrb[0].mxu0
      %v2979 = vadd.f32 %v2754, %v2978
      %v2980 = vpop.f32.mrb[0].mxu0
      %2981 = vmatprep.mubr.f32.mxu0 %v1384
      %2982 = vmatmul.mubr.f32.gmra.mrb[0].mxu0 %v2033
      %v2983 = vpop.f32.mrb[0].mxu0
      %v2984 = vadd.f32 %v2759, %v2983
      %v2985 = vpop.f32.mrb[0].mxu0
      %2986 = vmatprep.mubr.f32.mxu0 %v1385
      %2987 = vmatmul.mubr.f32.gmra.mrb[0].mxu0 %v2034
      %v2988 = vpop.f32.mrb[0].mxu0
      %v2989 = vadd.f32 %v2764, %v2988
      %v2990 = vpop.f32.mrb[0].mxu0
      %2991 = vmatprep.mubr.f32.mxu0 %v1386
      %2992 = vmatmul.mubr.f32.gmra.mrb[0].mxu0 %v2035
      %v2993 = vpop.f32.mrb[0].mxu0
      %v2994 = vadd.f32 %v2769, %v2993
      %v2995 = vpop.f32.mrb[0].mxu0
      %2996 = vmatprep.mubr.f32.mxu0 %v1387
      %2997 = vmatmul.mubr.f32.gmra.mrb[0].mxu0 %v2036
      %v2998 = vpop.f32.mrb[0].mxu0
      %v2999 = vadd.f32 %v2774, %v2998
      %v3000 = vpop.f32.mrb[0].mxu0
      %3001 = vmatprep.mubr.f32.mxu0 %v1388
      %3002 = vmatmul.mubr.f32.gmra.mrb[0].mxu0 %v2037
      %v3003 = vpop.f32.mrb[0].mxu0
      %v3004 = vadd.f32 %v2779, %v3003
      %v3005 = vpop.f32.mrb[0].mxu0
      %3006 = vmatprep.mubr.f32.mxu0 %v1389
      %3007 = vmatmul.mubr.f32.gmra.mrb[0].mxu0 %v2038
      %v3008 = vpop.f32.mrb[0].mxu0
      %v3009 = vadd.f32 %v2784, %v3008
      %v3010 = vpop.f32.mrb[0].mxu0
      %3011 = vmatprep.mubr.f32.mxu0 %v1390
      %3012 = vmatmul.mubr.f32.gmra.mrb[0].mxu0 %v2039
      %v3013 = vpop.f32.mrb[0].mxu0
      %v3014 = vadd.f32 %v2789, %v3013
      %v3015 = vpop.f32.mrb[0].mxu0
      %3016 = vmatprep.mubr.f32.mxu0 %v1391
      %3017 = vmatmul.mubr.f32.gmra.mrb[0].mxu0 %v2040
      %v3018 = vpop.f32.mrb[0].mxu0
      %v3019 = vadd.f32 %v2794, %v3018
      %v3020 = vpop.f32.mrb[0].mxu0
      %3021 = vmatprep.mubr.f32.mxu0 %v1392
      %3022 = vmatmul.mubr.f32.gmra.mrb[0].mxu0 %v2041
      %v3023 = vpop.f32.mrb[0].mxu0
      %v3024 = vadd.f32 %v2799, %v3023
      %v3025 = vpop.f32.mrb[0].mxu0
      %3026 = vmatprep.mubr.f32.mxu0 %v1393
      %3027 = vmatmul.mubr.f32.gmra.mrb[0].mxu0 %v2042
      %v3028 = vpop.f32.mrb[0].mxu0
      %v3029 = vadd.f32 %v2804, %v3028
      %v3030 = vpop.f32.mrb[0].mxu0
      %3031 = vmatprep.mubr.f32.mxu0 %v1394
      %3032 = vmatmul.mubr.f32.gmra.mrb[0].mxu0 %v2043
      %v3033 = vpop.f32.mrb[0].mxu0
      %v3034 = vadd.f32 %v2809, %v3033
      %v3035 = vpop.f32.mrb[0].mxu0
      %3036 = vdwg.mxu0
      %3037 = vmatprep.subr.mxu0 0.0
      %3038 = vmatpush1.msra.mxu0 %v2297
      %3039 = vmatprep.subr.mxu0 0.0
      %3040 = vmatpush1.msra.mxu0 %v2298
      %3041 = vmatprep.subr.mxu0 0.0
      %3042 = vmatpush1.msra.mxu0 %v2299
      %3043 = vmatprep.subr.mxu0 0.0
      %3044 = vmatpush1.msra.mxu0 %v2300
      %3045 = vmatprep.subr.mxu0 0.0
      %3046 = vmatpush1.msra.mxu0 %v2301
      %3047 = vmatprep.subr.mxu0 0.0
      %3048 = vmatpush1.msra.mxu0 %v2302
      %3049 = vmatprep.subr.mxu0 0.0
      %3050 = vmatpush1.msra.mxu0 %v2303
      %3051 = vmatprep.subr.mxu0 0.0
      %3052 = vmatpush1.msra.mxu0 %v2304
      %3053 = vmatprep.subr.mxu0 0.0
      %3054 = vmatpush1.msra.mxu0 %v2305
      %3055 = vmatprep.subr.mxu0 0.0
      %3056 = vmatpush1.msra.mxu0 %v2306
      %3057 = vmatprep.subr.mxu0 0.0
      %3058 = vmatpush1.msra.mxu0 %v2307
      %3059 = vmatprep.subr.mxu0 0.0
      %3060 = vmatpush1.msra.mxu0 %v2308
      %3061 = vmatprep.subr.mxu0 0.0
      %3062 = vmatpush1.msra.mxu0 %v2309
      %3063 = vmatprep.subr.mxu0 0.0
      %3064 = vmatpush1.msra.mxu0 %v2310
      %3065 = vmatprep.subr.mxu0 0.0
      %3066 = vmatpush1.msra.mxu0 %v2311
      %3067 = vmatprep.subr.mxu0 0.0
      %3068 = vmatpush1.msra.mxu0 %v2312
      %3069 = vmatprep.subr.mxu0 0.0
      %3070 = vmatpush1.msra.mxu0 0.0
      %3071 = vmatprep.subr.mxu0 0.0
      %3072 = vmatpush1.msra.mxu0 0.0
      %3073 = vmatprep.subr.mxu0 0.0
      %3074 = vmatpush1.msra.mxu0 0.0
      %3075 = vmatprep.subr.mxu0 0.0
      %3076 = vmatpush1.msra.mxu0 0.0
      %3077 = vmatprep.subr.mxu0 0.0
      %3078 = vmatpush1.msra.mxu0 0.0
      %3079 = vmatprep.subr.mxu0 0.0
      %3080 = vmatpush1.msra.mxu0 0.0
      %3081 = vmatprep.subr.mxu0 0.0
      %3082 = vmatpush1.msra.mxu0 0.0
      %3083 = vmatprep.subr.mxu0 0.0
      %3084 = vmatpush1.msra.mxu0 0.0
      %3085 = vmatprep.subr.mxu0 0.0
      %3086 = vmatpush1.msra.mxu0 0.0
      %3087 = vmatprep.subr.mxu0 0.0
      %3088 = vmatpush1.msra.mxu0 0.0
      %3089 = vmatprep.subr.mxu0 0.0
      %3090 = vmatpush1.msra.mxu0 0.0
      %3091 = vmatprep.subr.mxu0 0.0
      %3092 = vmatpush1.msra.mxu0 0.0
      %3093 = vmatprep.subr.mxu0 0.0
      %3094 = vmatpush1.msra.mxu0 0.0
      %3095 = vmatprep.subr.mxu0 0.0
      %3096 = vmatpush1.msra.mxu0 0.0
      %3097 = vmatprep.subr.mxu0 0.0
      %3098 = vmatpush1.msra.mxu0 0.0
      %3099 = vmatprep.subr.mxu0 0.0
      %3100 = vmatpush1.msra.mxu0 0.0
      %3101 = vmatprep.mubr.f32.mxu0 0.0
      %3102 = vmatmul.mubr.f32.gmra.mrb[0].mxu0 %v2229
      %v3103 = vpop.f32.mrb[0].mxu0
      %v3104 = vadd.f32 %v2879, %v3103
      %v3105 = vpop.f32.mrb[0].mxu0
      %3106 = vmatprep.mubr.f32.mxu0 0.0
      %3107 = vmatmul.mubr.f32.gmra.mrb[0].mxu0 %v2230
      %v3108 = vpop.f32.mrb[0].mxu0
      %v3109 = vadd.f32 %v2884, %v3108
      %v3110 = vpop.f32.mrb[0].mxu0
      %3111 = vmatprep.mubr.f32.mxu0 0.0
      %3112 = vmatmul.mubr.f32.gmra.mrb[0].mxu0 %v2231
      %v3113 = vpop.f32.mrb[0].mxu0
      %v3114 = vadd.f32 %v2889, %v3113
      %v3115 = vpop.f32.mrb[0].mxu0
      %3116 = vmatprep.mubr.f32.mxu0 0.0
      %3117 = vmatmul.mubr.f32.gmra.mrb[0].mxu0 %v2232
      %v3118 = vpop.f32.mrb[0].mxu0
      %v3119 = vadd.f32 %v2894, %v3118
      %v3120 = vpop.f32.mrb[0].mxu0
      %3121 = vmatprep.mubr.f32.mxu0 0.0
      %3122 = vmatmul.mubr.f32.gmra.mrb[0].mxu0 %v2233
      %v3123 = vpop.f32.mrb[0].mxu0
      %v3124 = vadd.f32 %v2899, %v3123
      %v3125 = vpop.f32.mrb[0].mxu0
      %3126 = vmatprep.mubr.f32.mxu0 0.0
      %3127 = vmatmul.mubr.f32.gmra.mrb[0].mxu0 %v2234
      %v3128 = vpop.f32.mrb[0].mxu0
      %v3129 = vadd.f32 %v2904, %v3128
      %v3130 = vpop.f32.mrb[0].mxu0
      %3131 = vmatprep.mubr.f32.mxu0 0.0
      %3132 = vmatmul.mubr.f32.gmra.mrb[0].mxu0 %v2235
      %v3133 = vpop.f32.mrb[0].mxu0
      %v3134 = vadd.f32 %v2909, %v3133
      %v3135 = vpop.f32.mrb[0].mxu0
      %3136 = vmatprep.mubr.f32.mxu0 0.0
      %3137 = vmatmul.mubr.f32.gmra.mrb[0].mxu0 %v2236
      %v3138 = vpop.f32.mrb[0].mxu0
      %v3139 = vadd.f32 %v2914, %v3138
      %v3140 = vpop.f32.mrb[0].mxu0
      %3141 = vmatprep.mubr.f32.mxu0 0.0
      %3142 = vmatmul.mubr.f32.gmra.mrb[0].mxu0 %v2237
      %v3143 = vpop.f32.mrb[0].mxu0
      %v3144 = vadd.f32 %v2919, %v3143
      %v3145 = vpop.f32.mrb[0].mxu0
      %3146 = vmatprep.mubr.f32.mxu0 0.0
      %3147 = vmatmul.mubr.f32.gmra.mrb[0].mxu0 %v2238
      %v3148 = vpop.f32.mrb[0].mxu0
      %v3149 = vadd.f32 %v2924, %v3148
      %v3150 = vpop.f32.mrb[0].mxu0
      %3151 = vmatprep.mubr.f32.mxu0 0.0
      %3152 = vmatmul.mubr.f32.gmra.mrb[0].mxu0 %v2239
      %v3153 = vpop.f32.mrb[0].mxu0
      %v3154 = vadd.f32 %v2929, %v3153
      %v3155 = vpop.f32.mrb[0].mxu0
      %3156 = vmatprep.mubr.f32.mxu0 0.0
      %3157 = vmatmul.mubr.f32.gmra.mrb[0].mxu0 %v2240
      %v3158 = vpop.f32.mrb[0].mxu0
      %v3159 = vadd.f32 %v2934, %v3158
      %v3160 = vpop.f32.mrb[0].mxu0
      %3161 = vmatprep.mubr.f32.mxu0 0.0
      %3162 = vmatmul.mubr.f32.gmra.mrb[0].mxu0 %v2241
      %v3163 = vpop.f32.mrb[0].mxu0
      %v3164 = vadd.f32 %v2939, %v3163
      %v3165 = vpop.f32.mrb[0].mxu0
      %3166 = vmatprep.mubr.f32.mxu0 0.0
      %3167 = vmatmul.mubr.f32.gmra.mrb[0].mxu0 %v2242
      %v3168 = vpop.f32.mrb[0].mxu0
      %v3169 = vadd.f32 %v2944, %v3168
      %v3170 = vpop.f32.mrb[0].mxu0
      %3171 = vmatprep.mubr.f32.mxu0 0.0
      %3172 = vmatmul.mubr.f32.gmra.mrb[0].mxu0 %v2243
      %v3173 = vpop.f32.mrb[0].mxu0
      %v3174 = vadd.f32 %v2949, %v3173
      %v3175 = vpop.f32.mrb[0].mxu0
      %3176 = vmatprep.mubr.f32.mxu0 0.0
      %3177 = vmatmul.mubr.f32.gmra.mrb[0].mxu0 %v2244
      %v3178 = vpop.f32.mrb[0].mxu0
      %v3179 = vadd.f32 %v2954, %v3178
      %v3180 = vpop.f32.mrb[0].mxu0
      %3181 = vmatprep.mubr.f32.mxu0 0.0
      %3182 = vmatmul.mubr.f32.gmra.mrb[0].mxu0 %v2245
      %v3183 = vpop.f32.mrb[0].mxu0
      %v3184 = vadd.f32 %v2959, %v3183
      %v3185 = vpop.f32.mrb[0].mxu0
      %3186 = vmatprep.mubr.f32.mxu0 0.0
      %3187 = vmatmul.mubr.f32.gmra.mrb[0].mxu0 %v2246
      %v3188 = vpop.f32.mrb[0].mxu0
      %v3189 = vadd.f32 %v2964, %v3188
      %v3190 = vpop.f32.mrb[0].mxu0
      %3191 = vmatprep.mubr.f32.mxu0 0.0
      %3192 = vmatmul.mubr.f32.gmra.mrb[0].mxu0 %v2247
      %v3193 = vpop.f32.mrb[0].mxu0
      %v3194 = vadd.f32 %v2969, %v3193
      %v3195 = vpop.f32.mrb[0].mxu0
      %3196 = vmatprep.mubr.f32.mxu0 0.0
      %3197 = vmatmul.mubr.f32.gmra.mrb[0].mxu0 %v2248
      %v3198 = vpop.f32.mrb[0].mxu0
      %v3199 = vadd.f32 %v2974, %v3198
      %v3200 = vpop.f32.mrb[0].mxu0
      %3201 = vmatprep.mubr.f32.mxu0 0.0
      %3202 = vmatmul.mubr.f32.gmra.mrb[0].mxu0 %v2249
      %v3203 = vpop.f32.mrb[0].mxu0
      %v3204 = vadd.f32 %v2979, %v3203
      %v3205 = vpop.f32.mrb[0].mxu0
      %3206 = vmatprep.mubr.f32.mxu0 0.0
      %3207 = vmatmul.mubr.f32.gmra.mrb[0].mxu0 %v2250
      %v3208 = vpop.f32.mrb[0].mxu0
      %v3209 = vadd.f32 %v2984, %v3208
      %v3210 = vpop.f32.mrb[0].mxu0
      %3211 = vmatprep.mubr.f32.mxu0 0.0
      %3212 = vmatmul.mubr.f32.gmra.mrb[0].mxu0 %v2251
      %v3213 = vpop.f32.mrb[0].mxu0
      %v3214 = vadd.f32 %v2989, %v3213
      %v3215 = vpop.f32.mrb[0].mxu0
      %3216 = vmatprep.mubr.f32.mxu0 0.0
      %3217 = vmatmul.mubr.f32.gmra.mrb[0].mxu0 %v2252
      %v3218 = vpop.f32.mrb[0].mxu0
      %v3219 = vadd.f32 %v2994, %v3218
      %v3220 = vpop.f32.mrb[0].mxu0
      %3221 = vmatprep.mubr.f32.mxu0 0.0
      %3222 = vmatmul.mubr.f32.gmra.mrb[0].mxu0 %v2253
      %v3223 = vpop.f32.mrb[0].mxu0
      %v3224 = vadd.f32 %v2999, %v3223
      %v3225 = vpop.f32.mrb[0].mxu0
      %3226 = vmatprep.mubr.f32.mxu0 0.0
      %3227 = vmatmul.mubr.f32.gmra.mrb[0].mxu0 %v2254
      %v3228 = vpop.f32.mrb[0].mxu0
      %v3229 = vadd.f32 %v3004, %v3228
      %v3230 = vpop.f32.mrb[0].mxu0
      %3231 = vmatprep.mubr.f32.mxu0 0.0
      %3232 = vmatmul.mubr.f32.gmra.mrb[0].mxu0 %v2255
      %v3233 = vpop.f32.mrb[0].mxu0
      %v3234 = vadd.f32 %v3009, %v3233
      %v3235 = vpop.f32.mrb[0].mxu0
      %3236 = vmatprep.mubr.f32.mxu0 0.0
      %3237 = vmatmul.mubr.f32.gmra.mrb[0].mxu0 %v2256
      %v3238 = vpop.f32.mrb[0].mxu0
      %v3239 = vadd.f32 %v3014, %v3238
      %v3240 = vpop.f32.mrb[0].mxu0
      %3241 = vmatprep.mubr.f32.mxu0 0.0
      %3242 = vmatmul.mubr.f32.gmra.mrb[0].mxu0 %v2257
      %v3243 = vpop.f32.mrb[0].mxu0
      %v3244 = vadd.f32 %v3019, %v3243
      %v3245 = vpop.f32.mrb[0].mxu0
      %3246 = vmatprep.mubr.f32.mxu0 0.0
      %3247 = vmatmul.mubr.f32.gmra.mrb[0].mxu0 %v2258
      %v3248 = vpop.f32.mrb[0].mxu0
      %v3249 = vadd.f32 %v3024, %v3248
      %v3250 = vpop.f32.mrb[0].mxu0
      %3251 = vmatprep.mubr.f32.mxu0 0.0
      %3252 = vmatmul.mubr.f32.gmra.mrb[0].mxu0 %v2259
      %v3253 = vpop.f32.mrb[0].mxu0
      %v3254 = vadd.f32 %v3029, %v3253
      %v3255 = vpop.f32.mrb[0].mxu0
      %3256 = vmatprep.mubr.f32.mxu0 0.0
      %3257 = vmatmul.mubr.f32.gmra.mrb[0].mxu0 %v2260
      %v3258 = vpop.f32.mrb[0].mxu0
      %v3259 = vadd.f32 %v3034, %v3258
      %v3260 = vpop.f32.mrb[0].mxu0
      %3261 = vdwg.mxu0
      %s3262 = scalar_lea.vmem %s5, 768
      %v3263 = vld [vmem:[%s3262] sm:$0xff]
      %v3264 = vld [vmem:[%s3262 + $0x8] sm:$0xff]
      %v3265 = vld [vmem:[%s3262 + $0x10] sm:$0xff]
      %v3266 = vld [vmem:[%s3262 + $0x18] sm:$0xff]
      %v3267 = vld [vmem:[%s3262 + $0x20] sm:$0xff]
      %v3268 = vld [vmem:[%s3262 + $0x28] sm:$0xff]
      %v3269 = vld [vmem:[%s3262 + $0x30] sm:$0xff]
      %v3270 = vld [vmem:[%s3262 + $0x38] sm:$0xff]
      %v3271 = vld [vmem:[%s3262 + $0x40] sm:$0xff]
      %v3272 = vld [vmem:[%s3262 + $0x48] sm:$0xff]
      %v3273 = vld [vmem:[%s3262 + $0x50] sm:$0xff]
      %v3274 = vld [vmem:[%s3262 + $0x58] sm:$0xff]
      %v3275 = vld [vmem:[%s3262 + $0x60] sm:$0xff]
      %v3276 = vld [vmem:[%s3262 + $0x68] sm:$0xff]
      %v3277 = vld [vmem:[%s3262 + $0x70] sm:$0xff]
      %v3278 = vld [vmem:[%s3262 + $0x78] sm:$0xff]
      %v3279 = vld [vmem:[%s3262 + $0x80] sm:$0xff]
      %v3280 = vld [vmem:[%s3262 + $0x88] sm:$0xff]
      %v3281 = vld [vmem:[%s3262 + $0x90] sm:$0xff]
      %v3282 = vld [vmem:[%s3262 + $0x98] sm:$0xff]
      %v3283 = vld [vmem:[%s3262 + $0xa0] sm:$0xff]
      %v3284 = vld [vmem:[%s3262 + $0xa8] sm:$0xff]
      %v3285 = vld [vmem:[%s3262 + $0xb0] sm:$0xff]
      %v3286 = vld [vmem:[%s3262 + $0xb8] sm:$0xff]
      %v3287 = vld [vmem:[%s3262 + $0xc0] sm:$0xff]
      %v3288 = vld [vmem:[%s3262 + $0xc8] sm:$0xff]
      %v3289 = vld [vmem:[%s3262 + $0xd0] sm:$0xff]
      %v3290 = vld [vmem:[%s3262 + $0xd8] sm:$0xff]
      %v3291 = vld [vmem:[%s3262 + $0xe0] sm:$0xff]
      %v3292 = vld [vmem:[%s3262 + $0xe8] sm:$0xff]
      %v3293 = vld [vmem:[%s3262 + $0xf0] sm:$0xff]
      %v3294 = vld [vmem:[%s3262 + $0xf8] sm:$0xff]
      %v3295 = vld [vmem:[%s3262 + $0x100] sm:$0xff]
      %v3296 = vld [vmem:[%s3262 + $0x108] sm:$0xff]
      %v3297 = vld [vmem:[%s3262 + $0x110] sm:$0xff]
      %v3298 = vld [vmem:[%s3262 + $0x118] sm:$0xff]
      %v3299 = vld [vmem:[%s3262 + $0x120] sm:$0xff]
      %v3300 = vld [vmem:[%s3262 + $0x128] sm:$0xff]
      %v3301 = vld [vmem:[%s3262 + $0x130] sm:$0xff]
      %v3302 = vld [vmem:[%s3262 + $0x138] sm:$0xff]
      %v3303 = vld [vmem:[%s3262 + $0x140] sm:$0xff]
      %v3304 = vld [vmem:[%s3262 + $0x148] sm:$0xff]
      %v3305 = vld [vmem:[%s3262 + $0x150] sm:$0xff]
      %v3306 = vld [vmem:[%s3262 + $0x158] sm:$0xff]
      %v3307 = vld [vmem:[%s3262 + $0x160] sm:$0xff]
      %v3308 = vld [vmem:[%s3262 + $0x168] sm:$0xff]
      %v3309 = vld [vmem:[%s3262 + $0x170] sm:$0xff]
      %v3310 = vld [vmem:[%s3262 + $0x178] sm:$0xff]
      %3311 = vmatprep.subr.mxu0 0.0
      %3312 = vmatpush1.msra.mxu0 %v3263
      %3313 = vmatprep.subr.mxu0 0.0
      %3314 = vmatpush1.msra.mxu0 %v3264
      %3315 = vmatprep.subr.mxu0 0.0
      %3316 = vmatpush1.msra.mxu0 %v3265
      %3317 = vmatprep.subr.mxu0 0.0
      %3318 = vmatpush1.msra.mxu0 %v3266
      %3319 = vmatprep.subr.mxu0 0.0
      %3320 = vmatpush1.msra.mxu0 %v3267
      %3321 = vmatprep.subr.mxu0 0.0
      %3322 = vmatpush1.msra.mxu0 %v3268
      %3323 = vmatprep.subr.mxu0 0.0
      %3324 = vmatpush1.msra.mxu0 %v3269
      %3325 = vmatprep.subr.mxu0 0.0
      %3326 = vmatpush1.msra.mxu0 %v3270
      %3327 = vmatprep.subr.mxu0 0.0
      %3328 = vmatpush1.msra.mxu0 %v3271
      %3329 = vmatprep.subr.mxu0 0.0
      %3330 = vmatpush1.msra.mxu0 %v3272
      %3331 = vmatprep.subr.mxu0 0.0
      %3332 = vmatpush1.msra.mxu0 %v3273
      %3333 = vmatprep.subr.mxu0 0.0
      %3334 = vmatpush1.msra.mxu0 %v3274
      %3335 = vmatprep.subr.mxu0 0.0
      %3336 = vmatpush1.msra.mxu0 %v3275
      %3337 = vmatprep.subr.mxu0 0.0
      %3338 = vmatpush1.msra.mxu0 %v3276
      %3339 = vmatprep.subr.mxu0 0.0
      %3340 = vmatpush1.msra.mxu0 %v3277
      %3341 = vmatprep.subr.mxu0 0.0
      %3342 = vmatpush1.msra.mxu0 %v3278
      %3343 = vmatprep.subr.mxu0 0.0
      %3344 = vmatpush1.msra.mxu0 %v3279
      %3345 = vmatprep.subr.mxu0 0.0
      %3346 = vmatpush1.msra.mxu0 %v3280
      %3347 = vmatprep.subr.mxu0 0.0
      %3348 = vmatpush1.msra.mxu0 %v3281
      %3349 = vmatprep.subr.mxu0 0.0
      %3350 = vmatpush1.msra.mxu0 %v3282
      %3351 = vmatprep.subr.mxu0 0.0
      %3352 = vmatpush1.msra.mxu0 %v3283
      %3353 = vmatprep.subr.mxu0 0.0
      %3354 = vmatpush1.msra.mxu0 %v3284
      %3355 = vmatprep.subr.mxu0 0.0
      %3356 = vmatpush1.msra.mxu0 %v3285
      %3357 = vmatprep.subr.mxu0 0.0
      %3358 = vmatpush1.msra.mxu0 %v3286
      %3359 = vmatprep.subr.mxu0 0.0
      %3360 = vmatpush1.msra.mxu0 %v3287
      %3361 = vmatprep.subr.mxu0 0.0
      %3362 = vmatpush1.msra.mxu0 %v3288
      %3363 = vmatprep.subr.mxu0 0.0
      %3364 = vmatpush1.msra.mxu0 %v3289
      %3365 = vmatprep.subr.mxu0 0.0
      %3366 = vmatpush1.msra.mxu0 %v3290
      %3367 = vmatprep.subr.mxu0 0.0
      %3368 = vmatpush1.msra.mxu0 %v3291
      %3369 = vmatprep.subr.mxu0 0.0
      %3370 = vmatpush1.msra.mxu0 %v3292
      %3371 = vmatprep.subr.mxu0 0.0
      %3372 = vmatpush1.msra.mxu0 %v3293
      %3373 = vmatprep.subr.mxu0 0.0
      %3374 = vmatpush1.msra.mxu0 %v3294
      %3375 = vmatprep.mubr.f32.mxu0 %v1367
      %3376 = vmatmul.mubr.f32.gmra.mrb[0].mxu0 %v2016
      %v3377 = vpop.f32.mrb[0].mxu0
      %v3378 = vadd.f32 0.0, %v3377
      %v3379 = vpop.f32.mrb[0].mxu0
      %3380 = vmatprep.mubr.f32.mxu0 %v1368
      %3381 = vmatmul.mubr.f32.gmra.mrb[0].mxu0 %v2017
      %v3382 = vpop.f32.mrb[0].mxu0
      %v3383 = vadd.f32 0.0, %v3382
      %v3384 = vpop.f32.mrb[0].mxu0
      %3385 = vmatprep.mubr.f32.mxu0 %v1369
      %3386 = vmatmul.mubr.f32.gmra.mrb[0].mxu0 %v2018
      %v3387 = vpop.f32.mrb[0].mxu0
      %v3388 = vadd.f32 0.0, %v3387
      %v3389 = vpop.f32.mrb[0].mxu0
      %3390 = vmatprep.mubr.f32.mxu0 %v1370
      %3391 = vmatmul.mubr.f32.gmra.mrb[0].mxu0 %v2019
      %v3392 = vpop.f32.mrb[0].mxu0
      %v3393 = vadd.f32 0.0, %v3392
      %v3394 = vpop.f32.mrb[0].mxu0
      %3395 = vmatprep.mubr.f32.mxu0 %v1371
      %3396 = vmatmul.mubr.f32.gmra.mrb[0].mxu0 %v2020
      %v3397 = vpop.f32.mrb[0].mxu0
      %v3398 = vadd.f32 0.0, %v3397
      %v3399 = vpop.f32.mrb[0].mxu0
      %3400 = vmatprep.mubr.f32.mxu0 %v1372
      %3401 = vmatmul.mubr.f32.gmra.mrb[0].mxu0 %v2021
      %v3402 = vpop.f32.mrb[0].mxu0
      %v3403 = vadd.f32 0.0, %v3402
      %v3404 = vpop.f32.mrb[0].mxu0
      %3405 = vmatprep.mubr.f32.mxu0 %v1373
      %3406 = vmatmul.mubr.f32.gmra.mrb[0].mxu0 %v2022
      %v3407 = vpop.f32.mrb[0].mxu0
      %v3408 = vadd.f32 0.0, %v3407
      %v3409 = vpop.f32.mrb[0].mxu0
      %3410 = vmatprep.mubr.f32.mxu0 %v1374
      %3411 = vmatmul.mubr.f32.gmra.mrb[0].mxu0 %v2023
      %v3412 = vpop.f32.mrb[0].mxu0
      %v3413 = vadd.f32 0.0, %v3412
      %v3414 = vpop.f32.mrb[0].mxu0
      %3415 = vmatprep.mubr.f32.mxu0 %v1375
      %3416 = vmatmul.mubr.f32.gmra.mrb[0].mxu0 %v2024
      %v3417 = vpop.f32.mrb[0].mxu0
      %v3418 = vadd.f32 0.0, %v3417
      %v3419 = vpop.f32.mrb[0].mxu0
      %3420 = vmatprep.mubr.f32.mxu0 %v1376
      %3421 = vmatmul.mubr.f32.gmra.mrb[0].mxu0 %v2025
      %v3422 = vpop.f32.mrb[0].mxu0
      %v3423 = vadd.f32 0.0, %v3422
      %v3424 = vpop.f32.mrb[0].mxu0
      %3425 = vmatprep.mubr.f32.mxu0 %v1377
      %3426 = vmatmul.mubr.f32.gmra.mrb[0].mxu0 %v2026
      %v3427 = vpop.f32.mrb[0].mxu0
      %v3428 = vadd.f32 0.0, %v3427
      %v3429 = vpop.f32.mrb[0].mxu0
      %3430 = vmatprep.mubr.f32.mxu0 %v1378
      %3431 = vmatmul.mubr.f32.gmra.mrb[0].mxu0 %v2027
      %v3432 = vpop.f32.mrb[0].mxu0
      %v3433 = vadd.f32 0.0, %v3432
      %v3434 = vpop.f32.mrb[0].mxu0
      %3435 = vmatprep.mubr.f32.mxu0 %v1379
      %3436 = vmatmul.mubr.f32.gmra.mrb[0].mxu0 %v2028
      %v3437 = vpop.f32.mrb[0].mxu0
      %v3438 = vadd.f32 0.0, %v3437
      %v3439 = vpop.f32.mrb[0].mxu0
      %3440 = vmatprep.mubr.f32.mxu0 %v1380
      %3441 = vmatmul.mubr.f32.gmra.mrb[0].mxu0 %v2029
      %v3442 = vpop.f32.mrb[0].mxu0
      %v3443 = vadd.f32 0.0, %v3442
      %v3444 = vpop.f32.mrb[0].mxu0
      %3445 = vmatprep.mubr.f32.mxu0 %v1381
      %3446 = vmatmul.mubr.f32.gmra.mrb[0].mxu0 %v2030
      %v3447 = vpop.f32.mrb[0].mxu0
      %v3448 = vadd.f32 0.0, %v3447
      %v3449 = vpop.f32.mrb[0].mxu0
      %3450 = vmatprep.mubr.f32.mxu0 %v1382
      %3451 = vmatmul.mubr.f32.gmra.mrb[0].mxu0 %v2031
      %v3452 = vpop.f32.mrb[0].mxu0
      %v3453 = vadd.f32 0.0, %v3452
      %v3454 = vpop.f32.mrb[0].mxu0
      %3455 = vmatprep.mubr.f32.mxu0 %v1383
      %3456 = vmatmul.mubr.f32.gmra.mrb[0].mxu0 %v2032
      %v3457 = vpop.f32.mrb[0].mxu0
      %v3458 = vadd.f32 0.0, %v3457
      %v3459 = vpop.f32.mrb[0].mxu0
      %3460 = vmatprep.mubr.f32.mxu0 %v1384
      %3461 = vmatmul.mubr.f32.gmra.mrb[0].mxu0 %v2033
      %v3462 = vpop.f32.mrb[0].mxu0
      %v3463 = vadd.f32 0.0, %v3462
      %v3464 = vpop.f32.mrb[0].mxu0
      %3465 = vmatprep.mubr.f32.mxu0 %v1385
      %3466 = vmatmul.mubr.f32.gmra.mrb[0].mxu0 %v2034
      %v3467 = vpop.f32.mrb[0].mxu0
      %v3468 = vadd.f32 0.0, %v3467
      %v3469 = vpop.f32.mrb[0].mxu0
      %3470 = vmatprep.mubr.f32.mxu0 %v1386
      %3471 = vmatmul.mubr.f32.gmra.mrb[0].mxu0 %v2035
      %v3472 = vpop.f32.mrb[0].mxu0
      %v3473 = vadd.f32 0.0, %v3472
      %v3474 = vpop.f32.mrb[0].mxu0
      %3475 = vmatprep.mubr.f32.mxu0 %v1387
      %3476 = vmatmul.mubr.f32.gmra.mrb[0].mxu0 %v2036
      %v3477 = vpop.f32.mrb[0].mxu0
      %v3478 = vadd.f32 0.0, %v3477
      %v3479 = vpop.f32.mrb[0].mxu0
      %3480 = vmatprep.mubr.f32.mxu0 %v1388
      %3481 = vmatmul.mubr.f32.gmra.mrb[0].mxu0 %v2037
      %v3482 = vpop.f32.mrb[0].mxu0
      %v3483 = vadd.f32 0.0, %v3482
      %v3484 = vpop.f32.mrb[0].mxu0
      %3485 = vmatprep.mubr.f32.mxu0 %v1389
      %3486 = vmatmul.mubr.f32.gmra.mrb[0].mxu0 %v2038
      %v3487 = vpop.f32.mrb[0].mxu0
      %v3488 = vadd.f32 0.0, %v3487
      %v3489 = vpop.f32.mrb[0].mxu0
      %3490 = vmatprep.mubr.f32.mxu0 %v1390
      %3491 = vmatmul.mubr.f32.gmra.mrb[0].mxu0 %v2039
      %v3492 = vpop.f32.mrb[0].mxu0
      %v3493 = vadd.f32 0.0, %v3492
      %v3494 = vpop.f32.mrb[0].mxu0
      %3495 = vmatprep.mubr.f32.mxu0 %v1391
      %3496 = vmatmul.mubr.f32.gmra.mrb[0].mxu0 %v2040
      %v3497 = vpop.f32.mrb[0].mxu0
      %v3498 = vadd.f32 0.0, %v3497
      %v3499 = vpop.f32.mrb[0].mxu0
      %3500 = vmatprep.mubr.f32.mxu0 %v1392
      %3501 = vmatmul.mubr.f32.gmra.mrb[0].mxu0 %v2041
      %v3502 = vpop.f32.mrb[0].mxu0
      %v3503 = vadd.f32 0.0, %v3502
      %v3504 = vpop.f32.mrb[0].mxu0
      %3505 = vmatprep.mubr.f32.mxu0 %v1393
      %3506 = vmatmul.mubr.f32.gmra.mrb[0].mxu0 %v2042
      %v3507 = vpop.f32.mrb[0].mxu0
      %v3508 = vadd.f32 0.0, %v3507
      %v3509 = vpop.f32.mrb[0].mxu0
      %3510 = vmatprep.mubr.f32.mxu0 %v1394
      %3511 = vmatmul.mubr.f32.gmra.mrb[0].mxu0 %v2043
      %v3512 = vpop.f32.mrb[0].mxu0
      %v3513 = vadd.f32 0.0, %v3512
      %v3514 = vpop.f32.mrb[0].mxu0
      %3515 = vmatprep.mubr.f32.mxu0 %v1395
      %3516 = vmatmul.mubr.f32.gmra.mrb[0].mxu0 %v2044
      %v3517 = vpop.f32.mrb[0].mxu0
      %v3518 = vadd.f32 0.0, %v3517
      %v3519 = vpop.f32.mrb[0].mxu0
      %3520 = vmatprep.mubr.f32.mxu0 %v1396
      %3521 = vmatmul.mubr.f32.gmra.mrb[0].mxu0 %v2045
      %v3522 = vpop.f32.mrb[0].mxu0
      %v3523 = vadd.f32 0.0, %v3522
      %v3524 = vpop.f32.mrb[0].mxu0
      %3525 = vmatprep.mubr.f32.mxu0 %v1397
      %3526 = vmatmul.mubr.f32.gmra.mrb[0].mxu0 %v2046
      %v3527 = vpop.f32.mrb[0].mxu0
      %v3528 = vadd.f32 0.0, %v3527
      %v3529 = vpop.f32.mrb[0].mxu0
      %3530 = vmatprep.mubr.f32.mxu0 %v1398
      %3531 = vmatmul.mubr.f32.gmra.mrb[0].mxu0 %v2047
      %v3532 = vpop.f32.mrb[0].mxu0
      %v3533 = vadd.f32 0.0, %v3532
      %v3534 = vpop.f32.mrb[0].mxu0
      %3535 = vdwg.mxu0
      %3536 = vmatprep.subr.mxu0 0.0
      %3537 = vmatpush1.msra.mxu0 %v3295
      %3538 = vmatprep.subr.mxu0 0.0
      %3539 = vmatpush1.msra.mxu0 %v3296
      %3540 = vmatprep.subr.mxu0 0.0
      %3541 = vmatpush1.msra.mxu0 %v3297
      %3542 = vmatprep.subr.mxu0 0.0
      %3543 = vmatpush1.msra.mxu0 %v3298
      %3544 = vmatprep.subr.mxu0 0.0
      %3545 = vmatpush1.msra.mxu0 %v3299
      %3546 = vmatprep.subr.mxu0 0.0
      %3547 = vmatpush1.msra.mxu0 %v3300
      %3548 = vmatprep.subr.mxu0 0.0
      %3549 = vmatpush1.msra.mxu0 %v3301
      %3550 = vmatprep.subr.mxu0 0.0
      %3551 = vmatpush1.msra.mxu0 %v3302
      %3552 = vmatprep.subr.mxu0 0.0
      %3553 = vmatpush1.msra.mxu0 %v3303
      %3554 = vmatprep.subr.mxu0 0.0
      %3555 = vmatpush1.msra.mxu0 %v3304
      %3556 = vmatprep.subr.mxu0 0.0
      %3557 = vmatpush1.msra.mxu0 %v3305
      %3558 = vmatprep.subr.mxu0 0.0
      %3559 = vmatpush1.msra.mxu0 %v3306
      %3560 = vmatprep.subr.mxu0 0.0
      %3561 = vmatpush1.msra.mxu0 %v3307
      %3562 = vmatprep.subr.mxu0 0.0
      %3563 = vmatpush1.msra.mxu0 %v3308
      %3564 = vmatprep.subr.mxu0 0.0
      %3565 = vmatpush1.msra.mxu0 %v3309
      %3566 = vmatprep.subr.mxu0 0.0
      %3567 = vmatpush1.msra.mxu0 %v3310
      %3568 = vmatprep.subr.mxu0 0.0
      %3569 = vmatpush1.msra.mxu0 0.0
      %3570 = vmatprep.subr.mxu0 0.0
      %3571 = vmatpush1.msra.mxu0 0.0
      %3572 = vmatprep.subr.mxu0 0.0
      %3573 = vmatpush1.msra.mxu0 0.0
      %3574 = vmatprep.subr.mxu0 0.0
      %3575 = vmatpush1.msra.mxu0 0.0
      %3576 = vmatprep.subr.mxu0 0.0
      %3577 = vmatpush1.msra.mxu0 0.0
      %3578 = vmatprep.subr.mxu0 0.0
      %3579 = vmatpush1.msra.mxu0 0.0
      %3580 = vmatprep.subr.mxu0 0.0
      %3581 = vmatpush1.msra.mxu0 0.0
      %3582 = vmatprep.subr.mxu0 0.0
      %3583 = vmatpush1.msra.mxu0 0.0
      %3584 = vmatprep.subr.mxu0 0.0
      %3585 = vmatpush1.msra.mxu0 0.0
      %3586 = vmatprep.subr.mxu0 0.0
      %3587 = vmatpush1.msra.mxu0 0.0
      %3588 = vmatprep.subr.mxu0 0.0
      %3589 = vmatpush1.msra.mxu0 0.0
      %3590 = vmatprep.subr.mxu0 0.0
      %3591 = vmatpush1.msra.mxu0 0.0
      %3592 = vmatprep.subr.mxu0 0.0
      %3593 = vmatpush1.msra.mxu0 0.0
      %3594 = vmatprep.subr.mxu0 0.0
      %3595 = vmatpush1.msra.mxu0 0.0
      %3596 = vmatprep.subr.mxu0 0.0
      %3597 = vmatpush1.msra.mxu0 0.0
      %3598 = vmatprep.subr.mxu0 0.0
      %3599 = vmatpush1.msra.mxu0 0.0
      %3600 = vmatprep.mubr.f32.mxu0 0.0
      %3601 = vmatmul.mubr.f32.gmra.mrb[0].mxu0 %v2233
      %v3602 = vpop.f32.mrb[0].mxu0
      %v3603 = vadd.f32 %v3378, %v3602
      %v3604 = vpop.f32.mrb[0].mxu0
      %3605 = vmatprep.mubr.f32.mxu0 0.0
      %3606 = vmatmul.mubr.f32.gmra.mrb[0].mxu0 %v2234
      %v3607 = vpop.f32.mrb[0].mxu0
      %v3608 = vadd.f32 %v3383, %v3607
      %v3609 = vpop.f32.mrb[0].mxu0
      %3610 = vmatprep.mubr.f32.mxu0 0.0
      %3611 = vmatmul.mubr.f32.gmra.mrb[0].mxu0 %v2235
      %v3612 = vpop.f32.mrb[0].mxu0
      %v3613 = vadd.f32 %v3388, %v3612
      %v3614 = vpop.f32.mrb[0].mxu0
      %3615 = vmatprep.mubr.f32.mxu0 0.0
      %3616 = vmatmul.mubr.f32.gmra.mrb[0].mxu0 %v2236
      %v3617 = vpop.f32.mrb[0].mxu0
      %v3618 = vadd.f32 %v3393, %v3617
      %v3619 = vpop.f32.mrb[0].mxu0
      %3620 = vmatprep.mubr.f32.mxu0 0.0
      %3621 = vmatmul.mubr.f32.gmra.mrb[0].mxu0 %v2237
      %v3622 = vpop.f32.mrb[0].mxu0
      %v3623 = vadd.f32 %v3398, %v3622
      %v3624 = vpop.f32.mrb[0].mxu0
      %3625 = vmatprep.mubr.f32.mxu0 0.0
      %3626 = vmatmul.mubr.f32.gmra.mrb[0].mxu0 %v2238
      %v3627 = vpop.f32.mrb[0].mxu0
      %v3628 = vadd.f32 %v3403, %v3627
      %v3629 = vpop.f32.mrb[0].mxu0
      %3630 = vmatprep.mubr.f32.mxu0 0.0
      %3631 = vmatmul.mubr.f32.gmra.mrb[0].mxu0 %v2239
      %v3632 = vpop.f32.mrb[0].mxu0
      %v3633 = vadd.f32 %v3408, %v3632
      %v3634 = vpop.f32.mrb[0].mxu0
      %3635 = vmatprep.mubr.f32.mxu0 0.0
      %3636 = vmatmul.mubr.f32.gmra.mrb[0].mxu0 %v2240
      %v3637 = vpop.f32.mrb[0].mxu0
      %v3638 = vadd.f32 %v3413, %v3637
      %v3639 = vpop.f32.mrb[0].mxu0
      %3640 = vmatprep.mubr.f32.mxu0 0.0
      %3641 = vmatmul.mubr.f32.gmra.mrb[0].mxu0 %v2241
      %v3642 = vpop.f32.mrb[0].mxu0
      %v3643 = vadd.f32 %v3418, %v3642
      %v3644 = vpop.f32.mrb[0].mxu0
      %3645 = vmatprep.mubr.f32.mxu0 0.0
      %3646 = vmatmul.mubr.f32.gmra.mrb[0].mxu0 %v2242
      %v3647 = vpop.f32.mrb[0].mxu0
      %v3648 = vadd.f32 %v3423, %v3647
      %v3649 = vpop.f32.mrb[0].mxu0
      %3650 = vmatprep.mubr.f32.mxu0 0.0
      %3651 = vmatmul.mubr.f32.gmra.mrb[0].mxu0 %v2243
      %v3652 = vpop.f32.mrb[0].mxu0
      %v3653 = vadd.f32 %v3428, %v3652
      %v3654 = vpop.f32.mrb[0].mxu0
      %3655 = vmatprep.mubr.f32.mxu0 0.0
      %3656 = vmatmul.mubr.f32.gmra.mrb[0].mxu0 %v2244
      %v3657 = vpop.f32.mrb[0].mxu0
      %v3658 = vadd.f32 %v3433, %v3657
      %v3659 = vpop.f32.mrb[0].mxu0
      %3660 = vmatprep.mubr.f32.mxu0 0.0
      %3661 = vmatmul.mubr.f32.gmra.mrb[0].mxu0 %v2245
      %v3662 = vpop.f32.mrb[0].mxu0
      %v3663 = vadd.f32 %v3438, %v3662
      %v3664 = vpop.f32.mrb[0].mxu0
      %3665 = vmatprep.mubr.f32.mxu0 0.0
      %3666 = vmatmul.mubr.f32.gmra.mrb[0].mxu0 %v2246
      %v3667 = vpop.f32.mrb[0].mxu0
      %v3668 = vadd.f32 %v3443, %v3667
      %v3669 = vpop.f32.mrb[0].mxu0
      %3670 = vmatprep.mubr.f32.mxu0 0.0
      %3671 = vmatmul.mubr.f32.gmra.mrb[0].mxu0 %v2247
      %v3672 = vpop.f32.mrb[0].mxu0
      %v3673 = vadd.f32 %v3448, %v3672
      %v3674 = vpop.f32.mrb[0].mxu0
      %3675 = vmatprep.mubr.f32.mxu0 0.0
      %3676 = vmatmul.mubr.f32.gmra.mrb[0].mxu0 %v2248
      %v3677 = vpop.f32.mrb[0].mxu0
      %v3678 = vadd.f32 %v3453, %v3677
      %v3679 = vpop.f32.mrb[0].mxu0
      %3680 = vmatprep.mubr.f32.mxu0 0.0
      %3681 = vmatmul.mubr.f32.gmra.mrb[0].mxu0 %v2249
      %v3682 = vpop.f32.mrb[0].mxu0
      %v3683 = vadd.f32 %v3458, %v3682
      %v3684 = vpop.f32.mrb[0].mxu0
      %3685 = vmatprep.mubr.f32.mxu0 0.0
      %3686 = vmatmul.mubr.f32.gmra.mrb[0].mxu0 %v2250
      %v3687 = vpop.f32.mrb[0].mxu0
      %v3688 = vadd.f32 %v3463, %v3687
      %v3689 = vpop.f32.mrb[0].mxu0
      %3690 = vmatprep.mubr.f32.mxu0 0.0
      %3691 = vmatmul.mubr.f32.gmra.mrb[0].mxu0 %v2251
      %v3692 = vpop.f32.mrb[0].mxu0
      %v3693 = vadd.f32 %v3468, %v3692
      %v3694 = vpop.f32.mrb[0].mxu0
      %3695 = vmatprep.mubr.f32.mxu0 0.0
      %3696 = vmatmul.mubr.f32.gmra.mrb[0].mxu0 %v2252
      %v3697 = vpop.f32.mrb[0].mxu0
      %v3698 = vadd.f32 %v3473, %v3697
      %v3699 = vpop.f32.mrb[0].mxu0
      %3700 = vmatprep.mubr.f32.mxu0 0.0
      %3701 = vmatmul.mubr.f32.gmra.mrb[0].mxu0 %v2253
      %v3702 = vpop.f32.mrb[0].mxu0
      %v3703 = vadd.f32 %v3478, %v3702
      %v3704 = vpop.f32.mrb[0].mxu0
      %3705 = vmatprep.mubr.f32.mxu0 0.0
      %3706 = vmatmul.mubr.f32.gmra.mrb[0].mxu0 %v2254
      %v3707 = vpop.f32.mrb[0].mxu0
      %v3708 = vadd.f32 %v3483, %v3707
      %v3709 = vpop.f32.mrb[0].mxu0
      %3710 = vmatprep.mubr.f32.mxu0 0.0
      %3711 = vmatmul.mubr.f32.gmra.mrb[0].mxu0 %v2255
      %v3712 = vpop.f32.mrb[0].mxu0
      %v3713 = vadd.f32 %v3488, %v3712
      %v3714 = vpop.f32.mrb[0].mxu0
      %3715 = vmatprep.mubr.f32.mxu0 0.0
      %3716 = vmatmul.mubr.f32.gmra.mrb[0].mxu0 %v2256
      %v3717 = vpop.f32.mrb[0].mxu0
      %v3718 = vadd.f32 %v3493, %v3717
      %v3719 = vpop.f32.mrb[0].mxu0
      %3720 = vmatprep.mubr.f32.mxu0 0.0
      %3721 = vmatmul.mubr.f32.gmra.mrb[0].mxu0 %v2257
      %v3722 = vpop.f32.mrb[0].mxu0
      %v3723 = vadd.f32 %v3498, %v3722
      %v3724 = vpop.f32.mrb[0].mxu0
      %3725 = vmatprep.mubr.f32.mxu0 0.0
      %3726 = vmatmul.mubr.f32.gmra.mrb[0].mxu0 %v2258
      %v3727 = vpop.f32.mrb[0].mxu0
      %v3728 = vadd.f32 %v3503, %v3727
      %v3729 = vpop.f32.mrb[0].mxu0
      %3730 = vmatprep.mubr.f32.mxu0 0.0
      %3731 = vmatmul.mubr.f32.gmra.mrb[0].mxu0 %v2259
      %v3732 = vpop.f32.mrb[0].mxu0
      %v3733 = vadd.f32 %v3508, %v3732
      %v3734 = vpop.f32.mrb[0].mxu0
      %3735 = vmatprep.mubr.f32.mxu0 0.0
      %3736 = vmatmul.mubr.f32.gmra.mrb[0].mxu0 %v2260
      %v3737 = vpop.f32.mrb[0].mxu0
      %v3738 = vadd.f32 %v3513, %v3737
      %v3739 = vpop.f32.mrb[0].mxu0
      %3740 = vmatprep.mubr.f32.mxu0 0.0
      %3741 = vmatmul.mubr.f32.gmra.mrb[0].mxu0 %v2261
      %v3742 = vpop.f32.mrb[0].mxu0
      %v3743 = vadd.f32 %v3518, %v3742
      %v3744 = vpop.f32.mrb[0].mxu0
      %3745 = vmatprep.mubr.f32.mxu0 0.0
      %3746 = vmatmul.mubr.f32.gmra.mrb[0].mxu0 %v2262
      %v3747 = vpop.f32.mrb[0].mxu0
      %v3748 = vadd.f32 %v3523, %v3747
      %v3749 = vpop.f32.mrb[0].mxu0
      %3750 = vmatprep.mubr.f32.mxu0 0.0
      %3751 = vmatmul.mubr.f32.gmra.mrb[0].mxu0 %v2263
      %v3752 = vpop.f32.mrb[0].mxu0
      %v3753 = vadd.f32 %v3528, %v3752
      %v3754 = vpop.f32.mrb[0].mxu0
      %3755 = vmatprep.mubr.f32.mxu0 0.0
      %3756 = vmatmul.mubr.f32.gmra.mrb[0].mxu0 %v2264
      %v3757 = vpop.f32.mrb[0].mxu0
      %v3758 = vadd.f32 %v3533, %v3757
      %v3759 = vpop.f32.mrb[0].mxu0
      %3760 = vdwg.mxu0
      %v3761 = vadd.f32 %v3104, %v3603
      %v3762 = vadd.f32 %v3109, %v3608
      %v3763 = vadd.f32 %v3114, %v3613
      %v3764 = vadd.f32 %v3119, %v3618
      %v3765 = vadd.f32 %v3124, %v3623
      %v3766 = vadd.f32 %v3129, %v3628
      %v3767 = vadd.f32 %v3134, %v3633
      %v3768 = vadd.f32 %v3139, %v3638
      %v3769 = vadd.f32 %v3144, %v3643
      %v3770 = vadd.f32 %v3149, %v3648
      %v3771 = vadd.f32 %v3154, %v3653
      %v3772 = vadd.f32 %v3159, %v3658
      %v3773 = vadd.f32 %v3164, %v3663
      %v3774 = vadd.f32 %v3169, %v3668
      %v3775 = vadd.f32 %v3174, %v3673
      %v3776 = vadd.f32 %v3179, %v3678
      %v3777 = vadd.f32 %v3184, %v3683
      %v3778 = vadd.f32 %v3189, %v3688
      %v3779 = vadd.f32 %v3194, %v3693
      %v3780 = vadd.f32 %v3199, %v3698
      %v3781 = vadd.f32 %v3204, %v3703
      %v3782 = vadd.f32 %v3209, %v3708
      %v3783 = vadd.f32 %v3214, %v3713
      %v3784 = vadd.f32 %v3219, %v3718
      %v3785 = vadd.f32 %v3224, %v3723
      %v3786 = vadd.f32 %v3229, %v3728
      %v3787 = vadd.f32 %v3234, %v3733
      %v3788 = vadd.f32 %v3239, %v3738
      %v3789 = vadd.f32 %v3244, %v3743
      %v3790 = vadd.f32 %v3249, %v3748
      %v3791 = vadd.f32 %v3254, %v3753
      %v3792 = vadd.f32 %v3259, %v3758
      %v3793 = vld [vmem:[%s6] sm:$0x1]
      %v3795 = vlaneseq
      %v3796 = vshrl.u32 %v3795, 7
      %v3797 = vsub.s32 0, %v3796
      %v3798 = vrot.slane %v3793, %v3797
      %v3800 = vadd.f32 %v3761, %v3798
      %v3801 = vadd.f32 %v3762, %v3798
      %v3802 = vadd.f32 %v3763, %v3798
      %v3803 = vadd.f32 %v3764, %v3798
      %v3804 = vadd.f32 %v3765, %v3798
      %v3805 = vadd.f32 %v3766, %v3798
      %v3806 = vadd.f32 %v3767, %v3798
      %v3807 = vadd.f32 %v3768, %v3798
      %v3808 = vadd.f32 %v3769, %v3798
      %v3809 = vadd.f32 %v3770, %v3798
      %v3810 = vadd.f32 %v3771, %v3798
      %v3811 = vadd.f32 %v3772, %v3798
      %v3812 = vadd.f32 %v3773, %v3798
      %v3813 = vadd.f32 %v3774, %v3798
      %v3814 = vadd.f32 %v3775, %v3798
      %v3815 = vadd.f32 %v3776, %v3798
      %v3816 = vadd.f32 %v3777, %v3798
      %v3817 = vadd.f32 %v3778, %v3798
      %v3818 = vadd.f32 %v3779, %v3798
      %v3819 = vadd.f32 %v3780, %v3798
      %v3820 = vadd.f32 %v3781, %v3798
      %v3821 = vadd.f32 %v3782, %v3798
      %v3822 = vadd.f32 %v3783, %v3798
      %v3823 = vadd.f32 %v3784, %v3798
      %v3824 = vadd.f32 %v3785, %v3798
      %v3825 = vadd.f32 %v3786, %v3798
      %v3826 = vadd.f32 %v3787, %v3798
      %v3827 = vadd.f32 %v3788, %v3798
      %v3828 = vadd.f32 %v3789, %v3798
      %v3829 = vadd.f32 %v3790, %v3798
      %v3830 = vadd.f32 %v3791, %v3798
      %v3831 = vadd.f32 %v3792, %v3798
      %v3832 = vmax.f32 %v3800, 0.0
      %v3833 = vmax.f32 %v3801, 0.0
      %v3834 = vmax.f32 %v3802, 0.0
      %v3835 = vmax.f32 %v3803, 0.0
      %v3836 = vmax.f32 %v3804, 0.0
      %v3837 = vmax.f32 %v3805, 0.0
      %v3838 = vmax.f32 %v3806, 0.0
      %v3839 = vmax.f32 %v3807, 0.0
      %v3840 = vmax.f32 %v3808, 0.0
      %v3841 = vmax.f32 %v3809, 0.0
      %v3842 = vmax.f32 %v3810, 0.0
      %v3843 = vmax.f32 %v3811, 0.0
      %v3844 = vmax.f32 %v3812, 0.0
      %v3845 = vmax.f32 %v3813, 0.0
      %v3846 = vmax.f32 %v3814, 0.0
      %v3847 = vmax.f32 %v3815, 0.0
      %v3848 = vmax.f32 %v3816, 0.0
      %v3849 = vmax.f32 %v3817, 0.0
      %v3850 = vmax.f32 %v3818, 0.0
      %v3851 = vmax.f32 %v3819, 0.0
      %v3852 = vmax.f32 %v3820, 0.0
      %v3853 = vmax.f32 %v3821, 0.0
      %v3854 = vmax.f32 %v3822, 0.0
      %v3855 = vmax.f32 %v3823, 0.0
      %v3856 = vmax.f32 %v3824, 0.0
      %v3857 = vmax.f32 %v3825, 0.0
      %v3858 = vmax.f32 %v3826, 0.0
      %v3859 = vmax.f32 %v3827, 0.0
      %v3860 = vmax.f32 %v3828, 0.0
      %v3861 = vmax.f32 %v3829, 0.0
      %v3862 = vmax.f32 %v3830, 0.0
      %v3863 = vmax.f32 %v3831, 0.0
      %v3864 = vld [vmem:[%s7] sm:$0xff]
      %v3865 = vld [vmem:[%s7 + $0x8] sm:$0xff]
      %v3866 = vld [vmem:[%s7 + $0x10] sm:$0xff]
      %v3867 = vld [vmem:[%s7 + $0x18] sm:$0xff]
      %v3868 = vld [vmem:[%s7 + $0x20] sm:$0xff]
      %v3869 = vld [vmem:[%s7 + $0x28] sm:$0xff]
      %v3870 = vld [vmem:[%s7 + $0x30] sm:$0xff]
      %v3871 = vld [vmem:[%s7 + $0x38] sm:$0xff]
      %v3872 = vld [vmem:[%s7 + $0x40] sm:$0xff]
      %v3873 = vld [vmem:[%s7 + $0x48] sm:$0xff]
      %v3874 = vld [vmem:[%s7 + $0x50] sm:$0xff]
      %v3875 = vld [vmem:[%s7 + $0x58] sm:$0xff]
      %v3876 = vld [vmem:[%s7 + $0x60] sm:$0xff]
      %v3877 = vld [vmem:[%s7 + $0x68] sm:$0xff]
      %v3878 = vld [vmem:[%s7 + $0x70] sm:$0xff]
      %v3879 = vld [vmem:[%s7 + $0x78] sm:$0xff]
      %v3880 = vld [vmem:[%s8] sm:$0x1]
      %v3882 = vlaneseq
      %v3883 = vshrl.u32 %v3882, 7
      %v3884 = vsub.s32 0, %v3883
      %v3885 = vrot.slane %v3880, %v3884
      %3887 = vmatprep.subr.mxu0 0.0
      %3888 = vmatpush1.msra.mxu0 %v3864
      %3889 = vmatprep.subr.mxu0 0.0
      %3890 = vmatpush1.msra.mxu0 %v3865
      %3891 = vmatprep.subr.mxu0 0.0
      %3892 = vmatpush1.msra.mxu0 %v3866
      %3893 = vmatprep.subr.mxu0 0.0
      %3894 = vmatpush1.msra.mxu0 %v3867
      %3895 = vmatprep.subr.mxu0 0.0
      %3896 = vmatpush1.msra.mxu0 %v3868
      %3897 = vmatprep.subr.mxu0 0.0
      %3898 = vmatpush1.msra.mxu0 %v3869
      %3899 = vmatprep.subr.mxu0 0.0
      %3900 = vmatpush1.msra.mxu0 %v3870
      %3901 = vmatprep.subr.mxu0 0.0
      %3902 = vmatpush1.msra.mxu0 %v3871
      %3903 = vmatprep.subr.mxu0 0.0
      %3904 = vmatpush1.msra.mxu0 %v3872
      %3905 = vmatprep.subr.mxu0 0.0
      %3906 = vmatpush1.msra.mxu0 %v3873
      %3907 = vmatprep.subr.mxu0 0.0
      %3908 = vmatpush1.msra.mxu0 %v3874
      %3909 = vmatprep.subr.mxu0 0.0
      %3910 = vmatpush1.msra.mxu0 %v3875
      %3911 = vmatprep.subr.mxu0 0.0
      %3912 = vmatpush1.msra.mxu0 %v3876
      %3913 = vmatprep.subr.mxu0 0.0
      %3914 = vmatpush1.msra.mxu0 %v3877
      %3915 = vmatprep.subr.mxu0 0.0
      %3916 = vmatpush1.msra.mxu0 %v3878
      %3917 = vmatprep.subr.mxu0 0.0
      %3918 = vmatpush1.msra.mxu0 %v3879
      %3919 = vmatprep.subr.mxu0 0.0
      %3920 = vmatpush1.msra.mxu0 0.0
      %3921 = vmatprep.subr.mxu0 0.0
      %3922 = vmatpush1.msra.mxu0 0.0
      %3923 = vmatprep.subr.mxu0 0.0
      %3924 = vmatpush1.msra.mxu0 0.0
      %3925 = vmatprep.subr.mxu0 0.0
      %3926 = vmatpush1.msra.mxu0 0.0
      %3927 = vmatprep.subr.mxu0 0.0
      %3928 = vmatpush1.msra.mxu0 0.0
      %3929 = vmatprep.subr.mxu0 0.0
      %3930 = vmatpush1.msra.mxu0 0.0
      %3931 = vmatprep.subr.mxu0 0.0
      %3932 = vmatpush1.msra.mxu0 0.0
      %3933 = vmatprep.subr.mxu0 0.0
      %3934 = vmatpush1.msra.mxu0 0.0
      %3935 = vmatprep.subr.mxu0 0.0
      %3936 = vmatpush1.msra.mxu0 0.0
      %3937 = vmatprep.subr.mxu0 0.0
      %3938 = vmatpush1.msra.mxu0 0.0
      %3939 = vmatprep.subr.mxu0 0.0
      %3940 = vmatpush1.msra.mxu0 0.0
      %3941 = vmatprep.subr.mxu0 0.0
      %3942 = vmatpush1.msra.mxu0 0.0
      %3943 = vmatprep.subr.mxu0 0.0
      %3944 = vmatpush1.msra.mxu0 0.0
      %3945 = vmatprep.subr.mxu0 0.0
      %3946 = vmatpush1.msra.mxu0 0.0
      %3947 = vmatprep.subr.mxu0 0.0
      %3948 = vmatpush1.msra.mxu0 0.0
      %3949 = vmatprep.subr.mxu0 0.0
      %3950 = vmatpush1.msra.mxu0 0.0
      %3951 = vmatprep.mubr.f32.mxu0 0.0
      %3952 = vmatmul.mubr.f32.gmra.mrb[0].mxu0 %v3832
      %v3953 = vpop.f32.mrb[0].mxu0
      %v3954 = vadd.f32 %v3885, %v3953
      %v3955 = vpop.f32.mrb[0].mxu0
      %3956 = vmatprep.mubr.f32.mxu0 0.0
      %3957 = vmatmul.mubr.f32.gmra.mrb[0].mxu0 %v3833
      %v3958 = vpop.f32.mrb[0].mxu0
      %v3959 = vadd.f32 %v3885, %v3958
      %v3960 = vpop.f32.mrb[0].mxu0
      %3961 = vmatprep.mubr.f32.mxu0 0.0
      %3962 = vmatmul.mubr.f32.gmra.mrb[0].mxu0 %v3834
      %v3963 = vpop.f32.mrb[0].mxu0
      %v3964 = vadd.f32 %v3885, %v3963
      %v3965 = vpop.f32.mrb[0].mxu0
      %3966 = vmatprep.mubr.f32.mxu0 0.0
      %3967 = vmatmul.mubr.f32.gmra.mrb[0].mxu0 %v3835
      %v3968 = vpop.f32.mrb[0].mxu0
      %v3969 = vadd.f32 %v3885, %v3968
      %v3970 = vpop.f32.mrb[0].mxu0
      %3971 = vmatprep.mubr.f32.mxu0 0.0
      %3972 = vmatmul.mubr.f32.gmra.mrb[0].mxu0 %v3836
      %v3973 = vpop.f32.mrb[0].mxu0
      %v3974 = vadd.f32 %v3885, %v3973
      %v3975 = vpop.f32.mrb[0].mxu0
      %3976 = vmatprep.mubr.f32.mxu0 0.0
      %3977 = vmatmul.mubr.f32.gmra.mrb[0].mxu0 %v3837
      %v3978 = vpop.f32.mrb[0].mxu0
      %v3979 = vadd.f32 %v3885, %v3978
      %v3980 = vpop.f32.mrb[0].mxu0
      %3981 = vmatprep.mubr.f32.mxu0 0.0
      %3982 = vmatmul.mubr.f32.gmra.mrb[0].mxu0 %v3838
      %v3983 = vpop.f32.mrb[0].mxu0
      %v3984 = vadd.f32 %v3885, %v3983
      %v3985 = vpop.f32.mrb[0].mxu0
      %3986 = vmatprep.mubr.f32.mxu0 0.0
      %3987 = vmatmul.mubr.f32.gmra.mrb[0].mxu0 %v3839
      %v3988 = vpop.f32.mrb[0].mxu0
      %v3989 = vadd.f32 %v3885, %v3988
      %v3990 = vpop.f32.mrb[0].mxu0
      %3991 = vmatprep.mubr.f32.mxu0 0.0
      %3992 = vmatmul.mubr.f32.gmra.mrb[0].mxu0 %v3840
      %v3993 = vpop.f32.mrb[0].mxu0
      %v3994 = vadd.f32 %v3885, %v3993
      %v3995 = vpop.f32.mrb[0].mxu0
      %3996 = vmatprep.mubr.f32.mxu0 0.0
      %3997 = vmatmul.mubr.f32.gmra.mrb[0].mxu0 %v3841
      %v3998 = vpop.f32.mrb[0].mxu0
      %v3999 = vadd.f32 %v3885, %v3998
      %v4000 = vpop.f32.mrb[0].mxu0
      %4001 = vmatprep.mubr.f32.mxu0 0.0
      %4002 = vmatmul.mubr.f32.gmra.mrb[0].mxu0 %v3842
      %v4003 = vpop.f32.mrb[0].mxu0
      %v4004 = vadd.f32 %v3885, %v4003
      %v4005 = vpop.f32.mrb[0].mxu0
      %4006 = vmatprep.mubr.f32.mxu0 0.0
      %4007 = vmatmul.mubr.f32.gmra.mrb[0].mxu0 %v3843
      %v4008 = vpop.f32.mrb[0].mxu0
      %v4009 = vadd.f32 %v3885, %v4008
      %v4010 = vpop.f32.mrb[0].mxu0
      %4011 = vmatprep.mubr.f32.mxu0 0.0
      %4012 = vmatmul.mubr.f32.gmra.mrb[0].mxu0 %v3844
      %v4013 = vpop.f32.mrb[0].mxu0
      %v4014 = vadd.f32 %v3885, %v4013
      %v4015 = vpop.f32.mrb[0].mxu0
      %4016 = vmatprep.mubr.f32.mxu0 0.0
      %4017 = vmatmul.mubr.f32.gmra.mrb[0].mxu0 %v3845
      %v4018 = vpop.f32.mrb[0].mxu0
      %v4019 = vadd.f32 %v3885, %v4018
      %v4020 = vpop.f32.mrb[0].mxu0
      %4021 = vmatprep.mubr.f32.mxu0 0.0
      %4022 = vmatmul.mubr.f32.gmra.mrb[0].mxu0 %v3846
      %v4023 = vpop.f32.mrb[0].mxu0
      %v4024 = vadd.f32 %v3885, %v4023
      %v4025 = vpop.f32.mrb[0].mxu0
      %4026 = vmatprep.mubr.f32.mxu0 0.0
      %4027 = vmatmul.mubr.f32.gmra.mrb[0].mxu0 %v3847
      %v4028 = vpop.f32.mrb[0].mxu0
      %v4029 = vadd.f32 %v3885, %v4028
      %v4030 = vpop.f32.mrb[0].mxu0
      %4031 = vmatprep.mubr.f32.mxu0 0.0
      %4032 = vmatmul.mubr.f32.gmra.mrb[0].mxu0 %v3848
      %v4033 = vpop.f32.mrb[0].mxu0
      %v4034 = vadd.f32 %v3885, %v4033
      %v4035 = vpop.f32.mrb[0].mxu0
      %4036 = vmatprep.mubr.f32.mxu0 0.0
      %4037 = vmatmul.mubr.f32.gmra.mrb[0].mxu0 %v3849
      %v4038 = vpop.f32.mrb[0].mxu0
      %v4039 = vadd.f32 %v3885, %v4038
      %v4040 = vpop.f32.mrb[0].mxu0
      %4041 = vmatprep.mubr.f32.mxu0 0.0
      %4042 = vmatmul.mubr.f32.gmra.mrb[0].mxu0 %v3850
      %v4043 = vpop.f32.mrb[0].mxu0
      %v4044 = vadd.f32 %v3885, %v4043
      %v4045 = vpop.f32.mrb[0].mxu0
      %4046 = vmatprep.mubr.f32.mxu0 0.0
      %4047 = vmatmul.mubr.f32.gmra.mrb[0].mxu0 %v3851
      %v4048 = vpop.f32.mrb[0].mxu0
      %v4049 = vadd.f32 %v3885, %v4048
      %v4050 = vpop.f32.mrb[0].mxu0
      %4051 = vmatprep.mubr.f32.mxu0 0.0
      %4052 = vmatmul.mubr.f32.gmra.mrb[0].mxu0 %v3852
      %v4053 = vpop.f32.mrb[0].mxu0
      %v4054 = vadd.f32 %v3885, %v4053
      %v4055 = vpop.f32.mrb[0].mxu0
      %4056 = vmatprep.mubr.f32.mxu0 0.0
      %4057 = vmatmul.mubr.f32.gmra.mrb[0].mxu0 %v3853
      %v4058 = vpop.f32.mrb[0].mxu0
      %v4059 = vadd.f32 %v3885, %v4058
      %v4060 = vpop.f32.mrb[0].mxu0
      %4061 = vmatprep.mubr.f32.mxu0 0.0
      %4062 = vmatmul.mubr.f32.gmra.mrb[0].mxu0 %v3854
      %v4063 = vpop.f32.mrb[0].mxu0
      %v4064 = vadd.f32 %v3885, %v4063
      %v4065 = vpop.f32.mrb[0].mxu0
      %4066 = vmatprep.mubr.f32.mxu0 0.0
      %4067 = vmatmul.mubr.f32.gmra.mrb[0].mxu0 %v3855
      %v4068 = vpop.f32.mrb[0].mxu0
      %v4069 = vadd.f32 %v3885, %v4068
      %v4070 = vpop.f32.mrb[0].mxu0
      %4071 = vmatprep.mubr.f32.mxu0 0.0
      %4072 = vmatmul.mubr.f32.gmra.mrb[0].mxu0 %v3856
      %v4073 = vpop.f32.mrb[0].mxu0
      %v4074 = vadd.f32 %v3885, %v4073
      %v4075 = vpop.f32.mrb[0].mxu0
      %4076 = vmatprep.mubr.f32.mxu0 0.0
      %4077 = vmatmul.mubr.f32.gmra.mrb[0].mxu0 %v3857
      %v4078 = vpop.f32.mrb[0].mxu0
      %v4079 = vadd.f32 %v3885, %v4078
      %v4080 = vpop.f32.mrb[0].mxu0
      %4081 = vmatprep.mubr.f32.mxu0 0.0
      %4082 = vmatmul.mubr.f32.gmra.mrb[0].mxu0 %v3858
      %v4083 = vpop.f32.mrb[0].mxu0
      %v4084 = vadd.f32 %v3885, %v4083
      %v4085 = vpop.f32.mrb[0].mxu0
      %4086 = vmatprep.mubr.f32.mxu0 0.0
      %4087 = vmatmul.mubr.f32.gmra.mrb[0].mxu0 %v3859
      %v4088 = vpop.f32.mrb[0].mxu0
      %v4089 = vadd.f32 %v3885, %v4088
      %v4090 = vpop.f32.mrb[0].mxu0
      %4091 = vmatprep.mubr.f32.mxu0 0.0
      %4092 = vmatmul.mubr.f32.gmra.mrb[0].mxu0 %v3860
      %v4093 = vpop.f32.mrb[0].mxu0
      %v4094 = vadd.f32 %v3885, %v4093
      %v4095 = vpop.f32.mrb[0].mxu0
      %4096 = vmatprep.mubr.f32.mxu0 0.0
      %4097 = vmatmul.mubr.f32.gmra.mrb[0].mxu0 %v3861
      %v4098 = vpop.f32.mrb[0].mxu0
      %v4099 = vadd.f32 %v3885, %v4098
      %v4100 = vpop.f32.mrb[0].mxu0
      %4101 = vmatprep.mubr.f32.mxu0 0.0
      %4102 = vmatmul.mubr.f32.gmra.mrb[0].mxu0 %v3862
      %v4103 = vpop.f32.mrb[0].mxu0
      %v4104 = vadd.f32 %v3885, %v4103
      %v4105 = vpop.f32.mrb[0].mxu0
      %4106 = vmatprep.mubr.f32.mxu0 0.0
      %4107 = vmatmul.mubr.f32.gmra.mrb[0].mxu0 %v3863
      %v4108 = vpop.f32.mrb[0].mxu0
      %v4109 = vadd.f32 %v3885, %v4108
      %v4110 = vpop.f32.mrb[0].mxu0
      %4111 = vdwg.mxu0
      %v4112 = vadd.f32 %v3954, %v501
      %v4113 = vadd.f32 %v3959, %v502
      %v4114 = vadd.f32 %v3964, %v503
      %v4115 = vadd.f32 %v3969, %v504
      %v4116 = vadd.f32 %v3974, %v505
      %v4117 = vadd.f32 %v3979, %v506
      %v4118 = vadd.f32 %v3984, %v507
      %v4119 = vadd.f32 %v3989, %v508
      %v4120 = vadd.f32 %v3994, %v509
      %v4121 = vadd.f32 %v3999, %v510
      %v4122 = vadd.f32 %v4004, %v511
      %v4123 = vadd.f32 %v4009, %v512
      %v4124 = vadd.f32 %v4014, %v513
      %v4125 = vadd.f32 %v4019, %v514
      %v4126 = vadd.f32 %v4024, %v515
      %v4127 = vadd.f32 %v4029, %v516
      %v4128 = vadd.f32 %v4034, %v517
      %v4129 = vadd.f32 %v4039, %v518
      %v4130 = vadd.f32 %v4044, %v519
      %v4131 = vadd.f32 %v4049, %v520
      %v4132 = vadd.f32 %v4054, %v521
      %v4133 = vadd.f32 %v4059, %v522
      %v4134 = vadd.f32 %v4064, %v523
      %v4135 = vadd.f32 %v4069, %v524
      %v4136 = vadd.f32 %v4074, %v525
      %v4137 = vadd.f32 %v4079, %v526
      %v4138 = vadd.f32 %v4084, %v527
      %v4139 = vadd.f32 %v4089, %v528
      %v4140 = vadd.f32 %v4094, %v529
      %v4141 = vadd.f32 %v4099, %v530
      %v4142 = vadd.f32 %v4104, %v531
      %v4143 = vadd.f32 %v4109, %v532
      %v4144 = vmax.f32 %v4112, 0.0
      %v4145 = vmax.f32 %v4113, 0.0
      %v4146 = vmax.f32 %v4114, 0.0
      %v4147 = vmax.f32 %v4115, 0.0
      %v4148 = vmax.f32 %v4116, 0.0
      %v4149 = vmax.f32 %v4117, 0.0
      %v4150 = vmax.f32 %v4118, 0.0
      %v4151 = vmax.f32 %v4119, 0.0
      %v4152 = vmax.f32 %v4120, 0.0
      %v4153 = vmax.f32 %v4121, 0.0
      %v4154 = vmax.f32 %v4122, 0.0
      %v4155 = vmax.f32 %v4123, 0.0
      %v4156 = vmax.f32 %v4124, 0.0
      %v4157 = vmax.f32 %v4125, 0.0
      %v4158 = vmax.f32 %v4126, 0.0
      %v4159 = vmax.f32 %v4127, 0.0
      %v4160 = vmax.f32 %v4128, 0.0
      %v4161 = vmax.f32 %v4129, 0.0
      %v4162 = vmax.f32 %v4130, 0.0
      %v4163 = vmax.f32 %v4131, 0.0
      %v4164 = vmax.f32 %v4132, 0.0
      %v4165 = vmax.f32 %v4133, 0.0
      %v4166 = vmax.f32 %v4134, 0.0
      %v4167 = vmax.f32 %v4135, 0.0
      %v4168 = vmax.f32 %v4136, 0.0
      %v4169 = vmax.f32 %v4137, 0.0
      %v4170 = vmax.f32 %v4138, 0.0
      %v4171 = vmax.f32 %v4139, 0.0
      %v4172 = vmax.f32 %v4140, 0.0
      %v4173 = vmax.f32 %v4141, 0.0
      %v4174 = vmax.f32 %v4142, 0.0
      %v4175 = vmax.f32 %v4143, 0.0
      %4176 = vst.msk [vmem:[%s499] sm:$0xff] %vm546, %v4144
      %4177 = vst.msk [vmem:[%s499 + $0x8] sm:$0xff] %vm546, %v4145
      %4178 = vst.msk [vmem:[%s499 + $0x10] sm:$0xff] %vm546, %v4146
      %4179 = vst.msk [vmem:[%s499 + $0x18] sm:$0xff] %vm546, %v4147
      %4180 = vst.msk [vmem:[%s499 + $0x20] sm:$0xff] %vm546, %v4148
      %4181 = vst.msk [vmem:[%s499 + $0x28] sm:$0xff] %vm546, %v4149
      %4182 = vst.msk [vmem:[%s499 + $0x30] sm:$0xff] %vm546, %v4150
      %4183 = vst.msk [vmem:[%s499 + $0x38] sm:$0xff] %vm546, %v4151
      %4184 = vst.msk [vmem:[%s499 + $0x40] sm:$0xff] %vm546, %v4152
      %4185 = vst.msk [vmem:[%s499 + $0x48] sm:$0xff] %vm546, %v4153
      %4186 = vst.msk [vmem:[%s499 + $0x50] sm:$0xff] %vm546, %v4154
      %4187 = vst.msk [vmem:[%s499 + $0x58] sm:$0xff] %vm546, %v4155
      %4188 = vst.msk [vmem:[%s499 + $0x60] sm:$0xff] %vm546, %v4156
      %4189 = vst.msk [vmem:[%s499 + $0x68] sm:$0xff] %vm546, %v4157
      %4190 = vst.msk [vmem:[%s499 + $0x70] sm:$0xff] %vm546, %v4158
      %4191 = vst.msk [vmem:[%s499 + $0x78] sm:$0xff] %vm546, %v4159
      %4192 = vst.msk [vmem:[%s499 + $0x80] sm:$0xff] %vm546, %v4160
      %4193 = vst.msk [vmem:[%s499 + $0x88] sm:$0xff] %vm546, %v4161
      %4194 = vst.msk [vmem:[%s499 + $0x90] sm:$0xff] %vm546, %v4162
      %4195 = vst.msk [vmem:[%s499 + $0x98] sm:$0xff] %vm546, %v4163
      %4196 = vst.msk [vmem:[%s499 + $0xa0] sm:$0xff] %vm546, %v4164
      %4197 = vst.msk [vmem:[%s499 + $0xa8] sm:$0xff] %vm546, %v4165
      %4198 = vst.msk [vmem:[%s499 + $0xb0] sm:$0xff] %vm546, %v4166
      %4199 = vst.msk [vmem:[%s499 + $0xb8] sm:$0xff] %vm546, %v4167
      %4200 = vst.msk [vmem:[%s499 + $0xc0] sm:$0xff] %vm546, %v4168
      %4201 = vst.msk [vmem:[%s499 + $0xc8] sm:$0xff] %vm546, %v4169
      %4202 = vst.msk [vmem:[%s499 + $0xd0] sm:$0xff] %vm546, %v4170
      %4203 = vst.msk [vmem:[%s499 + $0xd8] sm:$0xff] %vm546, %v4171
      %4204 = vst.msk [vmem:[%s499 + $0xe0] sm:$0xff] %vm546, %v4172
      %4205 = vst.msk [vmem:[%s499 + $0xe8] sm:$0xff] %vm546, %v4173
      %4206 = vst.msk [vmem:[%s499 + $0xf0] sm:$0xff] %vm546, %v4174
      %4207 = vst.msk [vmem:[%s499 + $0xf8] sm:$0xff] %vm546, %v4175
      %s4208 = smul.u32 16, %s25
      %p4209 = scmp.lt.s32.totalorder %s24, 1
      %s4210 = scalar_select %p4209, %s24, 1
      %p4211 = scmp.lt.s32.totalorder %s4208, 15
      %s4212 = scalar_select %p4211, %s4208, 15
      %s4213 = smul.addr %s4212, 2
      %s4214 = smul.addr %s4210, 32
      %s4215 = sadd.s32 %s4213, %s4214
      %s4216 = smul.addr %s4215, 8
      %s4217 = scalar_lea.vmem %s9, %s4216
      // Predicated region
      $region57: #{bottleneck_forward.1} parent=55 // pred_check
        %p4218 = pneg %p278
      $region58: #{bottleneck_forward.1} parent=55 // pred_check_branch
        %4220 = sbr.rel (%p4218) target = $region60
      $region59: #{bottleneck_forward.1} parent=55 // pred_region
        %s4221 = smul.u32 16, %s25
      $region60: #{bottleneck_forward.1} parent=55 // pred_fallthru
        _
    $region56: #{bottleneck_forward.1} parent=5 // pred_fallthru
      _
    %p4222 = scmp.le.s32.totalorder 2, %s15
    // Predicated region
    $region61: #{bottleneck_forward.1} parent=5 // pred_check
      %p4223 = pneg %p4222
    $region62: #{bottleneck_forward.1} parent=5 // pred_check_branch
      %4225 = sbr.rel (%p4223) target = $region64
    $region63: #{bottleneck_forward.1} parent=5 // pred_region
      %s4226 = ssub.s32 %s15, 2
      // Predicated region
      $region65: #{bottleneck_forward.1} parent=63 // pred_check
        %p4227 = pneg %p284
      $region66: #{bottleneck_forward.1} parent=63 // pred_check_branch
        %4229 = sbr.rel (%p4227) target = $region68
      $region67: #{bottleneck_forward.1} parent=63 // pred_region
        %s4230 = smul.u32 16, %s27
        %p4231 = scmp.lt.s32.totalorder %s26, 1
        %s4232 = scalar_select %p4231, %s26, 1
        %p4233 = scmp.lt.s32.totalorder %s4230, 15
        %s4234 = scalar_select %p4233, %s4230, 15
        %s4235 = smul.addr %s4234, 2
        %s4236 = smul.addr %s4232, 32
        %s4237 = sadd.s32 %s4235, %s4236
        %s4238 = smul.addr %s4237, 8
        %s4239 = scalar_lea.vmem %s9, %s4238
      $region68: #{bottleneck_forward.1} parent=63 // pred_fallthru
        _
    $region64: #{bottleneck_forward.1} parent=5 // pred_fallthru
      _
  $region6: #{bottleneck_forward.1} parent=0 // loop_footer
    %s19 = sadd.s32 1, %s15
  $region7: #{bottleneck_forward.1} parent=0 // loop_footer_branch
    %14 = sbr.rel target = $region3
  $region8: #{bottleneck_forward.1} parent=0 // loop_exit
    _

</llo_original>
